<compile_context>
chip_gen: v7x
topology: tpu7x:2x2x1
jax: 0.10.0
libtpu: 0.0.40
codegen_flags: <defaults>
</compile_context>

<pallas_src>
import math
import jax
import jax.numpy as jnp
from jax.experimental import pallas as pl
from jax.experimental.pallas import tpu as pltpu

SQRT2 = math.sqrt(2.0)


def _sincos_sqrt2(y):
    """Return (sqrt(2)*sin(y), sqrt(2)*cos(y)) with one shared range reduction.

    Cody–Waite reduction modulo pi/2, then Cephes single-precision minimax
    polynomials on r in [-pi/4, pi/4]; quadrant handled with swap/sign selects.
    """
    TWO_OVER_PI = 0.6366197723675814
    # pi/2 split so that q * P1 is exact in f32 for the |y| range of interest.
    P1 = 1.5703125
    P2 = 4.837512969970703125e-4
    P3 = 7.54978995489e-8

    # Quadrant (nearest multiple of pi/2).  floor(x + 0.5) == round for our use.
    q = jnp.floor(y * TWO_OVER_PI + 0.5)
    r = ((y - q * P1) - q * P2) - q * P3
    z = r * r

    # sin(r) ~ r + r*z*poly_s(z)
    poly_s = (-1.9515295891e-4 * z + 8.3321608736e-3) * z - 1.6666654611e-1
    sr = r + r * z * poly_s
    # cos(r) ~ 1 - z/2 + z^2*poly_c(z)
    poly_c = (2.443315711809948e-5 * z - 1.388731625493765e-3) * z + 4.166664568298827e-2
    cr = 1.0 - 0.5 * z + z * z * poly_c

    qi = q.astype(jnp.int32)
    swap = (qi & 1) != 0                 # odd quadrant -> swap sin/cos
    sin_neg = (qi & 2) != 0
    cos_neg = ((qi + 1) & 2) != 0

    sin_sel = jnp.where(swap, cr, sr)
    cos_sel = jnp.where(swap, sr, cr)
    # Fold the sqrt(2) scaling into the sign select.
    s = jnp.where(sin_neg, -SQRT2, SQRT2) * sin_sel
    c = jnp.where(cos_neg, -SQRT2, SQRT2) * cos_sel
    return s, c


def _fourier_kernel(x_ref, w_ref, o_ref):
    # x_ref: (tm, F)         row tile of coordinates
    # w_ref: (F, num_freq)   scale-folded, pre-transposed linear weight (resident)
    # o_ref: (tm, 2*num_freq)
    num_freq = w_ref.shape[1]

    # Tiny-K contraction on the otherwise-idle MXU (f32 accumulate, full precision
    # so it matches an f32 reference within tolerance even though K is only 4).
    y = jnp.dot(x_ref[...], w_ref[...],
                preferred_element_type=jnp.float32,
                precision=jax.lax.Precision.HIGHEST)

    s, c = _sincos_sqrt2(y)

    # Two lane-dense half stores (no concatenate temporary).  NOTE: if num_freq is
    # not a multiple of 128 the second store starts at an unaligned lane offset and
    # becomes a masked vst; pad num_freq up on the host in that case.
    o_ref[:, :num_freq] = s.astype(o_ref.dtype)
    o_ref[:, num_freq:] = c.astype(o_ref.dtype)


def _round_up(a, b):
    return ((a + b - 1) // b) * b


def fourier_feature_map(x, coordinate_scales, weight, *, tm=1024):
    """x: (N, in_features); coordinate_scales: (in_features,) (or (1, in_features));
    weight: (num_freq, in_features) as in nn.Linear(bias=False).
    Returns (N, 2*num_freq)."""
    N, F = x.shape
    num_freq = weight.shape[0]
    out_features = 2 * num_freq

    # Fold the (diagonal) coordinate scaling into the weight, pre-transpose.
    w_scaled_t = (weight * coordinate_scales.reshape(1, F)).T.astype(x.dtype)  # (F, num_freq)

    # Sublane alignment: f32 -> 8 rows, bf16/f16 -> 16, int8/fp8 -> 32.
    itemsize = jnp.dtype(x.dtype).itemsize
    sub = 8 if itemsize >= 4 else (16 if itemsize == 2 else 32)

    # Row tile: as large as requested, never larger than the (rounded-up) problem.
    tm_eff = _round_up(min(tm, _round_up(N, sub)), sub)

    # Clamp against a conservative VMEM budget (keeps double buffering on v7x's
    # 64 MiB parts without needing a raised vmem limit).
    def vmem_est(t):
        return (2 * t * F * itemsize                 # double-buffered x tile
                + 2 * t * out_features * itemsize    # double-buffered out tile
                + F * num_freq * itemsize            # resident weight
                + 6 * t * num_freq * 4)              # f32 temporaries (y, r, z, polys)
    VMEM_BUDGET = 24 * 1024 * 1024
    while tm_eff > 2 * sub and vmem_est(tm_eff) > VMEM_BUDGET:
        tm_eff = max(sub, _round_up(tm_eff // 2, sub))

    # Only force >=2 grid steps (for 2-TC v7x sharding) when each half stays big,
    # so single-TC v5e/v6e don't pay per-step overhead on shrunken tiles.
    if pl.cdiv(N, tm_eff) < 2 and N >= 1024:
        tm_eff = _round_up(pl.cdiv(N, 2), sub)

    grid_n = pl.cdiv(N, tm_eff)   # ragged boundary block handled by Pallas masking

    return pl.pallas_call(
        _fourier_kernel,
        out_shape=jax.ShapeDtypeStruct((N, out_features), x.dtype),
        grid=(grid_n,),
        in_specs=[
            pl.BlockSpec((tm_eff, F), lambda i: (i, 0)),        # x row tile
            pl.BlockSpec((F, num_freq), lambda i: (0, 0)),      # weight (constant block)
        ],
        out_specs=pl.BlockSpec((tm_eff, out_features), lambda i: (i, 0)),
        compiler_params=pltpu.CompilerParams(
            dimension_semantics=("parallel",),
        ),
    )(x, w_scaled_t)


def fourier_feature_map_ref(x, coordinate_scales, weight):
    y = jnp.dot(x * coordinate_scales.reshape(1, -1), weight.T,
                precision=jax.lax.Precision.HIGHEST)
    return jnp.concatenate((SQRT2 * jnp.sin(y), SQRT2 * jnp.cos(y)), axis=-1)


if __name__ == "__main__":
    # Module config (synthetic, deterministic init — no checkpoint loading).
    in_features = 4
    out_features = 256          # => num_freq = 128
    num_freq = out_features // 2
    N = 300                     # deliberately NOT tile-aligned: exercises ragged boundary

    key = jax.random.PRNGKey(0)
    kx, kw = jax.random.split(key)

    x = jax.random.normal(kx, (N, in_features), dtype=jnp.float32)
    # nn.Linear weight initialized ~ Normal(0, 1) as in init_weights()
    weight = jax.random.normal(kw, (num_freq, in_features), dtype=jnp.float32)
    # coordinate_scales passed to __init__ (fixed, non-trainable)
    coordinate_scales = jnp.array([1.0, 2.0, 0.5, 1.5], dtype=jnp.float32)

    ref = fourier_feature_map_ref(x, coordinate_scales, weight)

    # Single big (partial) tile and multi-step ragged-boundary configurations.
    out1 = jax.block_until_ready(fourier_feature_map(x, coordinate_scales, weight))
    out2 = jax.block_until_ready(fourier_feature_map(x, coordinate_scales, weight, tm=128))

    assert out1.shape == (N, out_features)
    assert jnp.allclose(out1, ref, atol=1e-4, rtol=1e-4), "mismatch vs reference (default tile)"
    assert jnp.allclose(out2, ref, atol=1e-4, rtol=1e-4), "mismatch vs reference (tm=128)"

    print("KERNEL_OK")
</pallas_src>

<mosaic_0001>
module attributes {stable_mosaic.version = 11 : i64} {
  func.func @_fourier_kernel(%arg0: i32, %arg1: memref<304x4xf32, #tpu.memory_space<vmem>>, %arg2: memref<4x128xf32, #tpu.memory_space<vmem>>, %arg3: memref<304x256xf32, #tpu.memory_space<vmem>>) attributes {dimension_semantics = [#tpu.dimension_semantics<parallel>], iteration_bounds = array<i64: 1>, scalar_prefetch = 0 : i64, scratch_operands = 0 : i64, tpu.core_type = #tpu.core_type<tc>, window_params = [{transform_indices = @transform_0, window_bounds = array<i64: 304, 4>}, {pipeline_mode = #tpu.pipeline_mode<synchronous>, transform_indices = @transform_1, window_bounds = array<i64: 4, 128>}, {transform_indices = @transform_2, window_bounds = array<i64: 304, 256>}]} {
    %c0 = arith.constant 0 : index
    %c0_0 = arith.constant 0 : index
    %0 = vector.load %arg1[%c0, %c0_0] : memref<304x4xf32, #tpu.memory_space<vmem>>, vector<304x4xf32>
    %c0_1 = arith.constant 0 : index
    %c0_2 = arith.constant 0 : index
    %1 = vector.load %arg2[%c0_1, %c0_2] : memref<4x128xf32, #tpu.memory_space<vmem>>, vector<4x128xf32>
    %cst = arith.constant dense<0.000000e+00> : vector<304x128xf32>
    %2 = tpu.matmul %0, %1, %cst {dimension_numbers = #tpu.dot_dimension_numbers<[1], [0], [0], [1], [0, 0, 1, 1], [], []>, precision = #tpu.contract_precision<fp32>} : vector<304x4xf32>, vector<4x128xf32>, vector<304x128xf32> -> vector<304x128xf32>
    %cst_3 = arith.constant 0.636619746 : f32
    %3 = vector.broadcast %cst_3 : f32 to vector<304x128xf32>
    %4 = arith.mulf %2, %3 : vector<304x128xf32>
    %cst_4 = arith.constant 5.000000e-01 : f32
    %5 = vector.broadcast %cst_4 : f32 to vector<304x128xf32>
    %6 = arith.addf %4, %5 : vector<304x128xf32>
    %7 = math.floor %6 : vector<304x128xf32>
    %cst_5 = arith.constant 1.5703125 : f32
    %8 = vector.broadcast %cst_5 : f32 to vector<304x128xf32>
    %9 = arith.mulf %7, %8 : vector<304x128xf32>
    %10 = arith.subf %2, %9 : vector<304x128xf32>
    %cst_6 = arith.constant 4.83751297E-4 : f32
    %11 = vector.broadcast %cst_6 : f32 to vector<304x128xf32>
    %12 = arith.mulf %7, %11 : vector<304x128xf32>
    %13 = arith.subf %10, %12 : vector<304x128xf32>
    %cst_7 = arith.constant 7.549790e-08 : f32
    %14 = vector.broadcast %cst_7 : f32 to vector<304x128xf32>
    %15 = arith.mulf %7, %14 : vector<304x128xf32>
    %16 = arith.subf %13, %15 : vector<304x128xf32>
    %17 = arith.mulf %16, %16 : vector<304x128xf32>
    %cst_8 = arith.constant -1.95152956E-4 : f32
    %18 = vector.broadcast %cst_8 : f32 to vector<304x128xf32>
    %19 = arith.mulf %18, %17 : vector<304x128xf32>
    %cst_9 = arith.constant 0.00833216123 : f32
    %20 = vector.broadcast %cst_9 : f32 to vector<304x128xf32>
    %21 = arith.addf %19, %20 : vector<304x128xf32>
    %22 = arith.mulf %21, %17 : vector<304x128xf32>
    %cst_10 = arith.constant 0.166666552 : f32
    %23 = vector.broadcast %cst_10 : f32 to vector<304x128xf32>
    %24 = arith.subf %22, %23 : vector<304x128xf32>
    %25 = arith.mulf %16, %17 : vector<304x128xf32>
    %26 = arith.mulf %25, %24 : vector<304x128xf32>
    %27 = arith.addf %16, %26 : vector<304x128xf32>
    %cst_11 = arith.constant 2.44331568E-5 : f32
    %28 = vector.broadcast %cst_11 : f32 to vector<304x128xf32>
    %29 = arith.mulf %28, %17 : vector<304x128xf32>
    %cst_12 = arith.constant 0.00138873165 : f32
    %30 = vector.broadcast %cst_12 : f32 to vector<304x128xf32>
    %31 = arith.subf %29, %30 : vector<304x128xf32>
    %32 = arith.mulf %31, %17 : vector<304x128xf32>
    %cst_13 = arith.constant 0.0416666456 : f32
    %33 = vector.broadcast %cst_13 : f32 to vector<304x128xf32>
    %34 = arith.addf %32, %33 : vector<304x128xf32>
    %cst_14 = arith.constant 5.000000e-01 : f32
    %35 = vector.broadcast %cst_14 : f32 to vector<304x128xf32>
    %36 = arith.mulf %35, %17 : vector<304x128xf32>
    %cst_15 = arith.constant 1.000000e+00 : f32
    %37 = vector.broadcast %cst_15 : f32 to vector<304x128xf32>
    %38 = arith.subf %37, %36 : vector<304x128xf32>
    %39 = arith.mulf %17, %17 : vector<304x128xf32>
    %40 = arith.mulf %39, %34 : vector<304x128xf32>
    %41 = arith.addf %38, %40 : vector<304x128xf32>
    %42 = arith.fptosi %7 : vector<304x128xf32> to vector<304x128xi32>
    %c1_i32 = arith.constant 1 : i32
    %43 = vector.broadcast %c1_i32 : i32 to vector<304x128xi32>
    %44 = arith.andi %42, %43 : vector<304x128xi32>
    %c0_i32 = arith.constant 0 : i32
    %45 = vector.broadcast %c0_i32 : i32 to vector<304x128xi32>
    %46 = arith.cmpi ne, %44, %45 : vector<304x128xi32>
    %c2_i32 = arith.constant 2 : i32
    %47 = vector.broadcast %c2_i32 : i32 to vector<304x128xi32>
    %48 = arith.andi %42, %47 : vector<304x128xi32>
    %c0_i32_16 = arith.constant 0 : i32
    %49 = vector.broadcast %c0_i32_16 : i32 to vector<304x128xi32>
    %50 = arith.cmpi ne, %48, %49 : vector<304x128xi32>
    %c1_i32_17 = arith.constant 1 : i32
    %51 = vector.broadcast %c1_i32_17 : i32 to vector<304x128xi32>
    %52 = arith.addi %42, %51 : vector<304x128xi32>
    %c2_i32_18 = arith.constant 2 : i32
    %53 = vector.broadcast %c2_i32_18 : i32 to vector<304x128xi32>
    %54 = arith.andi %52, %53 : vector<304x128xi32>
    %c0_i32_19 = arith.constant 0 : i32
    %55 = vector.broadcast %c0_i32_19 : i32 to vector<304x128xi32>
    %56 = arith.cmpi ne, %54, %55 : vector<304x128xi32>
    %57 = arith.select %46, %41, %27 : vector<304x128xi1>, vector<304x128xf32>
    %58 = arith.select %46, %27, %41 : vector<304x128xi1>, vector<304x128xf32>
    %cst_20 = arith.constant -1.41421354 : f32
    %cst_21 = arith.constant 1.41421354 : f32
    %59 = vector.broadcast %cst_20 : f32 to vector<304x128xf32>
    %60 = vector.broadcast %cst_21 : f32 to vector<304x128xf32>
    %61 = arith.select %50, %59, %60 : vector<304x128xi1>, vector<304x128xf32>
    %62 = arith.mulf %61, %57 : vector<304x128xf32>
    %cst_22 = arith.constant -1.41421354 : f32
    %cst_23 = arith.constant 1.41421354 : f32
    %63 = vector.broadcast %cst_22 : f32 to vector<304x128xf32>
    %64 = vector.broadcast %cst_23 : f32 to vector<304x128xf32>
    %65 = arith.select %56, %63, %64 : vector<304x128xi1>, vector<304x128xf32>
    %66 = arith.mulf %65, %58 : vector<304x128xf32>
    %c0_24 = arith.constant 0 : index
    %c0_25 = arith.constant 0 : index
    %67 = vector.load %arg3[%c0_24, %c0_25] : memref<304x256xf32, #tpu.memory_space<vmem>>, vector<304x128xf32>
    tpu.vector_store %arg3[%c0_24, %c0_25], %62 {strides = array<i32>} : memref<304x256xf32, #tpu.memory_space<vmem>>, vector<304x128xf32>,
    %c0_26 = arith.constant 0 : index
    %c128 = arith.constant 128 : index
    %68 = vector.load %arg3[%c0_26, %c128] : memref<304x256xf32, #tpu.memory_space<vmem>>, vector<304x128xf32>
    tpu.vector_store %arg3[%c0_26, %c128], %66 {strides = array<i32>} : memref<304x256xf32, #tpu.memory_space<vmem>>, vector<304x128xf32>,
    return
  }
  func.func @transform_0(%arg0: i32) -> (i32, i32) {
    %c0_i32 = arith.constant 0 : i32
    %c0_i32_0 = arith.constant 0 : i32
    return %arg0, %c0_i32 : i32, i32
  }
  func.func @transform_1(%arg0: i32) -> (i32, i32) {
    %c0_i32 = arith.constant 0 : i32
    %c0_i32_0 = arith.constant 0 : i32
    %c0_i32_1 = arith.constant 0 : i32
    return %c0_i32, %c0_i32_0 : i32, i32
  }
  func.func @transform_2(%arg0: i32) -> (i32, i32) {
    %c0_i32 = arith.constant 0 : i32
    %c0_i32_0 = arith.constant 0 : i32
    return %arg0, %c0_i32 : i32, i32
  }
}

</mosaic_0001>

<llo_original>
// kernel: tpu_custom_call.1
$region0: #{tpu_custom_call.1}
  #allocation0 [shape = 'u32[]', space=smem, size = 0x4, offset = 0x4, fixed_abs, tag = 'smem constant byte address 0x4 - core index']
  #allocation1 [shape = 'u32[144,128]{1,0:T(1,128)}', space=vmem, size = 0x12000, scoped, tag = 'internal scratch']
  %s0 = inlined_call_operand.vmem [shape: f32[300,4], index: 0, kind: input, shape index: {}]
  %s1 = inlined_call_operand.vmem [shape: f32[4,128], index: 1, kind: input, shape index: {}]
  %s2 = inlined_call_operand.hbm [shape: f32[300,256], index: 2, kind: output, shape index: {}]
  %s3 = sld [smem:[#allocation0]]
  $region18: #{tpu_custom_call.1} parent=0
    _
  %s5 = ssub.s32 1, %s3
  %s6 = scalar_select 0, %s5, %s3
  $region1: #{tpu_custom_call.1} parent=0
    #allocation2 [shape = 'u8[311296]{0}', space=vmem, size = 0x4c000, scoped, tag = 'output window, operand 0, single buffered']
    #allocation3 [shape = 's32[1]{0}', space=sflag, size = 0x4, scoped, tag = 'scoped memory for tpu_custom_call.1']
    %7 = vsyncpa [#allocation3], 0
    // Predicated region
    $region2: #{tpu_custom_call.1} parent=1 // pred_check
      _
    $region3: #{tpu_custom_call.1} parent=1 // pred_check_branch
      %9 = sbr.rel (0) target = $region5
    $region4: #{tpu_custom_call.1} parent=1 // pred_region
      _
    $region5: #{tpu_custom_call.1} parent=1 // pred_fallthru
      _
    // Predicated region
    $region6: #{tpu_custom_call.1} parent=1 // pred_check
      _
    $region7: #{tpu_custom_call.1} parent=1 // pred_check_branch
      %11 = sbr.rel (0) target = $region9
    $region8: #{tpu_custom_call.1} parent=1 // pred_region
      _
    $region9: #{tpu_custom_call.1} parent=1 // pred_fallthru
      _
    %v12 = vld [vmem:[%s0] sm:$0xff]
    %v13 = vld [vmem:[%s0 + $0x8] sm:$0xff]
    %v14 = vld [vmem:[%s0 + $0x10] sm:$0xff]
    %v15 = vld [vmem:[%s0 + $0x18] sm:$0xff]
    %v16 = vld [vmem:[%s0 + $0x20] sm:$0xff]
    %v17 = vld [vmem:[%s0 + $0x28] sm:$0xff]
    %v18 = vld [vmem:[%s0 + $0x30] sm:$0xff]
    %v19 = vld [vmem:[%s0 + $0x38] sm:$0xff]
    %v20 = vld [vmem:[%s0 + $0x40] sm:$0xff]
    %v21 = vld [vmem:[%s0 + $0x48] sm:$0xff]
    %v22 = vld [vmem:[%s0 + $0x50] sm:$0xff]
    %v23 = vld [vmem:[%s0 + $0x58] sm:$0xff]
    %v24 = vld [vmem:[%s0 + $0x60] sm:$0xff]
    %v25 = vld [vmem:[%s0 + $0x68] sm:$0xff]
    %v26 = vld [vmem:[%s0 + $0x70] sm:$0xff]
    %v27 = vld [vmem:[%s0 + $0x78] sm:$0xff]
    %v28 = vld [vmem:[%s0 + $0x80] sm:$0xff]
    %v29 = vld [vmem:[%s0 + $0x88] sm:$0xff]
    %v30 = vld [vmem:[%s0 + $0x90] sm:$0xff]
    %v31 = vld [vmem:[%s0 + $0x98] sm:$0xff]
    %v32 = vld [vmem:[%s0 + $0xa0] sm:$0xff]
    %v33 = vld [vmem:[%s0 + $0xa8] sm:$0xff]
    %v34 = vld [vmem:[%s0 + $0xb0] sm:$0xff]
    %v35 = vld [vmem:[%s0 + $0xb8] sm:$0xff]
    %v36 = vld [vmem:[%s0 + $0xc0] sm:$0xff]
    %v37 = vld [vmem:[%s0 + $0xc8] sm:$0xff]
    %v38 = vld [vmem:[%s0 + $0xd0] sm:$0xff]
    %v39 = vld [vmem:[%s0 + $0xd8] sm:$0xff]
    %v40 = vld [vmem:[%s0 + $0xe0] sm:$0xff]
    %v41 = vld [vmem:[%s0 + $0xe8] sm:$0xff]
    %v42 = vld [vmem:[%s0 + $0xf0] sm:$0xff]
    %v43 = vld [vmem:[%s0 + $0xf8] sm:$0xff]
    %v44 = vld [vmem:[%s0 + $0x100] sm:$0xff]
    %v45 = vld [vmem:[%s0 + $0x108] sm:$0xff]
    %v46 = vld [vmem:[%s0 + $0x110] sm:$0xff]
    %v47 = vld [vmem:[%s0 + $0x118] sm:$0xff]
    %v48 = vld [vmem:[%s0 + $0x120] sm:$0xff]
    %v49 = vld [vmem:[%s0 + $0x128] sm:$0xff]
    %v50 = vld [vmem:[%s1] sm:$0xf]
    %vm51 = vcmask 31744
    %v53 = vsel %vm51, %v12, 0
    %v56 = vsel %vm51, %v13, 0
    %v59 = vsel %vm51, %v14, 0
    %v62 = vsel %vm51, %v15, 0
    %v65 = vsel %vm51, %v16, 0
    %v68 = vsel %vm51, %v17, 0
    %v71 = vsel %vm51, %v18, 0
    %v74 = vsel %vm51, %v19, 0
    %v77 = vsel %vm51, %v20, 0
    %v80 = vsel %vm51, %v21, 0
    %v83 = vsel %vm51, %v22, 0
    %v86 = vsel %vm51, %v23, 0
    %v89 = vsel %vm51, %v24, 0
    %v92 = vsel %vm51, %v25, 0
    %v95 = vsel %vm51, %v26, 0
    %v98 = vsel %vm51, %v27, 0
    %v101 = vsel %vm51, %v28, 0
    %v104 = vsel %vm51, %v29, 0
    %v107 = vsel %vm51, %v30, 0
    %v110 = vsel %vm51, %v31, 0
    %v113 = vsel %vm51, %v32, 0
    %v116 = vsel %vm51, %v33, 0
    %v119 = vsel %vm51, %v34, 0
    %v122 = vsel %vm51, %v35, 0
    %v125 = vsel %vm51, %v36, 0
    %v128 = vsel %vm51, %v37, 0
    %v131 = vsel %vm51, %v38, 0
    %v134 = vsel %vm51, %v39, 0
    %v137 = vsel %vm51, %v40, 0
    %v140 = vsel %vm51, %v41, 0
    %v143 = vsel %vm51, %v42, 0
    %v146 = vsel %vm51, %v43, 0
    %v149 = vsel %vm51, %v44, 0
    %v152 = vsel %vm51, %v45, 0
    %v155 = vsel %vm51, %v46, 0
    %v158 = vsel %vm51, %v47, 0
    %v161 = vsel %vm51, %v48, 0
    %v164 = vsel %vm51, %v49, 0
    %vm166 = vcmask 1043456
    %v168 = vsel %vm166, %v50, 0
    %170 = vmatprep.subr.mxu0 0.0
    %v171 = vand.u32 %v168, 4294901760
    %172 = vmatpush1.msra.mxu0 %v171
    %173 = vmatprep.subr.mxu0 0.0
    %174 = vmatpush1.msra.mxu0 0.0
    %175 = vmatprep.subr.mxu0 0.0
    %176 = vmatpush1.msra.mxu0 0.0
    %177 = vmatprep.subr.mxu0 0.0
    %178 = vmatpush1.msra.mxu0 0.0
    %179 = vmatprep.subr.mxu0 0.0
    %180 = vmatpush1.msra.mxu0 0.0
    %181 = vmatprep.subr.mxu0 0.0
    %182 = vmatpush1.msra.mxu0 0.0
    %183 = vmatprep.subr.mxu0 0.0
    %184 = vmatpush1.msra.mxu0 0.0
    %185 = vmatprep.subr.mxu0 0.0
    %186 = vmatpush1.msra.mxu0 0.0
    %187 = vmatprep.subr.mxu0 0.0
    %188 = vmatpush1.msra.mxu0 0.0
    %189 = vmatprep.subr.mxu0 0.0
    %190 = vmatpush1.msra.mxu0 0.0
    %191 = vmatprep.subr.mxu0 0.0
    %192 = vmatpush1.msra.mxu0 0.0
    %193 = vmatprep.subr.mxu0 0.0
    %194 = vmatpush1.msra.mxu0 0.0
    %195 = vmatprep.subr.mxu0 0.0
    %196 = vmatpush1.msra.mxu0 0.0
    %197 = vmatprep.subr.mxu0 0.0
    %198 = vmatpush1.msra.mxu0 0.0
    %199 = vmatprep.subr.mxu0 0.0
    %200 = vmatpush1.msra.mxu0 0.0
    %201 = vmatprep.subr.mxu0 0.0
    %202 = vmatpush1.msra.mxu0 0.0
    %203 = vmatprep.subr.mxu0 0.0
    %204 = vmatpush1.msra.mxu0 0.0
    %205 = vmatprep.subr.mxu0 0.0
    %206 = vmatpush1.msra.mxu0 0.0
    %207 = vmatprep.subr.mxu0 0.0
    %208 = vmatpush1.msra.mxu0 0.0
    %209 = vmatprep.subr.mxu0 0.0
    %210 = vmatpush1.msra.mxu0 0.0
    %211 = vmatprep.subr.mxu0 0.0
    %212 = vmatpush1.msra.mxu0 0.0
    %213 = vmatprep.subr.mxu0 0.0
    %214 = vmatpush1.msra.mxu0 0.0
    %215 = vmatprep.subr.mxu0 0.0
    %216 = vmatpush1.msra.mxu0 0.0
    %217 = vmatprep.subr.mxu0 0.0
    %218 = vmatpush1.msra.mxu0 0.0
    %219 = vmatprep.subr.mxu0 0.0
    %220 = vmatpush1.msra.mxu0 0.0
    %221 = vmatprep.subr.mxu0 0.0
    %222 = vmatpush1.msra.mxu0 0.0
    %223 = vmatprep.subr.mxu0 0.0
    %224 = vmatpush1.msra.mxu0 0.0
    %225 = vmatprep.subr.mxu0 0.0
    %226 = vmatpush1.msra.mxu0 0.0
    %227 = vmatprep.subr.mxu0 0.0
    %228 = vmatpush1.msra.mxu0 0.0
    %229 = vmatprep.subr.mxu0 0.0
    %230 = vmatpush1.msra.mxu0 0.0
    %231 = vmatprep.subr.mxu0 0.0
    %232 = vmatpush1.msra.mxu0 0.0
    %233 = vmatprep.subr.mxu0 0.0
    %234 = vmatpush1.msra.mxu0 0.0
    %235 = vmatprep.mubr.f32.mxu0 0.0
    %v236 = vand.u32 %v53, 4294901760
    %v237 = vsub.f32 %v53, %v236
    %v238 = vand.u32 %v237, 4294901760
    %v239 = vsub.f32 %v237, %v238
    %v240 = vand.u32 %v239, 4294901760
    %241 = vmatmul.mubr.f32.gmra.mrb[0].mxu0 %v240
    %v242 = vpop.f32.mrb[0].mxu0
    %v243 = vadd.f32 0.0, %v242
    %v244 = vpop.f32.mrb[0].mxu0
    %245 = vmatprep.mubr.f32.mxu0 0.0
    %v246 = vand.u32 %v56, 4294901760
    %v247 = vsub.f32 %v56, %v246
    %v248 = vand.u32 %v247, 4294901760
    %v249 = vsub.f32 %v247, %v248
    %v250 = vand.u32 %v249, 4294901760
    %251 = vmatmul.mubr.f32.gmra.mrb[0].mxu0 %v250
    %v252 = vpop.f32.mrb[0].mxu0
    %v253 = vadd.f32 0.0, %v252
    %v254 = vpop.f32.mrb[0].mxu0
    %255 = vmatprep.mubr.f32.mxu0 0.0
    %v256 = vand.u32 %v59, 4294901760
    %v257 = vsub.f32 %v59, %v256
    %v258 = vand.u32 %v257, 4294901760
    %v259 = vsub.f32 %v257, %v258
    %v260 = vand.u32 %v259, 4294901760
    %261 = vmatmul.mubr.f32.gmra.mrb[0].mxu0 %v260
    %v262 = vpop.f32.mrb[0].mxu0
    %v263 = vadd.f32 0.0, %v262
    %v264 = vpop.f32.mrb[0].mxu0
    %265 = vmatprep.mubr.f32.mxu0 0.0
    %v266 = vand.u32 %v62, 4294901760
    %v267 = vsub.f32 %v62, %v266
    %v268 = vand.u32 %v267, 4294901760
    %v269 = vsub.f32 %v267, %v268
    %v270 = vand.u32 %v269, 4294901760
    %271 = vmatmul.mubr.f32.gmra.mrb[0].mxu0 %v270
    %v272 = vpop.f32.mrb[0].mxu0
    %v273 = vadd.f32 0.0, %v272
    %v274 = vpop.f32.mrb[0].mxu0
    %275 = vmatprep.mubr.f32.mxu0 0.0
    %v276 = vand.u32 %v65, 4294901760
    %v277 = vsub.f32 %v65, %v276
    %v278 = vand.u32 %v277, 4294901760
    %v279 = vsub.f32 %v277, %v278
    %v280 = vand.u32 %v279, 4294901760
    %281 = vmatmul.mubr.f32.gmra.mrb[0].mxu0 %v280
    %v282 = vpop.f32.mrb[0].mxu0
    %v283 = vadd.f32 0.0, %v282
    %v284 = vpop.f32.mrb[0].mxu0
    %285 = vmatprep.mubr.f32.mxu0 0.0
    %v286 = vand.u32 %v68, 4294901760
    %v287 = vsub.f32 %v68, %v286
    %v288 = vand.u32 %v287, 4294901760
    %v289 = vsub.f32 %v287, %v288
    %v290 = vand.u32 %v289, 4294901760
    %291 = vmatmul.mubr.f32.gmra.mrb[0].mxu0 %v290
    %v292 = vpop.f32.mrb[0].mxu0
    %v293 = vadd.f32 0.0, %v292
    %v294 = vpop.f32.mrb[0].mxu0
    %295 = vmatprep.mubr.f32.mxu0 0.0
    %v296 = vand.u32 %v71, 4294901760
    %v297 = vsub.f32 %v71, %v296
    %v298 = vand.u32 %v297, 4294901760
    %v299 = vsub.f32 %v297, %v298
    %v300 = vand.u32 %v299, 4294901760
    %301 = vmatmul.mubr.f32.gmra.mrb[0].mxu0 %v300
    %v302 = vpop.f32.mrb[0].mxu0
    %v303 = vadd.f32 0.0, %v302
    %v304 = vpop.f32.mrb[0].mxu0
    %305 = vmatprep.mubr.f32.mxu0 0.0
    %v306 = vand.u32 %v74, 4294901760
    %v307 = vsub.f32 %v74, %v306
    %v308 = vand.u32 %v307, 4294901760
    %v309 = vsub.f32 %v307, %v308
    %v310 = vand.u32 %v309, 4294901760
    %311 = vmatmul.mubr.f32.gmra.mrb[0].mxu0 %v310
    %v312 = vpop.f32.mrb[0].mxu0
    %v313 = vadd.f32 0.0, %v312
    %v314 = vpop.f32.mrb[0].mxu0
    %315 = vmatprep.mubr.f32.mxu0 0.0
    %v316 = vand.u32 %v77, 4294901760
    %v317 = vsub.f32 %v77, %v316
    %v318 = vand.u32 %v317, 4294901760
    %v319 = vsub.f32 %v317, %v318
    %v320 = vand.u32 %v319, 4294901760
    %321 = vmatmul.mubr.f32.gmra.mrb[0].mxu0 %v320
    %v322 = vpop.f32.mrb[0].mxu0
    %v323 = vadd.f32 0.0, %v322
    %v324 = vpop.f32.mrb[0].mxu0
    %325 = vmatprep.mubr.f32.mxu0 0.0
    %v326 = vand.u32 %v80, 4294901760
    %v327 = vsub.f32 %v80, %v326
    %v328 = vand.u32 %v327, 4294901760
    %v329 = vsub.f32 %v327, %v328
    %v330 = vand.u32 %v329, 4294901760
    %331 = vmatmul.mubr.f32.gmra.mrb[0].mxu0 %v330
    %v332 = vpop.f32.mrb[0].mxu0
    %v333 = vadd.f32 0.0, %v332
    %v334 = vpop.f32.mrb[0].mxu0
    %335 = vmatprep.mubr.f32.mxu0 0.0
    %v336 = vand.u32 %v83, 4294901760
    %v337 = vsub.f32 %v83, %v336
    %v338 = vand.u32 %v337, 4294901760
    %v339 = vsub.f32 %v337, %v338
    %v340 = vand.u32 %v339, 4294901760
    %341 = vmatmul.mubr.f32.gmra.mrb[0].mxu0 %v340
    %v342 = vpop.f32.mrb[0].mxu0
    %v343 = vadd.f32 0.0, %v342
    %v344 = vpop.f32.mrb[0].mxu0
    %345 = vmatprep.mubr.f32.mxu0 0.0
    %v346 = vand.u32 %v86, 4294901760
    %v347 = vsub.f32 %v86, %v346
    %v348 = vand.u32 %v347, 4294901760
    %v349 = vsub.f32 %v347, %v348
    %v350 = vand.u32 %v349, 4294901760
    %351 = vmatmul.mubr.f32.gmra.mrb[0].mxu0 %v350
    %v352 = vpop.f32.mrb[0].mxu0
    %v353 = vadd.f32 0.0, %v352
    %v354 = vpop.f32.mrb[0].mxu0
    %355 = vmatprep.mubr.f32.mxu0 0.0
    %v356 = vand.u32 %v89, 4294901760
    %v357 = vsub.f32 %v89, %v356
    %v358 = vand.u32 %v357, 4294901760
    %v359 = vsub.f32 %v357, %v358
    %v360 = vand.u32 %v359, 4294901760
    %361 = vmatmul.mubr.f32.gmra.mrb[0].mxu0 %v360
    %v362 = vpop.f32.mrb[0].mxu0
    %v363 = vadd.f32 0.0, %v362
    %v364 = vpop.f32.mrb[0].mxu0
    %365 = vmatprep.mubr.f32.mxu0 0.0
    %v366 = vand.u32 %v92, 4294901760
    %v367 = vsub.f32 %v92, %v366
    %v368 = vand.u32 %v367, 4294901760
    %v369 = vsub.f32 %v367, %v368
    %v370 = vand.u32 %v369, 4294901760
    %371 = vmatmul.mubr.f32.gmra.mrb[0].mxu0 %v370
    %v372 = vpop.f32.mrb[0].mxu0
    %v373 = vadd.f32 0.0, %v372
    %v374 = vpop.f32.mrb[0].mxu0
    %375 = vmatprep.mubr.f32.mxu0 0.0
    %v376 = vand.u32 %v95, 4294901760
    %v377 = vsub.f32 %v95, %v376
    %v378 = vand.u32 %v377, 4294901760
    %v379 = vsub.f32 %v377, %v378
    %v380 = vand.u32 %v379, 4294901760
    %381 = vmatmul.mubr.f32.gmra.mrb[0].mxu0 %v380
    %v382 = vpop.f32.mrb[0].mxu0
    %v383 = vadd.f32 0.0, %v382
    %v384 = vpop.f32.mrb[0].mxu0
    %385 = vmatprep.mubr.f32.mxu0 0.0
    %v386 = vand.u32 %v98, 4294901760
    %v387 = vsub.f32 %v98, %v386
    %v388 = vand.u32 %v387, 4294901760
    %v389 = vsub.f32 %v387, %v388
    %v390 = vand.u32 %v389, 4294901760
    %391 = vmatmul.mubr.f32.gmra.mrb[0].mxu0 %v390
    %v392 = vpop.f32.mrb[0].mxu0
    %v393 = vadd.f32 0.0, %v392
    %v394 = vpop.f32.mrb[0].mxu0
    %395 = vmatprep.mubr.f32.mxu0 0.0
    %v396 = vand.u32 %v101, 4294901760
    %v397 = vsub.f32 %v101, %v396
    %v398 = vand.u32 %v397, 4294901760
    %v399 = vsub.f32 %v397, %v398
    %v400 = vand.u32 %v399, 4294901760
    %401 = vmatmul.mubr.f32.gmra.mrb[0].mxu0 %v400
    %v402 = vpop.f32.mrb[0].mxu0
    %v403 = vadd.f32 0.0, %v402
    %v404 = vpop.f32.mrb[0].mxu0
    %405 = vmatprep.mubr.f32.mxu0 0.0
    %v406 = vand.u32 %v104, 4294901760
    %v407 = vsub.f32 %v104, %v406
    %v408 = vand.u32 %v407, 4294901760
    %v409 = vsub.f32 %v407, %v408
    %v410 = vand.u32 %v409, 4294901760
    %411 = vmatmul.mubr.f32.gmra.mrb[0].mxu0 %v410
    %v412 = vpop.f32.mrb[0].mxu0
    %v413 = vadd.f32 0.0, %v412
    %v414 = vpop.f32.mrb[0].mxu0
    %415 = vmatprep.mubr.f32.mxu0 0.0
    %v416 = vand.u32 %v107, 4294901760
    %v417 = vsub.f32 %v107, %v416
    %v418 = vand.u32 %v417, 4294901760
    %v419 = vsub.f32 %v417, %v418
    %v420 = vand.u32 %v419, 4294901760
    %421 = vmatmul.mubr.f32.gmra.mrb[0].mxu0 %v420
    %v422 = vpop.f32.mrb[0].mxu0
    %v423 = vadd.f32 0.0, %v422
    %v424 = vpop.f32.mrb[0].mxu0
    %425 = vmatprep.mubr.f32.mxu0 0.0
    %v426 = vand.u32 %v110, 4294901760
    %v427 = vsub.f32 %v110, %v426
    %v428 = vand.u32 %v427, 4294901760
    %v429 = vsub.f32 %v427, %v428
    %v430 = vand.u32 %v429, 4294901760
    %431 = vmatmul.mubr.f32.gmra.mrb[0].mxu0 %v430
    %v432 = vpop.f32.mrb[0].mxu0
    %v433 = vadd.f32 0.0, %v432
    %v434 = vpop.f32.mrb[0].mxu0
    %435 = vmatprep.mubr.f32.mxu0 0.0
    %v436 = vand.u32 %v113, 4294901760
    %v437 = vsub.f32 %v113, %v436
    %v438 = vand.u32 %v437, 4294901760
    %v439 = vsub.f32 %v437, %v438
    %v440 = vand.u32 %v439, 4294901760
    %441 = vmatmul.mubr.f32.gmra.mrb[0].mxu0 %v440
    %v442 = vpop.f32.mrb[0].mxu0
    %v443 = vadd.f32 0.0, %v442
    %v444 = vpop.f32.mrb[0].mxu0
    %445 = vmatprep.mubr.f32.mxu0 0.0
    %v446 = vand.u32 %v116, 4294901760
    %v447 = vsub.f32 %v116, %v446
    %v448 = vand.u32 %v447, 4294901760
    %v449 = vsub.f32 %v447, %v448
    %v450 = vand.u32 %v449, 4294901760
    %451 = vmatmul.mubr.f32.gmra.mrb[0].mxu0 %v450
    %v452 = vpop.f32.mrb[0].mxu0
    %v453 = vadd.f32 0.0, %v452
    %v454 = vpop.f32.mrb[0].mxu0
    %455 = vmatprep.mubr.f32.mxu0 0.0
    %v456 = vand.u32 %v119, 4294901760
    %v457 = vsub.f32 %v119, %v456
    %v458 = vand.u32 %v457, 4294901760
    %v459 = vsub.f32 %v457, %v458
    %v460 = vand.u32 %v459, 4294901760
    %461 = vmatmul.mubr.f32.gmra.mrb[0].mxu0 %v460
    %v462 = vpop.f32.mrb[0].mxu0
    %v463 = vadd.f32 0.0, %v462
    %v464 = vpop.f32.mrb[0].mxu0
    %465 = vmatprep.mubr.f32.mxu0 0.0
    %v466 = vand.u32 %v122, 4294901760
    %v467 = vsub.f32 %v122, %v466
    %v468 = vand.u32 %v467, 4294901760
    %v469 = vsub.f32 %v467, %v468
    %v470 = vand.u32 %v469, 4294901760
    %471 = vmatmul.mubr.f32.gmra.mrb[0].mxu0 %v470
    %v472 = vpop.f32.mrb[0].mxu0
    %v473 = vadd.f32 0.0, %v472
    %v474 = vpop.f32.mrb[0].mxu0
    %475 = vmatprep.mubr.f32.mxu0 0.0
    %v476 = vand.u32 %v125, 4294901760
    %v477 = vsub.f32 %v125, %v476
    %v478 = vand.u32 %v477, 4294901760
    %v479 = vsub.f32 %v477, %v478
    %v480 = vand.u32 %v479, 4294901760
    %481 = vmatmul.mubr.f32.gmra.mrb[0].mxu0 %v480
    %v482 = vpop.f32.mrb[0].mxu0
    %v483 = vadd.f32 0.0, %v482
    %v484 = vpop.f32.mrb[0].mxu0
    %485 = vmatprep.mubr.f32.mxu0 0.0
    %v486 = vand.u32 %v128, 4294901760
    %v487 = vsub.f32 %v128, %v486
    %v488 = vand.u32 %v487, 4294901760
    %v489 = vsub.f32 %v487, %v488
    %v490 = vand.u32 %v489, 4294901760
    %491 = vmatmul.mubr.f32.gmra.mrb[0].mxu0 %v490
    %v492 = vpop.f32.mrb[0].mxu0
    %v493 = vadd.f32 0.0, %v492
    %v494 = vpop.f32.mrb[0].mxu0
    %495 = vmatprep.mubr.f32.mxu0 0.0
    %v496 = vand.u32 %v131, 4294901760
    %v497 = vsub.f32 %v131, %v496
    %v498 = vand.u32 %v497, 4294901760
    %v499 = vsub.f32 %v497, %v498
    %v500 = vand.u32 %v499, 4294901760
    %501 = vmatmul.mubr.f32.gmra.mrb[0].mxu0 %v500
    %v502 = vpop.f32.mrb[0].mxu0
    %v503 = vadd.f32 0.0, %v502
    %v504 = vpop.f32.mrb[0].mxu0
    %505 = vmatprep.mubr.f32.mxu0 0.0
    %v506 = vand.u32 %v134, 4294901760
    %v507 = vsub.f32 %v134, %v506
    %v508 = vand.u32 %v507, 4294901760
    %v509 = vsub.f32 %v507, %v508
    %v510 = vand.u32 %v509, 4294901760
    %511 = vmatmul.mubr.f32.gmra.mrb[0].mxu0 %v510
    %v512 = vpop.f32.mrb[0].mxu0
    %v513 = vadd.f32 0.0, %v512
    %v514 = vpop.f32.mrb[0].mxu0
    %515 = vmatprep.mubr.f32.mxu0 0.0
    %v516 = vand.u32 %v137, 4294901760
    %v517 = vsub.f32 %v137, %v516
    %v518 = vand.u32 %v517, 4294901760
    %v519 = vsub.f32 %v517, %v518
    %v520 = vand.u32 %v519, 4294901760
    %521 = vmatmul.mubr.f32.gmra.mrb[0].mxu0 %v520
    %v522 = vpop.f32.mrb[0].mxu0
    %v523 = vadd.f32 0.0, %v522
    %v524 = vpop.f32.mrb[0].mxu0
    %525 = vmatprep.mubr.f32.mxu0 0.0
    %v526 = vand.u32 %v140, 4294901760
    %v527 = vsub.f32 %v140, %v526
    %v528 = vand.u32 %v527, 4294901760
    %v529 = vsub.f32 %v527, %v528
    %v530 = vand.u32 %v529, 4294901760
    %531 = vmatmul.mubr.f32.gmra.mrb[0].mxu0 %v530
    %v532 = vpop.f32.mrb[0].mxu0
    %v533 = vadd.f32 0.0, %v532
    %v534 = vpop.f32.mrb[0].mxu0
    %535 = vmatprep.mubr.f32.mxu0 0.0
    %v536 = vand.u32 %v143, 4294901760
    %v537 = vsub.f32 %v143, %v536
    %v538 = vand.u32 %v537, 4294901760
    %v539 = vsub.f32 %v537, %v538
    %v540 = vand.u32 %v539, 4294901760
    %541 = vmatmul.mubr.f32.gmra.mrb[0].mxu0 %v540
    %v542 = vpop.f32.mrb[0].mxu0
    %v543 = vadd.f32 0.0, %v542
    %v544 = vpop.f32.mrb[0].mxu0
    %545 = vmatprep.mubr.f32.mxu0 0.0
    %v546 = vand.u32 %v146, 4294901760
    %v547 = vsub.f32 %v146, %v546
    %v548 = vand.u32 %v547, 4294901760
    %v549 = vsub.f32 %v547, %v548
    %v550 = vand.u32 %v549, 4294901760
    %551 = vmatmul.mubr.f32.gmra.mrb[0].mxu0 %v550
    %v552 = vpop.f32.mrb[0].mxu0
    %v553 = vadd.f32 0.0, %v552
    %v554 = vpop.f32.mrb[0].mxu0
    %555 = vmatprep.mubr.f32.mxu0 0.0
    %v556 = vand.u32 %v149, 4294901760
    %v557 = vsub.f32 %v149, %v556
    %v558 = vand.u32 %v557, 4294901760
    %v559 = vsub.f32 %v557, %v558
    %v560 = vand.u32 %v559, 4294901760
    %561 = vmatmul.mubr.f32.gmra.mrb[0].mxu0 %v560
    %v562 = vpop.f32.mrb[0].mxu0
    %v563 = vadd.f32 0.0, %v562
    %v564 = vpop.f32.mrb[0].mxu0
    %565 = vmatprep.mubr.f32.mxu0 0.0
    %v566 = vand.u32 %v152, 4294901760
    %v567 = vsub.f32 %v152, %v566
    %v568 = vand.u32 %v567, 4294901760
    %v569 = vsub.f32 %v567, %v568
    %v570 = vand.u32 %v569, 4294901760
    %571 = vmatmul.mubr.f32.gmra.mrb[0].mxu0 %v570
    %v572 = vpop.f32.mrb[0].mxu0
    %v573 = vadd.f32 0.0, %v572
    %v574 = vpop.f32.mrb[0].mxu0
    %575 = vmatprep.mubr.f32.mxu0 0.0
    %v576 = vand.u32 %v155, 4294901760
    %v577 = vsub.f32 %v155, %v576
    %v578 = vand.u32 %v577, 4294901760
    %v579 = vsub.f32 %v577, %v578
    %v580 = vand.u32 %v579, 4294901760
    %581 = vmatmul.mubr.f32.gmra.mrb[0].mxu0 %v580
    %v582 = vpop.f32.mrb[0].mxu0
    %v583 = vadd.f32 0.0, %v582
    %v584 = vpop.f32.mrb[0].mxu0
    %585 = vmatprep.mubr.f32.mxu0 0.0
    %v586 = vand.u32 %v158, 4294901760
    %v587 = vsub.f32 %v158, %v586
    %v588 = vand.u32 %v587, 4294901760
    %v589 = vsub.f32 %v587, %v588
    %v590 = vand.u32 %v589, 4294901760
    %591 = vmatmul.mubr.f32.gmra.mrb[0].mxu0 %v590
    %v592 = vpop.f32.mrb[0].mxu0
    %v593 = vadd.f32 0.0, %v592
    %v594 = vpop.f32.mrb[0].mxu0
    %595 = vmatprep.mubr.f32.mxu0 0.0
    %v596 = vand.u32 %v161, 4294901760
    %v597 = vsub.f32 %v161, %v596
    %v598 = vand.u32 %v597, 4294901760
    %v599 = vsub.f32 %v597, %v598
    %v600 = vand.u32 %v599, 4294901760
    %601 = vmatmul.mubr.f32.gmra.mrb[0].mxu0 %v600
    %v602 = vpop.f32.mrb[0].mxu0
    %v603 = vadd.f32 0.0, %v602
    %v604 = vpop.f32.mrb[0].mxu0
    %605 = vmatprep.mubr.f32.mxu0 0.0
    %v606 = vand.u32 %v164, 4294901760
    %v607 = vsub.f32 %v164, %v606
    %v608 = vand.u32 %v607, 4294901760
    %v609 = vsub.f32 %v607, %v608
    %v610 = vand.u32 %v609, 4294901760
    %611 = vmatmul.mubr.f32.gmra.mrb[0].mxu0 %v610
    %v612 = vpop.f32.mrb[0].mxu0
    %v613 = vadd.f32 0.0, %v612
    %v614 = vpop.f32.mrb[0].mxu0
    %615 = vdwg.mxu0
    %616 = vmatprep.subr.mxu0 0.0
    %v617 = vand.u32 %v168, 4294901760
    %v618 = vsub.f32 %v168, %v617
    %v619 = vand.u32 %v618, 4294901760
    %v620 = vsub.f32 %v618, %v619
    %v621 = vand.u32 %v620, 4294901760
    %622 = vmatpush1.msra.mxu0 %v621
    %623 = vmatprep.subr.mxu0 0.0
    %624 = vmatpush1.msra.mxu0 0.0
    %625 = vmatprep.subr.mxu0 0.0
    %626 = vmatpush1.msra.mxu0 0.0
    %627 = vmatprep.subr.mxu0 0.0
    %628 = vmatpush1.msra.mxu0 0.0
    %629 = vmatprep.subr.mxu0 0.0
    %630 = vmatpush1.msra.mxu0 0.0
    %631 = vmatprep.subr.mxu0 0.0
    %632 = vmatpush1.msra.mxu0 0.0
    %633 = vmatprep.subr.mxu0 0.0
    %634 = vmatpush1.msra.mxu0 0.0
    %635 = vmatprep.subr.mxu0 0.0
    %636 = vmatpush1.msra.mxu0 0.0
    %637 = vmatprep.subr.mxu0 0.0
    %638 = vmatpush1.msra.mxu0 0.0
    %639 = vmatprep.subr.mxu0 0.0
    %640 = vmatpush1.msra.mxu0 0.0
    %641 = vmatprep.subr.mxu0 0.0
    %642 = vmatpush1.msra.mxu0 0.0
    %643 = vmatprep.subr.mxu0 0.0
    %644 = vmatpush1.msra.mxu0 0.0
    %645 = vmatprep.subr.mxu0 0.0
    %646 = vmatpush1.msra.mxu0 0.0
    %647 = vmatprep.subr.mxu0 0.0
    %648 = vmatpush1.msra.mxu0 0.0
    %649 = vmatprep.subr.mxu0 0.0
    %650 = vmatpush1.msra.mxu0 0.0
    %651 = vmatprep.subr.mxu0 0.0
    %652 = vmatpush1.msra.mxu0 0.0
    %653 = vmatprep.subr.mxu0 0.0
    %654 = vmatpush1.msra.mxu0 0.0
    %655 = vmatprep.subr.mxu0 0.0
    %656 = vmatpush1.msra.mxu0 0.0
    %657 = vmatprep.subr.mxu0 0.0
    %658 = vmatpush1.msra.mxu0 0.0
    %659 = vmatprep.subr.mxu0 0.0
    %660 = vmatpush1.msra.mxu0 0.0
    %661 = vmatprep.subr.mxu0 0.0
    %662 = vmatpush1.msra.mxu0 0.0
    %663 = vmatprep.subr.mxu0 0.0
    %664 = vmatpush1.msra.mxu0 0.0
    %665 = vmatprep.subr.mxu0 0.0
    %666 = vmatpush1.msra.mxu0 0.0
    %667 = vmatprep.subr.mxu0 0.0
    %668 = vmatpush1.msra.mxu0 0.0
    %669 = vmatprep.subr.mxu0 0.0
    %670 = vmatpush1.msra.mxu0 0.0
    %671 = vmatprep.subr.mxu0 0.0
    %672 = vmatpush1.msra.mxu0 0.0
    %673 = vmatprep.subr.mxu0 0.0
    %674 = vmatpush1.msra.mxu0 0.0
    %675 = vmatprep.subr.mxu0 0.0
    %676 = vmatpush1.msra.mxu0 0.0
    %677 = vmatprep.subr.mxu0 0.0
    %678 = vmatpush1.msra.mxu0 0.0
    %679 = vmatprep.subr.mxu0 0.0
    %680 = vmatpush1.msra.mxu0 0.0
    %681 = vmatprep.subr.mxu0 0.0
    %682 = vmatpush1.msra.mxu0 0.0
    %683 = vmatprep.subr.mxu0 0.0
    %684 = vmatpush1.msra.mxu0 0.0
    %685 = vmatprep.mubr.f32.mxu0 0.0
    %v686 = vand.u32 %v53, 4294901760
    %687 = vmatmul.mubr.f32.gmra.mrb[0].mxu0 %v686
    %v688 = vpop.f32.mrb[0].mxu0
    %v689 = vadd.f32 %v243, %v688
    %v690 = vpop.f32.mrb[0].mxu0
    %691 = vmatprep.mubr.f32.mxu0 0.0
    %v692 = vand.u32 %v56, 4294901760
    %693 = vmatmul.mubr.f32.gmra.mrb[0].mxu0 %v692
    %v694 = vpop.f32.mrb[0].mxu0
    %v695 = vadd.f32 %v253, %v694
    %v696 = vpop.f32.mrb[0].mxu0
    %697 = vmatprep.mubr.f32.mxu0 0.0
    %v698 = vand.u32 %v59, 4294901760
    %699 = vmatmul.mubr.f32.gmra.mrb[0].mxu0 %v698
    %v700 = vpop.f32.mrb[0].mxu0
    %v701 = vadd.f32 %v263, %v700
    %v702 = vpop.f32.mrb[0].mxu0
    %703 = vmatprep.mubr.f32.mxu0 0.0
    %v704 = vand.u32 %v62, 4294901760
    %705 = vmatmul.mubr.f32.gmra.mrb[0].mxu0 %v704
    %v706 = vpop.f32.mrb[0].mxu0
    %v707 = vadd.f32 %v273, %v706
    %v708 = vpop.f32.mrb[0].mxu0
    %709 = vmatprep.mubr.f32.mxu0 0.0
    %v710 = vand.u32 %v65, 4294901760
    %711 = vmatmul.mubr.f32.gmra.mrb[0].mxu0 %v710
    %v712 = vpop.f32.mrb[0].mxu0
    %v713 = vadd.f32 %v283, %v712
    %v714 = vpop.f32.mrb[0].mxu0
    %715 = vmatprep.mubr.f32.mxu0 0.0
    %v716 = vand.u32 %v68, 4294901760
    %717 = vmatmul.mubr.f32.gmra.mrb[0].mxu0 %v716
    %v718 = vpop.f32.mrb[0].mxu0
    %v719 = vadd.f32 %v293, %v718
    %v720 = vpop.f32.mrb[0].mxu0
    %721 = vmatprep.mubr.f32.mxu0 0.0
    %v722 = vand.u32 %v71, 4294901760
    %723 = vmatmul.mubr.f32.gmra.mrb[0].mxu0 %v722
    %v724 = vpop.f32.mrb[0].mxu0
    %v725 = vadd.f32 %v303, %v724
    %v726 = vpop.f32.mrb[0].mxu0
    %727 = vmatprep.mubr.f32.mxu0 0.0
    %v728 = vand.u32 %v74, 4294901760
    %729 = vmatmul.mubr.f32.gmra.mrb[0].mxu0 %v728
    %v730 = vpop.f32.mrb[0].mxu0
    %v731 = vadd.f32 %v313, %v730
    %v732 = vpop.f32.mrb[0].mxu0
    %733 = vmatprep.mubr.f32.mxu0 0.0
    %v734 = vand.u32 %v77, 4294901760
    %735 = vmatmul.mubr.f32.gmra.mrb[0].mxu0 %v734
    %v736 = vpop.f32.mrb[0].mxu0
    %v737 = vadd.f32 %v323, %v736
    %v738 = vpop.f32.mrb[0].mxu0
    %739 = vmatprep.mubr.f32.mxu0 0.0
    %v740 = vand.u32 %v80, 4294901760
    %741 = vmatmul.mubr.f32.gmra.mrb[0].mxu0 %v740
    %v742 = vpop.f32.mrb[0].mxu0
    %v743 = vadd.f32 %v333, %v742
    %v744 = vpop.f32.mrb[0].mxu0
    %745 = vmatprep.mubr.f32.mxu0 0.0
    %v746 = vand.u32 %v83, 4294901760
    %747 = vmatmul.mubr.f32.gmra.mrb[0].mxu0 %v746
    %v748 = vpop.f32.mrb[0].mxu0
    %v749 = vadd.f32 %v343, %v748
    %v750 = vpop.f32.mrb[0].mxu0
    %751 = vmatprep.mubr.f32.mxu0 0.0
    %v752 = vand.u32 %v86, 4294901760
    %753 = vmatmul.mubr.f32.gmra.mrb[0].mxu0 %v752
    %v754 = vpop.f32.mrb[0].mxu0
    %v755 = vadd.f32 %v353, %v754
    %v756 = vpop.f32.mrb[0].mxu0
    %757 = vmatprep.mubr.f32.mxu0 0.0
    %v758 = vand.u32 %v89, 4294901760
    %759 = vmatmul.mubr.f32.gmra.mrb[0].mxu0 %v758
    %v760 = vpop.f32.mrb[0].mxu0
    %v761 = vadd.f32 %v363, %v760
    %v762 = vpop.f32.mrb[0].mxu0
    %763 = vmatprep.mubr.f32.mxu0 0.0
    %v764 = vand.u32 %v92, 4294901760
    %765 = vmatmul.mubr.f32.gmra.mrb[0].mxu0 %v764
    %v766 = vpop.f32.mrb[0].mxu0
    %v767 = vadd.f32 %v373, %v766
    %v768 = vpop.f32.mrb[0].mxu0
    %769 = vmatprep.mubr.f32.mxu0 0.0
    %v770 = vand.u32 %v95, 4294901760
    %771 = vmatmul.mubr.f32.gmra.mrb[0].mxu0 %v770
    %v772 = vpop.f32.mrb[0].mxu0
    %v773 = vadd.f32 %v383, %v772
    %v774 = vpop.f32.mrb[0].mxu0
    %775 = vmatprep.mubr.f32.mxu0 0.0
    %v776 = vand.u32 %v98, 4294901760
    %777 = vmatmul.mubr.f32.gmra.mrb[0].mxu0 %v776
    %v778 = vpop.f32.mrb[0].mxu0
    %v779 = vadd.f32 %v393, %v778
    %v780 = vpop.f32.mrb[0].mxu0
    %781 = vmatprep.mubr.f32.mxu0 0.0
    %v782 = vand.u32 %v101, 4294901760
    %783 = vmatmul.mubr.f32.gmra.mrb[0].mxu0 %v782
    %v784 = vpop.f32.mrb[0].mxu0
    %v785 = vadd.f32 %v403, %v784
    %v786 = vpop.f32.mrb[0].mxu0
    %787 = vmatprep.mubr.f32.mxu0 0.0
    %v788 = vand.u32 %v104, 4294901760
    %789 = vmatmul.mubr.f32.gmra.mrb[0].mxu0 %v788
    %v790 = vpop.f32.mrb[0].mxu0
    %v791 = vadd.f32 %v413, %v790
    %v792 = vpop.f32.mrb[0].mxu0
    %793 = vmatprep.mubr.f32.mxu0 0.0
    %v794 = vand.u32 %v107, 4294901760
    %795 = vmatmul.mubr.f32.gmra.mrb[0].mxu0 %v794
    %v796 = vpop.f32.mrb[0].mxu0
    %v797 = vadd.f32 %v423, %v796
    %v798 = vpop.f32.mrb[0].mxu0
    %799 = vmatprep.mubr.f32.mxu0 0.0
    %v800 = vand.u32 %v110, 4294901760
    %801 = vmatmul.mubr.f32.gmra.mrb[0].mxu0 %v800
    %v802 = vpop.f32.mrb[0].mxu0
    %v803 = vadd.f32 %v433, %v802
    %v804 = vpop.f32.mrb[0].mxu0
    %805 = vmatprep.mubr.f32.mxu0 0.0
    %v806 = vand.u32 %v113, 4294901760
    %807 = vmatmul.mubr.f32.gmra.mrb[0].mxu0 %v806
    %v808 = vpop.f32.mrb[0].mxu0
    %v809 = vadd.f32 %v443, %v808
    %v810 = vpop.f32.mrb[0].mxu0
    %811 = vmatprep.mubr.f32.mxu0 0.0
    %v812 = vand.u32 %v116, 4294901760
    %813 = vmatmul.mubr.f32.gmra.mrb[0].mxu0 %v812
    %v814 = vpop.f32.mrb[0].mxu0
    %v815 = vadd.f32 %v453, %v814
    %v816 = vpop.f32.mrb[0].mxu0
    %817 = vmatprep.mubr.f32.mxu0 0.0
    %v818 = vand.u32 %v119, 4294901760
    %819 = vmatmul.mubr.f32.gmra.mrb[0].mxu0 %v818
    %v820 = vpop.f32.mrb[0].mxu0
    %v821 = vadd.f32 %v463, %v820
    %v822 = vpop.f32.mrb[0].mxu0
    %823 = vmatprep.mubr.f32.mxu0 0.0
    %v824 = vand.u32 %v122, 4294901760
    %825 = vmatmul.mubr.f32.gmra.mrb[0].mxu0 %v824
    %v826 = vpop.f32.mrb[0].mxu0
    %v827 = vadd.f32 %v473, %v826
    %v828 = vpop.f32.mrb[0].mxu0
    %829 = vmatprep.mubr.f32.mxu0 0.0
    %v830 = vand.u32 %v125, 4294901760
    %831 = vmatmul.mubr.f32.gmra.mrb[0].mxu0 %v830
    %v832 = vpop.f32.mrb[0].mxu0
    %v833 = vadd.f32 %v483, %v832
    %v834 = vpop.f32.mrb[0].mxu0
    %835 = vmatprep.mubr.f32.mxu0 0.0
    %v836 = vand.u32 %v128, 4294901760
    %837 = vmatmul.mubr.f32.gmra.mrb[0].mxu0 %v836
    %v838 = vpop.f32.mrb[0].mxu0
    %v839 = vadd.f32 %v493, %v838
    %v840 = vpop.f32.mrb[0].mxu0
    %841 = vmatprep.mubr.f32.mxu0 0.0
    %v842 = vand.u32 %v131, 4294901760
    %843 = vmatmul.mubr.f32.gmra.mrb[0].mxu0 %v842
    %v844 = vpop.f32.mrb[0].mxu0
    %v845 = vadd.f32 %v503, %v844
    %v846 = vpop.f32.mrb[0].mxu0
    %847 = vmatprep.mubr.f32.mxu0 0.0
    %v848 = vand.u32 %v134, 4294901760
    %849 = vmatmul.mubr.f32.gmra.mrb[0].mxu0 %v848
    %v850 = vpop.f32.mrb[0].mxu0
    %v851 = vadd.f32 %v513, %v850
    %v852 = vpop.f32.mrb[0].mxu0
    %853 = vmatprep.mubr.f32.mxu0 0.0
    %v854 = vand.u32 %v137, 4294901760
    %855 = vmatmul.mubr.f32.gmra.mrb[0].mxu0 %v854
    %v856 = vpop.f32.mrb[0].mxu0
    %v857 = vadd.f32 %v523, %v856
    %v858 = vpop.f32.mrb[0].mxu0
    %859 = vmatprep.mubr.f32.mxu0 0.0
    %v860 = vand.u32 %v140, 4294901760
    %861 = vmatmul.mubr.f32.gmra.mrb[0].mxu0 %v860
    %v862 = vpop.f32.mrb[0].mxu0
    %v863 = vadd.f32 %v533, %v862
    %v864 = vpop.f32.mrb[0].mxu0
    %865 = vmatprep.mubr.f32.mxu0 0.0
    %v866 = vand.u32 %v143, 4294901760
    %867 = vmatmul.mubr.f32.gmra.mrb[0].mxu0 %v866
    %v868 = vpop.f32.mrb[0].mxu0
    %v869 = vadd.f32 %v543, %v868
    %v870 = vpop.f32.mrb[0].mxu0
    %871 = vmatprep.mubr.f32.mxu0 0.0
    %v872 = vand.u32 %v146, 4294901760
    %873 = vmatmul.mubr.f32.gmra.mrb[0].mxu0 %v872
    %v874 = vpop.f32.mrb[0].mxu0
    %v875 = vadd.f32 %v553, %v874
    %v876 = vpop.f32.mrb[0].mxu0
    %877 = vmatprep.mubr.f32.mxu0 0.0
    %v878 = vand.u32 %v149, 4294901760
    %879 = vmatmul.mubr.f32.gmra.mrb[0].mxu0 %v878
    %v880 = vpop.f32.mrb[0].mxu0
    %v881 = vadd.f32 %v563, %v880
    %v882 = vpop.f32.mrb[0].mxu0
    %883 = vmatprep.mubr.f32.mxu0 0.0
    %v884 = vand.u32 %v152, 4294901760
    %885 = vmatmul.mubr.f32.gmra.mrb[0].mxu0 %v884
    %v886 = vpop.f32.mrb[0].mxu0
    %v887 = vadd.f32 %v573, %v886
    %v888 = vpop.f32.mrb[0].mxu0
    %889 = vmatprep.mubr.f32.mxu0 0.0
    %v890 = vand.u32 %v155, 4294901760
    %891 = vmatmul.mubr.f32.gmra.mrb[0].mxu0 %v890
    %v892 = vpop.f32.mrb[0].mxu0
    %v893 = vadd.f32 %v583, %v892
    %v894 = vpop.f32.mrb[0].mxu0
    %895 = vmatprep.mubr.f32.mxu0 0.0
    %v896 = vand.u32 %v158, 4294901760
    %897 = vmatmul.mubr.f32.gmra.mrb[0].mxu0 %v896
    %v898 = vpop.f32.mrb[0].mxu0
    %v899 = vadd.f32 %v593, %v898
    %v900 = vpop.f32.mrb[0].mxu0
    %901 = vmatprep.mubr.f32.mxu0 0.0
    %v902 = vand.u32 %v161, 4294901760
    %903 = vmatmul.mubr.f32.gmra.mrb[0].mxu0 %v902
    %v904 = vpop.f32.mrb[0].mxu0
    %v905 = vadd.f32 %v603, %v904
    %v906 = vpop.f32.mrb[0].mxu0
    %907 = vmatprep.mubr.f32.mxu0 0.0
    %v908 = vand.u32 %v164, 4294901760
    %909 = vmatmul.mubr.f32.gmra.mrb[0].mxu0 %v908
    %v910 = vpop.f32.mrb[0].mxu0
    %v911 = vadd.f32 %v613, %v910
    %v912 = vpop.f32.mrb[0].mxu0
    %913 = vdwg.mxu0
    %914 = vmatprep.subr.mxu0 0.0
    %v915 = vand.u32 %v168, 4294901760
    %v916 = vsub.f32 %v168, %v915
    %917 = vmatpush1.msra.mxu0 %v916
    %918 = vmatprep.subr.mxu0 0.0
    %919 = vmatpush1.msra.mxu0 0.0
    %920 = vmatprep.subr.mxu0 0.0
    %921 = vmatpush1.msra.mxu0 0.0
    %922 = vmatprep.subr.mxu0 0.0
    %923 = vmatpush1.msra.mxu0 0.0
    %924 = vmatprep.subr.mxu0 0.0
    %925 = vmatpush1.msra.mxu0 0.0
    %926 = vmatprep.subr.mxu0 0.0
    %927 = vmatpush1.msra.mxu0 0.0
    %928 = vmatprep.subr.mxu0 0.0
    %929 = vmatpush1.msra.mxu0 0.0
    %930 = vmatprep.subr.mxu0 0.0
    %931 = vmatpush1.msra.mxu0 0.0
    %932 = vmatprep.subr.mxu0 0.0
    %933 = vmatpush1.msra.mxu0 0.0
    %934 = vmatprep.subr.mxu0 0.0
    %935 = vmatpush1.msra.mxu0 0.0
    %936 = vmatprep.subr.mxu0 0.0
    %937 = vmatpush1.msra.mxu0 0.0
    %938 = vmatprep.subr.mxu0 0.0
    %939 = vmatpush1.msra.mxu0 0.0
    %940 = vmatprep.subr.mxu0 0.0
    %941 = vmatpush1.msra.mxu0 0.0
    %942 = vmatprep.subr.mxu0 0.0
    %943 = vmatpush1.msra.mxu0 0.0
    %944 = vmatprep.subr.mxu0 0.0
    %945 = vmatpush1.msra.mxu0 0.0
    %946 = vmatprep.subr.mxu0 0.0
    %947 = vmatpush1.msra.mxu0 0.0
    %948 = vmatprep.subr.mxu0 0.0
    %949 = vmatpush1.msra.mxu0 0.0
    %950 = vmatprep.subr.mxu0 0.0
    %951 = vmatpush1.msra.mxu0 0.0
    %952 = vmatprep.subr.mxu0 0.0
    %953 = vmatpush1.msra.mxu0 0.0
    %954 = vmatprep.subr.mxu0 0.0
    %955 = vmatpush1.msra.mxu0 0.0
    %956 = vmatprep.subr.mxu0 0.0
    %957 = vmatpush1.msra.mxu0 0.0
    %958 = vmatprep.subr.mxu0 0.0
    %959 = vmatpush1.msra.mxu0 0.0
    %960 = vmatprep.subr.mxu0 0.0
    %961 = vmatpush1.msra.mxu0 0.0
    %962 = vmatprep.subr.mxu0 0.0
    %963 = vmatpush1.msra.mxu0 0.0
    %964 = vmatprep.subr.mxu0 0.0
    %965 = vmatpush1.msra.mxu0 0.0
    %966 = vmatprep.subr.mxu0 0.0
    %967 = vmatpush1.msra.mxu0 0.0
    %968 = vmatprep.subr.mxu0 0.0
    %969 = vmatpush1.msra.mxu0 0.0
    %970 = vmatprep.subr.mxu0 0.0
    %971 = vmatpush1.msra.mxu0 0.0
    %972 = vmatprep.subr.mxu0 0.0
    %973 = vmatpush1.msra.mxu0 0.0
    %974 = vmatprep.subr.mxu0 0.0
    %975 = vmatpush1.msra.mxu0 0.0
    %976 = vmatprep.subr.mxu0 0.0
    %977 = vmatpush1.msra.mxu0 0.0
    %978 = vmatprep.subr.mxu0 0.0
    %979 = vmatpush1.msra.mxu0 0.0
    %980 = vmatprep.mubr.f32.mxu0 0.0
    %v981 = vand.u32 %v53, 4294901760
    %v982 = vsub.f32 %v53, %v981
    %983 = vmatmul.mubr.f32.gmra.mrb[0].mxu0 %v982
    %v984 = vpop.f32.mrb[0].mxu0
    %v985 = vadd.f32 %v689, %v984
    %v986 = vpop.f32.mrb[0].mxu0
    %987 = vmatprep.mubr.f32.mxu0 0.0
    %v988 = vand.u32 %v56, 4294901760
    %v989 = vsub.f32 %v56, %v988
    %990 = vmatmul.mubr.f32.gmra.mrb[0].mxu0 %v989
    %v991 = vpop.f32.mrb[0].mxu0
    %v992 = vadd.f32 %v695, %v991
    %v993 = vpop.f32.mrb[0].mxu0
    %994 = vmatprep.mubr.f32.mxu0 0.0
    %v995 = vand.u32 %v59, 4294901760
    %v996 = vsub.f32 %v59, %v995
    %997 = vmatmul.mubr.f32.gmra.mrb[0].mxu0 %v996
    %v998 = vpop.f32.mrb[0].mxu0
    %v999 = vadd.f32 %v701, %v998
    %v1000 = vpop.f32.mrb[0].mxu0
    %1001 = vmatprep.mubr.f32.mxu0 0.0
    %v1002 = vand.u32 %v62, 4294901760
    %v1003 = vsub.f32 %v62, %v1002
    %1004 = vmatmul.mubr.f32.gmra.mrb[0].mxu0 %v1003
    %v1005 = vpop.f32.mrb[0].mxu0
    %v1006 = vadd.f32 %v707, %v1005
    %v1007 = vpop.f32.mrb[0].mxu0
    %1008 = vmatprep.mubr.f32.mxu0 0.0
    %v1009 = vand.u32 %v65, 4294901760
    %v1010 = vsub.f32 %v65, %v1009
    %1011 = vmatmul.mubr.f32.gmra.mrb[0].mxu0 %v1010
    %v1012 = vpop.f32.mrb[0].mxu0
    %v1013 = vadd.f32 %v713, %v1012
    %v1014 = vpop.f32.mrb[0].mxu0
    %1015 = vmatprep.mubr.f32.mxu0 0.0
    %v1016 = vand.u32 %v68, 4294901760
    %v1017 = vsub.f32 %v68, %v1016
    %1018 = vmatmul.mubr.f32.gmra.mrb[0].mxu0 %v1017
    %v1019 = vpop.f32.mrb[0].mxu0
    %v1020 = vadd.f32 %v719, %v1019
    %v1021 = vpop.f32.mrb[0].mxu0
    %1022 = vmatprep.mubr.f32.mxu0 0.0
    %v1023 = vand.u32 %v71, 4294901760
    %v1024 = vsub.f32 %v71, %v1023
    %1025 = vmatmul.mubr.f32.gmra.mrb[0].mxu0 %v1024
    %v1026 = vpop.f32.mrb[0].mxu0
    %v1027 = vadd.f32 %v725, %v1026
    %v1028 = vpop.f32.mrb[0].mxu0
    %1029 = vmatprep.mubr.f32.mxu0 0.0
    %v1030 = vand.u32 %v74, 4294901760
    %v1031 = vsub.f32 %v74, %v1030
    %1032 = vmatmul.mubr.f32.gmra.mrb[0].mxu0 %v1031
    %v1033 = vpop.f32.mrb[0].mxu0
    %v1034 = vadd.f32 %v731, %v1033
    %v1035 = vpop.f32.mrb[0].mxu0
    %1036 = vmatprep.mubr.f32.mxu0 0.0
    %v1037 = vand.u32 %v77, 4294901760
    %v1038 = vsub.f32 %v77, %v1037
    %1039 = vmatmul.mubr.f32.gmra.mrb[0].mxu0 %v1038
    %v1040 = vpop.f32.mrb[0].mxu0
    %v1041 = vadd.f32 %v737, %v1040
    %v1042 = vpop.f32.mrb[0].mxu0
    %1043 = vmatprep.mubr.f32.mxu0 0.0
    %v1044 = vand.u32 %v80, 4294901760
    %v1045 = vsub.f32 %v80, %v1044
    %1046 = vmatmul.mubr.f32.gmra.mrb[0].mxu0 %v1045
    %v1047 = vpop.f32.mrb[0].mxu0
    %v1048 = vadd.f32 %v743, %v1047
    %v1049 = vpop.f32.mrb[0].mxu0
    %1050 = vmatprep.mubr.f32.mxu0 0.0
    %v1051 = vand.u32 %v83, 4294901760
    %v1052 = vsub.f32 %v83, %v1051
    %1053 = vmatmul.mubr.f32.gmra.mrb[0].mxu0 %v1052
    %v1054 = vpop.f32.mrb[0].mxu0
    %v1055 = vadd.f32 %v749, %v1054
    %v1056 = vpop.f32.mrb[0].mxu0
    %1057 = vmatprep.mubr.f32.mxu0 0.0
    %v1058 = vand.u32 %v86, 4294901760
    %v1059 = vsub.f32 %v86, %v1058
    %1060 = vmatmul.mubr.f32.gmra.mrb[0].mxu0 %v1059
    %v1061 = vpop.f32.mrb[0].mxu0
    %v1062 = vadd.f32 %v755, %v1061
    %v1063 = vpop.f32.mrb[0].mxu0
    %1064 = vmatprep.mubr.f32.mxu0 0.0
    %v1065 = vand.u32 %v89, 4294901760
    %v1066 = vsub.f32 %v89, %v1065
    %1067 = vmatmul.mubr.f32.gmra.mrb[0].mxu0 %v1066
    %v1068 = vpop.f32.mrb[0].mxu0
    %v1069 = vadd.f32 %v761, %v1068
    %v1070 = vpop.f32.mrb[0].mxu0
    %1071 = vmatprep.mubr.f32.mxu0 0.0
    %v1072 = vand.u32 %v92, 4294901760
    %v1073 = vsub.f32 %v92, %v1072
    %1074 = vmatmul.mubr.f32.gmra.mrb[0].mxu0 %v1073
    %v1075 = vpop.f32.mrb[0].mxu0
    %v1076 = vadd.f32 %v767, %v1075
    %v1077 = vpop.f32.mrb[0].mxu0
    %1078 = vmatprep.mubr.f32.mxu0 0.0
    %v1079 = vand.u32 %v95, 4294901760
    %v1080 = vsub.f32 %v95, %v1079
    %1081 = vmatmul.mubr.f32.gmra.mrb[0].mxu0 %v1080
    %v1082 = vpop.f32.mrb[0].mxu0
    %v1083 = vadd.f32 %v773, %v1082
    %v1084 = vpop.f32.mrb[0].mxu0
    %1085 = vmatprep.mubr.f32.mxu0 0.0
    %v1086 = vand.u32 %v98, 4294901760
    %v1087 = vsub.f32 %v98, %v1086
    %1088 = vmatmul.mubr.f32.gmra.mrb[0].mxu0 %v1087
    %v1089 = vpop.f32.mrb[0].mxu0
    %v1090 = vadd.f32 %v779, %v1089
    %v1091 = vpop.f32.mrb[0].mxu0
    %1092 = vmatprep.mubr.f32.mxu0 0.0
    %v1093 = vand.u32 %v101, 4294901760
    %v1094 = vsub.f32 %v101, %v1093
    %1095 = vmatmul.mubr.f32.gmra.mrb[0].mxu0 %v1094
    %v1096 = vpop.f32.mrb[0].mxu0
    %v1097 = vadd.f32 %v785, %v1096
    %v1098 = vpop.f32.mrb[0].mxu0
    %1099 = vmatprep.mubr.f32.mxu0 0.0
    %v1100 = vand.u32 %v104, 4294901760
    %v1101 = vsub.f32 %v104, %v1100
    %1102 = vmatmul.mubr.f32.gmra.mrb[0].mxu0 %v1101
    %v1103 = vpop.f32.mrb[0].mxu0
    %v1104 = vadd.f32 %v791, %v1103
    %v1105 = vpop.f32.mrb[0].mxu0
    %1106 = vmatprep.mubr.f32.mxu0 0.0
    %v1107 = vand.u32 %v107, 4294901760
    %v1108 = vsub.f32 %v107, %v1107
    %1109 = vmatmul.mubr.f32.gmra.mrb[0].mxu0 %v1108
    %v1110 = vpop.f32.mrb[0].mxu0
    %v1111 = vadd.f32 %v797, %v1110
    %v1112 = vpop.f32.mrb[0].mxu0
    %1113 = vmatprep.mubr.f32.mxu0 0.0
    %v1114 = vand.u32 %v110, 4294901760
    %v1115 = vsub.f32 %v110, %v1114
    %1116 = vmatmul.mubr.f32.gmra.mrb[0].mxu0 %v1115
    %v1117 = vpop.f32.mrb[0].mxu0
    %v1118 = vadd.f32 %v803, %v1117
    %v1119 = vpop.f32.mrb[0].mxu0
    %1120 = vmatprep.mubr.f32.mxu0 0.0
    %v1121 = vand.u32 %v113, 4294901760
    %v1122 = vsub.f32 %v113, %v1121
    %1123 = vmatmul.mubr.f32.gmra.mrb[0].mxu0 %v1122
    %v1124 = vpop.f32.mrb[0].mxu0
    %v1125 = vadd.f32 %v809, %v1124
    %v1126 = vpop.f32.mrb[0].mxu0
    %1127 = vmatprep.mubr.f32.mxu0 0.0
    %v1128 = vand.u32 %v116, 4294901760
    %v1129 = vsub.f32 %v116, %v1128
    %1130 = vmatmul.mubr.f32.gmra.mrb[0].mxu0 %v1129
    %v1131 = vpop.f32.mrb[0].mxu0
    %v1132 = vadd.f32 %v815, %v1131
    %v1133 = vpop.f32.mrb[0].mxu0
    %1134 = vmatprep.mubr.f32.mxu0 0.0
    %v1135 = vand.u32 %v119, 4294901760
    %v1136 = vsub.f32 %v119, %v1135
    %1137 = vmatmul.mubr.f32.gmra.mrb[0].mxu0 %v1136
    %v1138 = vpop.f32.mrb[0].mxu0
    %v1139 = vadd.f32 %v821, %v1138
    %v1140 = vpop.f32.mrb[0].mxu0
    %1141 = vmatprep.mubr.f32.mxu0 0.0
    %v1142 = vand.u32 %v122, 4294901760
    %v1143 = vsub.f32 %v122, %v1142
    %1144 = vmatmul.mubr.f32.gmra.mrb[0].mxu0 %v1143
    %v1145 = vpop.f32.mrb[0].mxu0
    %v1146 = vadd.f32 %v827, %v1145
    %v1147 = vpop.f32.mrb[0].mxu0
    %1148 = vmatprep.mubr.f32.mxu0 0.0
    %v1149 = vand.u32 %v125, 4294901760
    %v1150 = vsub.f32 %v125, %v1149
    %1151 = vmatmul.mubr.f32.gmra.mrb[0].mxu0 %v1150
    %v1152 = vpop.f32.mrb[0].mxu0
    %v1153 = vadd.f32 %v833, %v1152
    %v1154 = vpop.f32.mrb[0].mxu0
    %1155 = vmatprep.mubr.f32.mxu0 0.0
    %v1156 = vand.u32 %v128, 4294901760
    %v1157 = vsub.f32 %v128, %v1156
    %1158 = vmatmul.mubr.f32.gmra.mrb[0].mxu0 %v1157
    %v1159 = vpop.f32.mrb[0].mxu0
    %v1160 = vadd.f32 %v839, %v1159
    %v1161 = vpop.f32.mrb[0].mxu0
    %1162 = vmatprep.mubr.f32.mxu0 0.0
    %v1163 = vand.u32 %v131, 4294901760
    %v1164 = vsub.f32 %v131, %v1163
    %1165 = vmatmul.mubr.f32.gmra.mrb[0].mxu0 %v1164
    %v1166 = vpop.f32.mrb[0].mxu0
    %v1167 = vadd.f32 %v845, %v1166
    %v1168 = vpop.f32.mrb[0].mxu0
    %1169 = vmatprep.mubr.f32.mxu0 0.0
    %v1170 = vand.u32 %v134, 4294901760
    %v1171 = vsub.f32 %v134, %v1170
    %1172 = vmatmul.mubr.f32.gmra.mrb[0].mxu0 %v1171
    %v1173 = vpop.f32.mrb[0].mxu0
    %v1174 = vadd.f32 %v851, %v1173
    %v1175 = vpop.f32.mrb[0].mxu0
    %1176 = vmatprep.mubr.f32.mxu0 0.0
    %v1177 = vand.u32 %v137, 4294901760
    %v1178 = vsub.f32 %v137, %v1177
    %1179 = vmatmul.mubr.f32.gmra.mrb[0].mxu0 %v1178
    %v1180 = vpop.f32.mrb[0].mxu0
    %v1181 = vadd.f32 %v857, %v1180
    %v1182 = vpop.f32.mrb[0].mxu0
    %1183 = vmatprep.mubr.f32.mxu0 0.0
    %v1184 = vand.u32 %v140, 4294901760
    %v1185 = vsub.f32 %v140, %v1184
    %1186 = vmatmul.mubr.f32.gmra.mrb[0].mxu0 %v1185
    %v1187 = vpop.f32.mrb[0].mxu0
    %v1188 = vadd.f32 %v863, %v1187
    %v1189 = vpop.f32.mrb[0].mxu0
    %1190 = vmatprep.mubr.f32.mxu0 0.0
    %v1191 = vand.u32 %v143, 4294901760
    %v1192 = vsub.f32 %v143, %v1191
    %1193 = vmatmul.mubr.f32.gmra.mrb[0].mxu0 %v1192
    %v1194 = vpop.f32.mrb[0].mxu0
    %v1195 = vadd.f32 %v869, %v1194
    %v1196 = vpop.f32.mrb[0].mxu0
    %1197 = vmatprep.mubr.f32.mxu0 0.0
    %v1198 = vand.u32 %v146, 4294901760
    %v1199 = vsub.f32 %v146, %v1198
    %1200 = vmatmul.mubr.f32.gmra.mrb[0].mxu0 %v1199
    %v1201 = vpop.f32.mrb[0].mxu0
    %v1202 = vadd.f32 %v875, %v1201
    %v1203 = vpop.f32.mrb[0].mxu0
    %1204 = vmatprep.mubr.f32.mxu0 0.0
    %v1205 = vand.u32 %v149, 4294901760
    %v1206 = vsub.f32 %v149, %v1205
    %1207 = vmatmul.mubr.f32.gmra.mrb[0].mxu0 %v1206
    %v1208 = vpop.f32.mrb[0].mxu0
    %v1209 = vadd.f32 %v881, %v1208
    %v1210 = vpop.f32.mrb[0].mxu0
    %1211 = vmatprep.mubr.f32.mxu0 0.0
    %v1212 = vand.u32 %v152, 4294901760
    %v1213 = vsub.f32 %v152, %v1212
    %1214 = vmatmul.mubr.f32.gmra.mrb[0].mxu0 %v1213
    %v1215 = vpop.f32.mrb[0].mxu0
    %v1216 = vadd.f32 %v887, %v1215
    %v1217 = vpop.f32.mrb[0].mxu0
    %1218 = vmatprep.mubr.f32.mxu0 0.0
    %v1219 = vand.u32 %v155, 4294901760
    %v1220 = vsub.f32 %v155, %v1219
    %1221 = vmatmul.mubr.f32.gmra.mrb[0].mxu0 %v1220
    %v1222 = vpop.f32.mrb[0].mxu0
    %v1223 = vadd.f32 %v893, %v1222
    %v1224 = vpop.f32.mrb[0].mxu0
    %1225 = vmatprep.mubr.f32.mxu0 0.0
    %v1226 = vand.u32 %v158, 4294901760
    %v1227 = vsub.f32 %v158, %v1226
    %1228 = vmatmul.mubr.f32.gmra.mrb[0].mxu0 %v1227
    %v1229 = vpop.f32.mrb[0].mxu0
    %v1230 = vadd.f32 %v899, %v1229
    %v1231 = vpop.f32.mrb[0].mxu0
    %1232 = vmatprep.mubr.f32.mxu0 0.0
    %v1233 = vand.u32 %v161, 4294901760
    %v1234 = vsub.f32 %v161, %v1233
    %1235 = vmatmul.mubr.f32.gmra.mrb[0].mxu0 %v1234
    %v1236 = vpop.f32.mrb[0].mxu0
    %v1237 = vadd.f32 %v905, %v1236
    %v1238 = vpop.f32.mrb[0].mxu0
    %1239 = vmatprep.mubr.f32.mxu0 0.0
    %v1240 = vand.u32 %v164, 4294901760
    %v1241 = vsub.f32 %v164, %v1240
    %1242 = vmatmul.mubr.f32.gmra.mrb[0].mxu0 %v1241
    %v1243 = vpop.f32.mrb[0].mxu0
    %v1244 = vadd.f32 %v911, %v1243
    %v1245 = vpop.f32.mrb[0].mxu0
    %1246 = vdwg.mxu0
    %1247 = vmatprep.subr.mxu0 0.0
    %v1248 = vand.u32 %v168, 4294901760
    %1249 = vmatpush1.msra.mxu0 %v1248
    %1250 = vmatprep.subr.mxu0 0.0
    %1251 = vmatpush1.msra.mxu0 0.0
    %1252 = vmatprep.subr.mxu0 0.0
    %1253 = vmatpush1.msra.mxu0 0.0
    %1254 = vmatprep.subr.mxu0 0.0
    %1255 = vmatpush1.msra.mxu0 0.0
    %1256 = vmatprep.subr.mxu0 0.0
    %1257 = vmatpush1.msra.mxu0 0.0
    %1258 = vmatprep.subr.mxu0 0.0
    %1259 = vmatpush1.msra.mxu0 0.0
    %1260 = vmatprep.subr.mxu0 0.0
    %1261 = vmatpush1.msra.mxu0 0.0
    %1262 = vmatprep.subr.mxu0 0.0
    %1263 = vmatpush1.msra.mxu0 0.0
    %1264 = vmatprep.subr.mxu0 0.0
    %1265 = vmatpush1.msra.mxu0 0.0
    %1266 = vmatprep.subr.mxu0 0.0
    %1267 = vmatpush1.msra.mxu0 0.0
    %1268 = vmatprep.subr.mxu0 0.0
    %1269 = vmatpush1.msra.mxu0 0.0
    %1270 = vmatprep.subr.mxu0 0.0
    %1271 = vmatpush1.msra.mxu0 0.0
    %1272 = vmatprep.subr.mxu0 0.0
    %1273 = vmatpush1.msra.mxu0 0.0
    %1274 = vmatprep.subr.mxu0 0.0
    %1275 = vmatpush1.msra.mxu0 0.0
    %1276 = vmatprep.subr.mxu0 0.0
    %1277 = vmatpush1.msra.mxu0 0.0
    %1278 = vmatprep.subr.mxu0 0.0
    %1279 = vmatpush1.msra.mxu0 0.0
    %1280 = vmatprep.subr.mxu0 0.0
    %1281 = vmatpush1.msra.mxu0 0.0
    %1282 = vmatprep.subr.mxu0 0.0
    %1283 = vmatpush1.msra.mxu0 0.0
    %1284 = vmatprep.subr.mxu0 0.0
    %1285 = vmatpush1.msra.mxu0 0.0
    %1286 = vmatprep.subr.mxu0 0.0
    %1287 = vmatpush1.msra.mxu0 0.0
    %1288 = vmatprep.subr.mxu0 0.0
    %1289 = vmatpush1.msra.mxu0 0.0
    %1290 = vmatprep.subr.mxu0 0.0
    %1291 = vmatpush1.msra.mxu0 0.0
    %1292 = vmatprep.subr.mxu0 0.0
    %1293 = vmatpush1.msra.mxu0 0.0
    %1294 = vmatprep.subr.mxu0 0.0
    %1295 = vmatpush1.msra.mxu0 0.0
    %1296 = vmatprep.subr.mxu0 0.0
    %1297 = vmatpush1.msra.mxu0 0.0
    %1298 = vmatprep.subr.mxu0 0.0
    %1299 = vmatpush1.msra.mxu0 0.0
    %1300 = vmatprep.subr.mxu0 0.0
    %1301 = vmatpush1.msra.mxu0 0.0
    %1302 = vmatprep.subr.mxu0 0.0
    %1303 = vmatpush1.msra.mxu0 0.0
    %1304 = vmatprep.subr.mxu0 0.0
    %1305 = vmatpush1.msra.mxu0 0.0
    %1306 = vmatprep.subr.mxu0 0.0
    %1307 = vmatpush1.msra.mxu0 0.0
    %1308 = vmatprep.subr.mxu0 0.0
    %1309 = vmatpush1.msra.mxu0 0.0
    %1310 = vmatprep.subr.mxu0 0.0
    %1311 = vmatpush1.msra.mxu0 0.0
    %1312 = vmatprep.mubr.f32.mxu0 0.0
    %v1313 = vand.u32 %v53, 4294901760
    %v1314 = vsub.f32 %v53, %v1313
    %v1315 = vand.u32 %v1314, 4294901760
    %1316 = vmatmul.mubr.f32.gmra.mrb[0].mxu0 %v1315
    %v1317 = vpop.f32.mrb[0].mxu0
    %v1318 = vadd.f32 %v985, %v1317
    %v1319 = vpop.f32.mrb[0].mxu0
    %1320 = vmatprep.mubr.f32.mxu0 0.0
    %v1321 = vand.u32 %v56, 4294901760
    %v1322 = vsub.f32 %v56, %v1321
    %v1323 = vand.u32 %v1322, 4294901760
    %1324 = vmatmul.mubr.f32.gmra.mrb[0].mxu0 %v1323
    %v1325 = vpop.f32.mrb[0].mxu0
    %v1326 = vadd.f32 %v992, %v1325
    %v1327 = vpop.f32.mrb[0].mxu0
    %1328 = vmatprep.mubr.f32.mxu0 0.0
    %v1329 = vand.u32 %v59, 4294901760
    %v1330 = vsub.f32 %v59, %v1329
    %v1331 = vand.u32 %v1330, 4294901760
    %1332 = vmatmul.mubr.f32.gmra.mrb[0].mxu0 %v1331
    %v1333 = vpop.f32.mrb[0].mxu0
    %v1334 = vadd.f32 %v999, %v1333
    %v1335 = vpop.f32.mrb[0].mxu0
    %1336 = vmatprep.mubr.f32.mxu0 0.0
    %v1337 = vand.u32 %v62, 4294901760
    %v1338 = vsub.f32 %v62, %v1337
    %v1339 = vand.u32 %v1338, 4294901760
    %1340 = vmatmul.mubr.f32.gmra.mrb[0].mxu0 %v1339
    %v1341 = vpop.f32.mrb[0].mxu0
    %v1342 = vadd.f32 %v1006, %v1341
    %v1343 = vpop.f32.mrb[0].mxu0
    %1344 = vmatprep.mubr.f32.mxu0 0.0
    %v1345 = vand.u32 %v65, 4294901760
    %v1346 = vsub.f32 %v65, %v1345
    %v1347 = vand.u32 %v1346, 4294901760
    %1348 = vmatmul.mubr.f32.gmra.mrb[0].mxu0 %v1347
    %v1349 = vpop.f32.mrb[0].mxu0
    %v1350 = vadd.f32 %v1013, %v1349
    %v1351 = vpop.f32.mrb[0].mxu0
    %1352 = vmatprep.mubr.f32.mxu0 0.0
    %v1353 = vand.u32 %v68, 4294901760
    %v1354 = vsub.f32 %v68, %v1353
    %v1355 = vand.u32 %v1354, 4294901760
    %1356 = vmatmul.mubr.f32.gmra.mrb[0].mxu0 %v1355
    %v1357 = vpop.f32.mrb[0].mxu0
    %v1358 = vadd.f32 %v1020, %v1357
    %v1359 = vpop.f32.mrb[0].mxu0
    %1360 = vmatprep.mubr.f32.mxu0 0.0
    %v1361 = vand.u32 %v71, 4294901760
    %v1362 = vsub.f32 %v71, %v1361
    %v1363 = vand.u32 %v1362, 4294901760
    %1364 = vmatmul.mubr.f32.gmra.mrb[0].mxu0 %v1363
    %v1365 = vpop.f32.mrb[0].mxu0
    %v1366 = vadd.f32 %v1027, %v1365
    %v1367 = vpop.f32.mrb[0].mxu0
    %1368 = vmatprep.mubr.f32.mxu0 0.0
    %v1369 = vand.u32 %v74, 4294901760
    %v1370 = vsub.f32 %v74, %v1369
    %v1371 = vand.u32 %v1370, 4294901760
    %1372 = vmatmul.mubr.f32.gmra.mrb[0].mxu0 %v1371
    %v1373 = vpop.f32.mrb[0].mxu0
    %v1374 = vadd.f32 %v1034, %v1373
    %v1375 = vpop.f32.mrb[0].mxu0
    %1376 = vmatprep.mubr.f32.mxu0 0.0
    %v1377 = vand.u32 %v77, 4294901760
    %v1378 = vsub.f32 %v77, %v1377
    %v1379 = vand.u32 %v1378, 4294901760
    %1380 = vmatmul.mubr.f32.gmra.mrb[0].mxu0 %v1379
    %v1381 = vpop.f32.mrb[0].mxu0
    %v1382 = vadd.f32 %v1041, %v1381
    %v1383 = vpop.f32.mrb[0].mxu0
    %1384 = vmatprep.mubr.f32.mxu0 0.0
    %v1385 = vand.u32 %v80, 4294901760
    %v1386 = vsub.f32 %v80, %v1385
    %v1387 = vand.u32 %v1386, 4294901760
    %1388 = vmatmul.mubr.f32.gmra.mrb[0].mxu0 %v1387
    %v1389 = vpop.f32.mrb[0].mxu0
    %v1390 = vadd.f32 %v1048, %v1389
    %v1391 = vpop.f32.mrb[0].mxu0
    %1392 = vmatprep.mubr.f32.mxu0 0.0
    %v1393 = vand.u32 %v83, 4294901760
    %v1394 = vsub.f32 %v83, %v1393
    %v1395 = vand.u32 %v1394, 4294901760
    %1396 = vmatmul.mubr.f32.gmra.mrb[0].mxu0 %v1395
    %v1397 = vpop.f32.mrb[0].mxu0
    %v1398 = vadd.f32 %v1055, %v1397
    %v1399 = vpop.f32.mrb[0].mxu0
    %1400 = vmatprep.mubr.f32.mxu0 0.0
    %v1401 = vand.u32 %v86, 4294901760
    %v1402 = vsub.f32 %v86, %v1401
    %v1403 = vand.u32 %v1402, 4294901760
    %1404 = vmatmul.mubr.f32.gmra.mrb[0].mxu0 %v1403
    %v1405 = vpop.f32.mrb[0].mxu0
    %v1406 = vadd.f32 %v1062, %v1405
    %v1407 = vpop.f32.mrb[0].mxu0
    %1408 = vmatprep.mubr.f32.mxu0 0.0
    %v1409 = vand.u32 %v89, 4294901760
    %v1410 = vsub.f32 %v89, %v1409
    %v1411 = vand.u32 %v1410, 4294901760
    %1412 = vmatmul.mubr.f32.gmra.mrb[0].mxu0 %v1411
    %v1413 = vpop.f32.mrb[0].mxu0
    %v1414 = vadd.f32 %v1069, %v1413
    %v1415 = vpop.f32.mrb[0].mxu0
    %1416 = vmatprep.mubr.f32.mxu0 0.0
    %v1417 = vand.u32 %v92, 4294901760
    %v1418 = vsub.f32 %v92, %v1417
    %v1419 = vand.u32 %v1418, 4294901760
    %1420 = vmatmul.mubr.f32.gmra.mrb[0].mxu0 %v1419
    %v1421 = vpop.f32.mrb[0].mxu0
    %v1422 = vadd.f32 %v1076, %v1421
    %v1423 = vpop.f32.mrb[0].mxu0
    %1424 = vmatprep.mubr.f32.mxu0 0.0
    %v1425 = vand.u32 %v95, 4294901760
    %v1426 = vsub.f32 %v95, %v1425
    %v1427 = vand.u32 %v1426, 4294901760
    %1428 = vmatmul.mubr.f32.gmra.mrb[0].mxu0 %v1427
    %v1429 = vpop.f32.mrb[0].mxu0
    %v1430 = vadd.f32 %v1083, %v1429
    %v1431 = vpop.f32.mrb[0].mxu0
    %1432 = vmatprep.mubr.f32.mxu0 0.0
    %v1433 = vand.u32 %v98, 4294901760
    %v1434 = vsub.f32 %v98, %v1433
    %v1435 = vand.u32 %v1434, 4294901760
    %1436 = vmatmul.mubr.f32.gmra.mrb[0].mxu0 %v1435
    %v1437 = vpop.f32.mrb[0].mxu0
    %v1438 = vadd.f32 %v1090, %v1437
    %v1439 = vpop.f32.mrb[0].mxu0
    %1440 = vmatprep.mubr.f32.mxu0 0.0
    %v1441 = vand.u32 %v101, 4294901760
    %v1442 = vsub.f32 %v101, %v1441
    %v1443 = vand.u32 %v1442, 4294901760
    %1444 = vmatmul.mubr.f32.gmra.mrb[0].mxu0 %v1443
    %v1445 = vpop.f32.mrb[0].mxu0
    %v1446 = vadd.f32 %v1097, %v1445
    %v1447 = vpop.f32.mrb[0].mxu0
    %1448 = vmatprep.mubr.f32.mxu0 0.0
    %v1449 = vand.u32 %v104, 4294901760
    %v1450 = vsub.f32 %v104, %v1449
    %v1451 = vand.u32 %v1450, 4294901760
    %1452 = vmatmul.mubr.f32.gmra.mrb[0].mxu0 %v1451
    %v1453 = vpop.f32.mrb[0].mxu0
    %v1454 = vadd.f32 %v1104, %v1453
    %v1455 = vpop.f32.mrb[0].mxu0
    %1456 = vmatprep.mubr.f32.mxu0 0.0
    %v1457 = vand.u32 %v107, 4294901760
    %v1458 = vsub.f32 %v107, %v1457
    %v1459 = vand.u32 %v1458, 4294901760
    %1460 = vmatmul.mubr.f32.gmra.mrb[0].mxu0 %v1459
    %v1461 = vpop.f32.mrb[0].mxu0
    %v1462 = vadd.f32 %v1111, %v1461
    %v1463 = vpop.f32.mrb[0].mxu0
    %1464 = vmatprep.mubr.f32.mxu0 0.0
    %v1465 = vand.u32 %v110, 4294901760
    %v1466 = vsub.f32 %v110, %v1465
    %v1467 = vand.u32 %v1466, 4294901760
    %1468 = vmatmul.mubr.f32.gmra.mrb[0].mxu0 %v1467
    %v1469 = vpop.f32.mrb[0].mxu0
    %v1470 = vadd.f32 %v1118, %v1469
    %v1471 = vpop.f32.mrb[0].mxu0
    %1472 = vmatprep.mubr.f32.mxu0 0.0
    %v1473 = vand.u32 %v113, 4294901760
    %v1474 = vsub.f32 %v113, %v1473
    %v1475 = vand.u32 %v1474, 4294901760
    %1476 = vmatmul.mubr.f32.gmra.mrb[0].mxu0 %v1475
    %v1477 = vpop.f32.mrb[0].mxu0
    %v1478 = vadd.f32 %v1125, %v1477
    %v1479 = vpop.f32.mrb[0].mxu0
    %1480 = vmatprep.mubr.f32.mxu0 0.0
    %v1481 = vand.u32 %v116, 4294901760
    %v1482 = vsub.f32 %v116, %v1481
    %v1483 = vand.u32 %v1482, 4294901760
    %1484 = vmatmul.mubr.f32.gmra.mrb[0].mxu0 %v1483
    %v1485 = vpop.f32.mrb[0].mxu0
    %v1486 = vadd.f32 %v1132, %v1485
    %v1487 = vpop.f32.mrb[0].mxu0
    %1488 = vmatprep.mubr.f32.mxu0 0.0
    %v1489 = vand.u32 %v119, 4294901760
    %v1490 = vsub.f32 %v119, %v1489
    %v1491 = vand.u32 %v1490, 4294901760
    %1492 = vmatmul.mubr.f32.gmra.mrb[0].mxu0 %v1491
    %v1493 = vpop.f32.mrb[0].mxu0
    %v1494 = vadd.f32 %v1139, %v1493
    %v1495 = vpop.f32.mrb[0].mxu0
    %1496 = vmatprep.mubr.f32.mxu0 0.0
    %v1497 = vand.u32 %v122, 4294901760
    %v1498 = vsub.f32 %v122, %v1497
    %v1499 = vand.u32 %v1498, 4294901760
    %1500 = vmatmul.mubr.f32.gmra.mrb[0].mxu0 %v1499
    %v1501 = vpop.f32.mrb[0].mxu0
    %v1502 = vadd.f32 %v1146, %v1501
    %v1503 = vpop.f32.mrb[0].mxu0
    %1504 = vmatprep.mubr.f32.mxu0 0.0
    %v1505 = vand.u32 %v125, 4294901760
    %v1506 = vsub.f32 %v125, %v1505
    %v1507 = vand.u32 %v1506, 4294901760
    %1508 = vmatmul.mubr.f32.gmra.mrb[0].mxu0 %v1507
    %v1509 = vpop.f32.mrb[0].mxu0
    %v1510 = vadd.f32 %v1153, %v1509
    %v1511 = vpop.f32.mrb[0].mxu0
    %1512 = vmatprep.mubr.f32.mxu0 0.0
    %v1513 = vand.u32 %v128, 4294901760
    %v1514 = vsub.f32 %v128, %v1513
    %v1515 = vand.u32 %v1514, 4294901760
    %1516 = vmatmul.mubr.f32.gmra.mrb[0].mxu0 %v1515
    %v1517 = vpop.f32.mrb[0].mxu0
    %v1518 = vadd.f32 %v1160, %v1517
    %v1519 = vpop.f32.mrb[0].mxu0
    %1520 = vmatprep.mubr.f32.mxu0 0.0
    %v1521 = vand.u32 %v131, 4294901760
    %v1522 = vsub.f32 %v131, %v1521
    %v1523 = vand.u32 %v1522, 4294901760
    %1524 = vmatmul.mubr.f32.gmra.mrb[0].mxu0 %v1523
    %v1525 = vpop.f32.mrb[0].mxu0
    %v1526 = vadd.f32 %v1167, %v1525
    %v1527 = vpop.f32.mrb[0].mxu0
    %1528 = vmatprep.mubr.f32.mxu0 0.0
    %v1529 = vand.u32 %v134, 4294901760
    %v1530 = vsub.f32 %v134, %v1529
    %v1531 = vand.u32 %v1530, 4294901760
    %1532 = vmatmul.mubr.f32.gmra.mrb[0].mxu0 %v1531
    %v1533 = vpop.f32.mrb[0].mxu0
    %v1534 = vadd.f32 %v1174, %v1533
    %v1535 = vpop.f32.mrb[0].mxu0
    %1536 = vmatprep.mubr.f32.mxu0 0.0
    %v1537 = vand.u32 %v137, 4294901760
    %v1538 = vsub.f32 %v137, %v1537
    %v1539 = vand.u32 %v1538, 4294901760
    %1540 = vmatmul.mubr.f32.gmra.mrb[0].mxu0 %v1539
    %v1541 = vpop.f32.mrb[0].mxu0
    %v1542 = vadd.f32 %v1181, %v1541
    %v1543 = vpop.f32.mrb[0].mxu0
    %1544 = vmatprep.mubr.f32.mxu0 0.0
    %v1545 = vand.u32 %v140, 4294901760
    %v1546 = vsub.f32 %v140, %v1545
    %v1547 = vand.u32 %v1546, 4294901760
    %1548 = vmatmul.mubr.f32.gmra.mrb[0].mxu0 %v1547
    %v1549 = vpop.f32.mrb[0].mxu0
    %v1550 = vadd.f32 %v1188, %v1549
    %v1551 = vpop.f32.mrb[0].mxu0
    %1552 = vmatprep.mubr.f32.mxu0 0.0
    %v1553 = vand.u32 %v143, 4294901760
    %v1554 = vsub.f32 %v143, %v1553
    %v1555 = vand.u32 %v1554, 4294901760
    %1556 = vmatmul.mubr.f32.gmra.mrb[0].mxu0 %v1555
    %v1557 = vpop.f32.mrb[0].mxu0
    %v1558 = vadd.f32 %v1195, %v1557
    %v1559 = vpop.f32.mrb[0].mxu0
    %1560 = vmatprep.mubr.f32.mxu0 0.0
    %v1561 = vand.u32 %v146, 4294901760
    %v1562 = vsub.f32 %v146, %v1561
    %v1563 = vand.u32 %v1562, 4294901760
    %1564 = vmatmul.mubr.f32.gmra.mrb[0].mxu0 %v1563
    %v1565 = vpop.f32.mrb[0].mxu0
    %v1566 = vadd.f32 %v1202, %v1565
    %v1567 = vpop.f32.mrb[0].mxu0
    %1568 = vmatprep.mubr.f32.mxu0 0.0
    %v1569 = vand.u32 %v149, 4294901760
    %v1570 = vsub.f32 %v149, %v1569
    %v1571 = vand.u32 %v1570, 4294901760
    %1572 = vmatmul.mubr.f32.gmra.mrb[0].mxu0 %v1571
    %v1573 = vpop.f32.mrb[0].mxu0
    %v1574 = vadd.f32 %v1209, %v1573
    %v1575 = vpop.f32.mrb[0].mxu0
    %1576 = vmatprep.mubr.f32.mxu0 0.0
    %v1577 = vand.u32 %v152, 4294901760
    %v1578 = vsub.f32 %v152, %v1577
    %v1579 = vand.u32 %v1578, 4294901760
    %1580 = vmatmul.mubr.f32.gmra.mrb[0].mxu0 %v1579
    %v1581 = vpop.f32.mrb[0].mxu0
    %v1582 = vadd.f32 %v1216, %v1581
    %v1583 = vpop.f32.mrb[0].mxu0
    %1584 = vmatprep.mubr.f32.mxu0 0.0
    %v1585 = vand.u32 %v155, 4294901760
    %v1586 = vsub.f32 %v155, %v1585
    %v1587 = vand.u32 %v1586, 4294901760
    %1588 = vmatmul.mubr.f32.gmra.mrb[0].mxu0 %v1587
    %v1589 = vpop.f32.mrb[0].mxu0
    %v1590 = vadd.f32 %v1223, %v1589
    %v1591 = vpop.f32.mrb[0].mxu0
    %1592 = vmatprep.mubr.f32.mxu0 0.0
    %v1593 = vand.u32 %v158, 4294901760
    %v1594 = vsub.f32 %v158, %v1593
    %v1595 = vand.u32 %v1594, 4294901760
    %1596 = vmatmul.mubr.f32.gmra.mrb[0].mxu0 %v1595
    %v1597 = vpop.f32.mrb[0].mxu0
    %v1598 = vadd.f32 %v1230, %v1597
    %v1599 = vpop.f32.mrb[0].mxu0
    %1600 = vmatprep.mubr.f32.mxu0 0.0
    %v1601 = vand.u32 %v161, 4294901760
    %v1602 = vsub.f32 %v161, %v1601
    %v1603 = vand.u32 %v1602, 4294901760
    %1604 = vmatmul.mubr.f32.gmra.mrb[0].mxu0 %v1603
    %v1605 = vpop.f32.mrb[0].mxu0
    %v1606 = vadd.f32 %v1237, %v1605
    %v1607 = vpop.f32.mrb[0].mxu0
    %1608 = vmatprep.mubr.f32.mxu0 0.0
    %v1609 = vand.u32 %v164, 4294901760
    %v1610 = vsub.f32 %v164, %v1609
    %v1611 = vand.u32 %v1610, 4294901760
    %1612 = vmatmul.mubr.f32.gmra.mrb[0].mxu0 %v1611
    %v1613 = vpop.f32.mrb[0].mxu0
    %v1614 = vadd.f32 %v1244, %v1613
    %v1615 = vpop.f32.mrb[0].mxu0
    %1616 = vdwg.mxu0
    %1617 = vmatprep.subr.mxu0 0.0
    %v1618 = vand.u32 %v168, 4294901760
    %v1619 = vsub.f32 %v168, %v1618
    %v1620 = vand.u32 %v1619, 4294901760
    %1621 = vmatpush1.msra.mxu0 %v1620
    %1622 = vmatprep.subr.mxu0 0.0
    %1623 = vmatpush1.msra.mxu0 0.0
    %1624 = vmatprep.subr.mxu0 0.0
    %1625 = vmatpush1.msra.mxu0 0.0
    %1626 = vmatprep.subr.mxu0 0.0
    %1627 = vmatpush1.msra.mxu0 0.0
    %1628 = vmatprep.subr.mxu0 0.0
    %1629 = vmatpush1.msra.mxu0 0.0
    %1630 = vmatprep.subr.mxu0 0.0
    %1631 = vmatpush1.msra.mxu0 0.0
    %1632 = vmatprep.subr.mxu0 0.0
    %1633 = vmatpush1.msra.mxu0 0.0
    %1634 = vmatprep.subr.mxu0 0.0
    %1635 = vmatpush1.msra.mxu0 0.0
    %1636 = vmatprep.subr.mxu0 0.0
    %1637 = vmatpush1.msra.mxu0 0.0
    %1638 = vmatprep.subr.mxu0 0.0
    %1639 = vmatpush1.msra.mxu0 0.0
    %1640 = vmatprep.subr.mxu0 0.0
    %1641 = vmatpush1.msra.mxu0 0.0
    %1642 = vmatprep.subr.mxu0 0.0
    %1643 = vmatpush1.msra.mxu0 0.0
    %1644 = vmatprep.subr.mxu0 0.0
    %1645 = vmatpush1.msra.mxu0 0.0
    %1646 = vmatprep.subr.mxu0 0.0
    %1647 = vmatpush1.msra.mxu0 0.0
    %1648 = vmatprep.subr.mxu0 0.0
    %1649 = vmatpush1.msra.mxu0 0.0
    %1650 = vmatprep.subr.mxu0 0.0
    %1651 = vmatpush1.msra.mxu0 0.0
    %1652 = vmatprep.subr.mxu0 0.0
    %1653 = vmatpush1.msra.mxu0 0.0
    %1654 = vmatprep.subr.mxu0 0.0
    %1655 = vmatpush1.msra.mxu0 0.0
    %1656 = vmatprep.subr.mxu0 0.0
    %1657 = vmatpush1.msra.mxu0 0.0
    %1658 = vmatprep.subr.mxu0 0.0
    %1659 = vmatpush1.msra.mxu0 0.0
    %1660 = vmatprep.subr.mxu0 0.0
    %1661 = vmatpush1.msra.mxu0 0.0
    %1662 = vmatprep.subr.mxu0 0.0
    %1663 = vmatpush1.msra.mxu0 0.0
    %1664 = vmatprep.subr.mxu0 0.0
    %1665 = vmatpush1.msra.mxu0 0.0
    %1666 = vmatprep.subr.mxu0 0.0
    %1667 = vmatpush1.msra.mxu0 0.0
    %1668 = vmatprep.subr.mxu0 0.0
    %1669 = vmatpush1.msra.mxu0 0.0
    %1670 = vmatprep.subr.mxu0 0.0
    %1671 = vmatpush1.msra.mxu0 0.0
    %1672 = vmatprep.subr.mxu0 0.0
    %1673 = vmatpush1.msra.mxu0 0.0
    %1674 = vmatprep.subr.mxu0 0.0
    %1675 = vmatpush1.msra.mxu0 0.0
    %1676 = vmatprep.subr.mxu0 0.0
    %1677 = vmatpush1.msra.mxu0 0.0
    %1678 = vmatprep.subr.mxu0 0.0
    %1679 = vmatpush1.msra.mxu0 0.0
    %1680 = vmatprep.subr.mxu0 0.0
    %1681 = vmatpush1.msra.mxu0 0.0
    %1682 = vmatprep.subr.mxu0 0.0
    %1683 = vmatpush1.msra.mxu0 0.0
    %1684 = vmatprep.mubr.f32.mxu0 0.0
    %v1685 = vand.u32 %v53, 4294901760
    %1686 = vmatmul.mubr.f32.gmra.mrb[0].mxu0 %v1685
    %v1687 = vpop.f32.mrb[0].mxu0
    %v1688 = vadd.f32 %v1318, %v1687
    %v1689 = vpop.f32.mrb[0].mxu0
    %1690 = vmatprep.mubr.f32.mxu0 0.0
    %v1691 = vand.u32 %v56, 4294901760
    %1692 = vmatmul.mubr.f32.gmra.mrb[0].mxu0 %v1691
    %v1693 = vpop.f32.mrb[0].mxu0
    %v1694 = vadd.f32 %v1326, %v1693
    %v1695 = vpop.f32.mrb[0].mxu0
    %1696 = vmatprep.mubr.f32.mxu0 0.0
    %v1697 = vand.u32 %v59, 4294901760
    %1698 = vmatmul.mubr.f32.gmra.mrb[0].mxu0 %v1697
    %v1699 = vpop.f32.mrb[0].mxu0
    %v1700 = vadd.f32 %v1334, %v1699
    %v1701 = vpop.f32.mrb[0].mxu0
    %1702 = vmatprep.mubr.f32.mxu0 0.0
    %v1703 = vand.u32 %v62, 4294901760
    %1704 = vmatmul.mubr.f32.gmra.mrb[0].mxu0 %v1703
    %v1705 = vpop.f32.mrb[0].mxu0
    %v1706 = vadd.f32 %v1342, %v1705
    %v1707 = vpop.f32.mrb[0].mxu0
    %1708 = vmatprep.mubr.f32.mxu0 0.0
    %v1709 = vand.u32 %v65, 4294901760
    %1710 = vmatmul.mubr.f32.gmra.mrb[0].mxu0 %v1709
    %v1711 = vpop.f32.mrb[0].mxu0
    %v1712 = vadd.f32 %v1350, %v1711
    %v1713 = vpop.f32.mrb[0].mxu0
    %1714 = vmatprep.mubr.f32.mxu0 0.0
    %v1715 = vand.u32 %v68, 4294901760
    %1716 = vmatmul.mubr.f32.gmra.mrb[0].mxu0 %v1715
    %v1717 = vpop.f32.mrb[0].mxu0
    %v1718 = vadd.f32 %v1358, %v1717
    %v1719 = vpop.f32.mrb[0].mxu0
    %1720 = vmatprep.mubr.f32.mxu0 0.0
    %v1721 = vand.u32 %v71, 4294901760
    %1722 = vmatmul.mubr.f32.gmra.mrb[0].mxu0 %v1721
    %v1723 = vpop.f32.mrb[0].mxu0
    %v1724 = vadd.f32 %v1366, %v1723
    %v1725 = vpop.f32.mrb[0].mxu0
    %1726 = vmatprep.mubr.f32.mxu0 0.0
    %v1727 = vand.u32 %v74, 4294901760
    %1728 = vmatmul.mubr.f32.gmra.mrb[0].mxu0 %v1727
    %v1729 = vpop.f32.mrb[0].mxu0
    %v1730 = vadd.f32 %v1374, %v1729
    %v1731 = vpop.f32.mrb[0].mxu0
    %1732 = vmatprep.mubr.f32.mxu0 0.0
    %v1733 = vand.u32 %v77, 4294901760
    %1734 = vmatmul.mubr.f32.gmra.mrb[0].mxu0 %v1733
    %v1735 = vpop.f32.mrb[0].mxu0
    %v1736 = vadd.f32 %v1382, %v1735
    %v1737 = vpop.f32.mrb[0].mxu0
    %1738 = vmatprep.mubr.f32.mxu0 0.0
    %v1739 = vand.u32 %v80, 4294901760
    %1740 = vmatmul.mubr.f32.gmra.mrb[0].mxu0 %v1739
    %v1741 = vpop.f32.mrb[0].mxu0
    %v1742 = vadd.f32 %v1390, %v1741
    %v1743 = vpop.f32.mrb[0].mxu0
    %1744 = vmatprep.mubr.f32.mxu0 0.0
    %v1745 = vand.u32 %v83, 4294901760
    %1746 = vmatmul.mubr.f32.gmra.mrb[0].mxu0 %v1745
    %v1747 = vpop.f32.mrb[0].mxu0
    %v1748 = vadd.f32 %v1398, %v1747
    %v1749 = vpop.f32.mrb[0].mxu0
    %1750 = vmatprep.mubr.f32.mxu0 0.0
    %v1751 = vand.u32 %v86, 4294901760
    %1752 = vmatmul.mubr.f32.gmra.mrb[0].mxu0 %v1751
    %v1753 = vpop.f32.mrb[0].mxu0
    %v1754 = vadd.f32 %v1406, %v1753
    %v1755 = vpop.f32.mrb[0].mxu0
    %1756 = vmatprep.mubr.f32.mxu0 0.0
    %v1757 = vand.u32 %v89, 4294901760
    %1758 = vmatmul.mubr.f32.gmra.mrb[0].mxu0 %v1757
    %v1759 = vpop.f32.mrb[0].mxu0
    %v1760 = vadd.f32 %v1414, %v1759
    %v1761 = vpop.f32.mrb[0].mxu0
    %1762 = vmatprep.mubr.f32.mxu0 0.0
    %v1763 = vand.u32 %v92, 4294901760
    %1764 = vmatmul.mubr.f32.gmra.mrb[0].mxu0 %v1763
    %v1765 = vpop.f32.mrb[0].mxu0
    %v1766 = vadd.f32 %v1422, %v1765
    %v1767 = vpop.f32.mrb[0].mxu0
    %1768 = vmatprep.mubr.f32.mxu0 0.0
    %v1769 = vand.u32 %v95, 4294901760
    %1770 = vmatmul.mubr.f32.gmra.mrb[0].mxu0 %v1769
    %v1771 = vpop.f32.mrb[0].mxu0
    %v1772 = vadd.f32 %v1430, %v1771
    %v1773 = vpop.f32.mrb[0].mxu0
    %1774 = vmatprep.mubr.f32.mxu0 0.0
    %v1775 = vand.u32 %v98, 4294901760
    %1776 = vmatmul.mubr.f32.gmra.mrb[0].mxu0 %v1775
    %v1777 = vpop.f32.mrb[0].mxu0
    %v1778 = vadd.f32 %v1438, %v1777
    %v1779 = vpop.f32.mrb[0].mxu0
    %1780 = vmatprep.mubr.f32.mxu0 0.0
    %v1781 = vand.u32 %v101, 4294901760
    %1782 = vmatmul.mubr.f32.gmra.mrb[0].mxu0 %v1781
    %v1783 = vpop.f32.mrb[0].mxu0
    %v1784 = vadd.f32 %v1446, %v1783
    %v1785 = vpop.f32.mrb[0].mxu0
    %1786 = vmatprep.mubr.f32.mxu0 0.0
    %v1787 = vand.u32 %v104, 4294901760
    %1788 = vmatmul.mubr.f32.gmra.mrb[0].mxu0 %v1787
    %v1789 = vpop.f32.mrb[0].mxu0
    %v1790 = vadd.f32 %v1454, %v1789
    %v1791 = vpop.f32.mrb[0].mxu0
    %1792 = vmatprep.mubr.f32.mxu0 0.0
    %v1793 = vand.u32 %v107, 4294901760
    %1794 = vmatmul.mubr.f32.gmra.mrb[0].mxu0 %v1793
    %v1795 = vpop.f32.mrb[0].mxu0
    %v1796 = vadd.f32 %v1462, %v1795
    %v1797 = vpop.f32.mrb[0].mxu0
    %1798 = vmatprep.mubr.f32.mxu0 0.0
    %v1799 = vand.u32 %v110, 4294901760
    %1800 = vmatmul.mubr.f32.gmra.mrb[0].mxu0 %v1799
    %v1801 = vpop.f32.mrb[0].mxu0
    %v1802 = vadd.f32 %v1470, %v1801
    %v1803 = vpop.f32.mrb[0].mxu0
    %1804 = vmatprep.mubr.f32.mxu0 0.0
    %v1805 = vand.u32 %v113, 4294901760
    %1806 = vmatmul.mubr.f32.gmra.mrb[0].mxu0 %v1805
    %v1807 = vpop.f32.mrb[0].mxu0
    %v1808 = vadd.f32 %v1478, %v1807
    %v1809 = vpop.f32.mrb[0].mxu0
    %1810 = vmatprep.mubr.f32.mxu0 0.0
    %v1811 = vand.u32 %v116, 4294901760
    %1812 = vmatmul.mubr.f32.gmra.mrb[0].mxu0 %v1811
    %v1813 = vpop.f32.mrb[0].mxu0
    %v1814 = vadd.f32 %v1486, %v1813
    %v1815 = vpop.f32.mrb[0].mxu0
    %1816 = vmatprep.mubr.f32.mxu0 0.0
    %v1817 = vand.u32 %v119, 4294901760
    %1818 = vmatmul.mubr.f32.gmra.mrb[0].mxu0 %v1817
    %v1819 = vpop.f32.mrb[0].mxu0
    %v1820 = vadd.f32 %v1494, %v1819
    %v1821 = vpop.f32.mrb[0].mxu0
    %1822 = vmatprep.mubr.f32.mxu0 0.0
    %v1823 = vand.u32 %v122, 4294901760
    %1824 = vmatmul.mubr.f32.gmra.mrb[0].mxu0 %v1823
    %v1825 = vpop.f32.mrb[0].mxu0
    %v1826 = vadd.f32 %v1502, %v1825
    %v1827 = vpop.f32.mrb[0].mxu0
    %1828 = vmatprep.mubr.f32.mxu0 0.0
    %v1829 = vand.u32 %v125, 4294901760
    %1830 = vmatmul.mubr.f32.gmra.mrb[0].mxu0 %v1829
    %v1831 = vpop.f32.mrb[0].mxu0
    %v1832 = vadd.f32 %v1510, %v1831
    %v1833 = vpop.f32.mrb[0].mxu0
    %1834 = vmatprep.mubr.f32.mxu0 0.0
    %v1835 = vand.u32 %v128, 4294901760
    %1836 = vmatmul.mubr.f32.gmra.mrb[0].mxu0 %v1835
    %v1837 = vpop.f32.mrb[0].mxu0
    %v1838 = vadd.f32 %v1518, %v1837
    %v1839 = vpop.f32.mrb[0].mxu0
    %1840 = vmatprep.mubr.f32.mxu0 0.0
    %v1841 = vand.u32 %v131, 4294901760
    %1842 = vmatmul.mubr.f32.gmra.mrb[0].mxu0 %v1841
    %v1843 = vpop.f32.mrb[0].mxu0
    %v1844 = vadd.f32 %v1526, %v1843
    %v1845 = vpop.f32.mrb[0].mxu0
    %1846 = vmatprep.mubr.f32.mxu0 0.0
    %v1847 = vand.u32 %v134, 4294901760
    %1848 = vmatmul.mubr.f32.gmra.mrb[0].mxu0 %v1847
    %v1849 = vpop.f32.mrb[0].mxu0
    %v1850 = vadd.f32 %v1534, %v1849
    %v1851 = vpop.f32.mrb[0].mxu0
    %1852 = vmatprep.mubr.f32.mxu0 0.0
    %v1853 = vand.u32 %v137, 4294901760
    %1854 = vmatmul.mubr.f32.gmra.mrb[0].mxu0 %v1853
    %v1855 = vpop.f32.mrb[0].mxu0
    %v1856 = vadd.f32 %v1542, %v1855
    %v1857 = vpop.f32.mrb[0].mxu0
    %1858 = vmatprep.mubr.f32.mxu0 0.0
    %v1859 = vand.u32 %v140, 4294901760
    %1860 = vmatmul.mubr.f32.gmra.mrb[0].mxu0 %v1859
    %v1861 = vpop.f32.mrb[0].mxu0
    %v1862 = vadd.f32 %v1550, %v1861
    %v1863 = vpop.f32.mrb[0].mxu0
    %1864 = vmatprep.mubr.f32.mxu0 0.0
    %v1865 = vand.u32 %v143, 4294901760
    %1866 = vmatmul.mubr.f32.gmra.mrb[0].mxu0 %v1865
    %v1867 = vpop.f32.mrb[0].mxu0
    %v1868 = vadd.f32 %v1558, %v1867
    %v1869 = vpop.f32.mrb[0].mxu0
    %1870 = vmatprep.mubr.f32.mxu0 0.0
    %v1871 = vand.u32 %v146, 4294901760
    %1872 = vmatmul.mubr.f32.gmra.mrb[0].mxu0 %v1871
    %v1873 = vpop.f32.mrb[0].mxu0
    %v1874 = vadd.f32 %v1566, %v1873
    %v1875 = vpop.f32.mrb[0].mxu0
    %1876 = vmatprep.mubr.f32.mxu0 0.0
    %v1877 = vand.u32 %v149, 4294901760
    %1878 = vmatmul.mubr.f32.gmra.mrb[0].mxu0 %v1877
    %v1879 = vpop.f32.mrb[0].mxu0
    %v1880 = vadd.f32 %v1574, %v1879
    %v1881 = vpop.f32.mrb[0].mxu0
    %1882 = vmatprep.mubr.f32.mxu0 0.0
    %v1883 = vand.u32 %v152, 4294901760
    %1884 = vmatmul.mubr.f32.gmra.mrb[0].mxu0 %v1883
    %v1885 = vpop.f32.mrb[0].mxu0
    %v1886 = vadd.f32 %v1582, %v1885
    %v1887 = vpop.f32.mrb[0].mxu0
    %1888 = vmatprep.mubr.f32.mxu0 0.0
    %v1889 = vand.u32 %v155, 4294901760
    %1890 = vmatmul.mubr.f32.gmra.mrb[0].mxu0 %v1889
    %v1891 = vpop.f32.mrb[0].mxu0
    %v1892 = vadd.f32 %v1590, %v1891
    %v1893 = vpop.f32.mrb[0].mxu0
    %1894 = vmatprep.mubr.f32.mxu0 0.0
    %v1895 = vand.u32 %v158, 4294901760
    %1896 = vmatmul.mubr.f32.gmra.mrb[0].mxu0 %v1895
    %v1897 = vpop.f32.mrb[0].mxu0
    %v1898 = vadd.f32 %v1598, %v1897
    %v1899 = vpop.f32.mrb[0].mxu0
    %1900 = vmatprep.mubr.f32.mxu0 0.0
    %v1901 = vand.u32 %v161, 4294901760
    %1902 = vmatmul.mubr.f32.gmra.mrb[0].mxu0 %v1901
    %v1903 = vpop.f32.mrb[0].mxu0
    %v1904 = vadd.f32 %v1606, %v1903
    %v1905 = vpop.f32.mrb[0].mxu0
    %1906 = vmatprep.mubr.f32.mxu0 0.0
    %v1907 = vand.u32 %v164, 4294901760
    %1908 = vmatmul.mubr.f32.gmra.mrb[0].mxu0 %v1907
    %v1909 = vpop.f32.mrb[0].mxu0
    %v1910 = vadd.f32 %v1614, %v1909
    %v1911 = vpop.f32.mrb[0].mxu0
    %1912 = vdwg.mxu0
    %1913 = vmatprep.subr.mxu0 0.0
    %v1914 = vand.u32 %v168, 4294901760
    %1915 = vmatpush1.msra.mxu0 %v1914
    %1916 = vmatprep.subr.mxu0 0.0
    %1917 = vmatpush1.msra.mxu0 0.0
    %1918 = vmatprep.subr.mxu0 0.0
    %1919 = vmatpush1.msra.mxu0 0.0
    %1920 = vmatprep.subr.mxu0 0.0
    %1921 = vmatpush1.msra.mxu0 0.0
    %1922 = vmatprep.subr.mxu0 0.0
    %1923 = vmatpush1.msra.mxu0 0.0
    %1924 = vmatprep.subr.mxu0 0.0
    %1925 = vmatpush1.msra.mxu0 0.0
    %1926 = vmatprep.subr.mxu0 0.0
    %1927 = vmatpush1.msra.mxu0 0.0
    %1928 = vmatprep.subr.mxu0 0.0
    %1929 = vmatpush1.msra.mxu0 0.0
    %1930 = vmatprep.subr.mxu0 0.0
    %1931 = vmatpush1.msra.mxu0 0.0
    %1932 = vmatprep.subr.mxu0 0.0
    %1933 = vmatpush1.msra.mxu0 0.0
    %1934 = vmatprep.subr.mxu0 0.0
    %1935 = vmatpush1.msra.mxu0 0.0
    %1936 = vmatprep.subr.mxu0 0.0
    %1937 = vmatpush1.msra.mxu0 0.0
    %1938 = vmatprep.subr.mxu0 0.0
    %1939 = vmatpush1.msra.mxu0 0.0
    %1940 = vmatprep.subr.mxu0 0.0
    %1941 = vmatpush1.msra.mxu0 0.0
    %1942 = vmatprep.subr.mxu0 0.0
    %1943 = vmatpush1.msra.mxu0 0.0
    %1944 = vmatprep.subr.mxu0 0.0
    %1945 = vmatpush1.msra.mxu0 0.0
    %1946 = vmatprep.subr.mxu0 0.0
    %1947 = vmatpush1.msra.mxu0 0.0
    %1948 = vmatprep.subr.mxu0 0.0
    %1949 = vmatpush1.msra.mxu0 0.0
    %1950 = vmatprep.subr.mxu0 0.0
    %1951 = vmatpush1.msra.mxu0 0.0
    %1952 = vmatprep.subr.mxu0 0.0
    %1953 = vmatpush1.msra.mxu0 0.0
    %1954 = vmatprep.subr.mxu0 0.0
    %1955 = vmatpush1.msra.mxu0 0.0
    %1956 = vmatprep.subr.mxu0 0.0
    %1957 = vmatpush1.msra.mxu0 0.0
    %1958 = vmatprep.subr.mxu0 0.0
    %1959 = vmatpush1.msra.mxu0 0.0
    %1960 = vmatprep.subr.mxu0 0.0
    %1961 = vmatpush1.msra.mxu0 0.0
    %1962 = vmatprep.subr.mxu0 0.0
    %1963 = vmatpush1.msra.mxu0 0.0
    %1964 = vmatprep.subr.mxu0 0.0
    %1965 = vmatpush1.msra.mxu0 0.0
    %1966 = vmatprep.subr.mxu0 0.0
    %1967 = vmatpush1.msra.mxu0 0.0
    %1968 = vmatprep.subr.mxu0 0.0
    %1969 = vmatpush1.msra.mxu0 0.0
    %1970 = vmatprep.subr.mxu0 0.0
    %1971 = vmatpush1.msra.mxu0 0.0
    %1972 = vmatprep.subr.mxu0 0.0
    %1973 = vmatpush1.msra.mxu0 0.0
    %1974 = vmatprep.subr.mxu0 0.0
    %1975 = vmatpush1.msra.mxu0 0.0
    %1976 = vmatprep.subr.mxu0 0.0
    %1977 = vmatpush1.msra.mxu0 0.0
    %1978 = vmatprep.mubr.f32.mxu0 0.0
    %v1979 = vand.u32 %v53, 4294901760
    %1980 = vmatmul.mubr.f32.gmra.mrb[0].mxu0 %v1979
    %v1981 = vpop.f32.mrb[0].mxu0
    %v1982 = vadd.f32 %v1688, %v1981
    %v1983 = vpop.f32.mrb[0].mxu0
    %1984 = vmatprep.mubr.f32.mxu0 0.0
    %v1985 = vand.u32 %v56, 4294901760
    %1986 = vmatmul.mubr.f32.gmra.mrb[0].mxu0 %v1985
    %v1987 = vpop.f32.mrb[0].mxu0
    %v1988 = vadd.f32 %v1694, %v1987
    %v1989 = vpop.f32.mrb[0].mxu0
    %1990 = vmatprep.mubr.f32.mxu0 0.0
    %v1991 = vand.u32 %v59, 4294901760
    %1992 = vmatmul.mubr.f32.gmra.mrb[0].mxu0 %v1991
    %v1993 = vpop.f32.mrb[0].mxu0
    %v1994 = vadd.f32 %v1700, %v1993
    %v1995 = vpop.f32.mrb[0].mxu0
    %1996 = vmatprep.mubr.f32.mxu0 0.0
    %v1997 = vand.u32 %v62, 4294901760
    %1998 = vmatmul.mubr.f32.gmra.mrb[0].mxu0 %v1997
    %v1999 = vpop.f32.mrb[0].mxu0
    %v2000 = vadd.f32 %v1706, %v1999
    %v2001 = vpop.f32.mrb[0].mxu0
    %2002 = vmatprep.mubr.f32.mxu0 0.0
    %v2003 = vand.u32 %v65, 4294901760
    %2004 = vmatmul.mubr.f32.gmra.mrb[0].mxu0 %v2003
    %v2005 = vpop.f32.mrb[0].mxu0
    %v2006 = vadd.f32 %v1712, %v2005
    %v2007 = vpop.f32.mrb[0].mxu0
    %2008 = vmatprep.mubr.f32.mxu0 0.0
    %v2009 = vand.u32 %v68, 4294901760
    %2010 = vmatmul.mubr.f32.gmra.mrb[0].mxu0 %v2009
    %v2011 = vpop.f32.mrb[0].mxu0
    %v2012 = vadd.f32 %v1718, %v2011
    %v2013 = vpop.f32.mrb[0].mxu0
    %2014 = vmatprep.mubr.f32.mxu0 0.0
    %v2015 = vand.u32 %v71, 4294901760
    %2016 = vmatmul.mubr.f32.gmra.mrb[0].mxu0 %v2015
    %v2017 = vpop.f32.mrb[0].mxu0
    %v2018 = vadd.f32 %v1724, %v2017
    %v2019 = vpop.f32.mrb[0].mxu0
    %2020 = vmatprep.mubr.f32.mxu0 0.0
    %v2021 = vand.u32 %v74, 4294901760
    %2022 = vmatmul.mubr.f32.gmra.mrb[0].mxu0 %v2021
    %v2023 = vpop.f32.mrb[0].mxu0
    %v2024 = vadd.f32 %v1730, %v2023
    %v2025 = vpop.f32.mrb[0].mxu0
    %2026 = vmatprep.mubr.f32.mxu0 0.0
    %v2027 = vand.u32 %v77, 4294901760
    %2028 = vmatmul.mubr.f32.gmra.mrb[0].mxu0 %v2027
    %v2029 = vpop.f32.mrb[0].mxu0
    %v2030 = vadd.f32 %v1736, %v2029
    %v2031 = vpop.f32.mrb[0].mxu0
    %2032 = vmatprep.mubr.f32.mxu0 0.0
    %v2033 = vand.u32 %v80, 4294901760
    %2034 = vmatmul.mubr.f32.gmra.mrb[0].mxu0 %v2033
    %v2035 = vpop.f32.mrb[0].mxu0
    %v2036 = vadd.f32 %v1742, %v2035
    %v2037 = vpop.f32.mrb[0].mxu0
    %2038 = vmatprep.mubr.f32.mxu0 0.0
    %v2039 = vand.u32 %v83, 4294901760
    %2040 = vmatmul.mubr.f32.gmra.mrb[0].mxu0 %v2039
    %v2041 = vpop.f32.mrb[0].mxu0
    %v2042 = vadd.f32 %v1748, %v2041
    %v2043 = vpop.f32.mrb[0].mxu0
    %2044 = vmatprep.mubr.f32.mxu0 0.0
    %v2045 = vand.u32 %v86, 4294901760
    %2046 = vmatmul.mubr.f32.gmra.mrb[0].mxu0 %v2045
    %v2047 = vpop.f32.mrb[0].mxu0
    %v2048 = vadd.f32 %v1754, %v2047
    %v2049 = vpop.f32.mrb[0].mxu0
    %2050 = vmatprep.mubr.f32.mxu0 0.0
    %v2051 = vand.u32 %v89, 4294901760
    %2052 = vmatmul.mubr.f32.gmra.mrb[0].mxu0 %v2051
    %v2053 = vpop.f32.mrb[0].mxu0
    %v2054 = vadd.f32 %v1760, %v2053
    %v2055 = vpop.f32.mrb[0].mxu0
    %2056 = vmatprep.mubr.f32.mxu0 0.0
    %v2057 = vand.u32 %v92, 4294901760
    %2058 = vmatmul.mubr.f32.gmra.mrb[0].mxu0 %v2057
    %v2059 = vpop.f32.mrb[0].mxu0
    %v2060 = vadd.f32 %v1766, %v2059
    %v2061 = vpop.f32.mrb[0].mxu0
    %2062 = vmatprep.mubr.f32.mxu0 0.0
    %v2063 = vand.u32 %v95, 4294901760
    %2064 = vmatmul.mubr.f32.gmra.mrb[0].mxu0 %v2063
    %v2065 = vpop.f32.mrb[0].mxu0
    %v2066 = vadd.f32 %v1772, %v2065
    %v2067 = vpop.f32.mrb[0].mxu0
    %2068 = vmatprep.mubr.f32.mxu0 0.0
    %v2069 = vand.u32 %v98, 4294901760
    %2070 = vmatmul.mubr.f32.gmra.mrb[0].mxu0 %v2069
    %v2071 = vpop.f32.mrb[0].mxu0
    %v2072 = vadd.f32 %v1778, %v2071
    %v2073 = vpop.f32.mrb[0].mxu0
    %2074 = vmatprep.mubr.f32.mxu0 0.0
    %v2075 = vand.u32 %v101, 4294901760
    %2076 = vmatmul.mubr.f32.gmra.mrb[0].mxu0 %v2075
    %v2077 = vpop.f32.mrb[0].mxu0
    %v2078 = vadd.f32 %v1784, %v2077
    %v2079 = vpop.f32.mrb[0].mxu0
    %2080 = vmatprep.mubr.f32.mxu0 0.0
    %v2081 = vand.u32 %v104, 4294901760
    %2082 = vmatmul.mubr.f32.gmra.mrb[0].mxu0 %v2081
    %v2083 = vpop.f32.mrb[0].mxu0
    %v2084 = vadd.f32 %v1790, %v2083
    %v2085 = vpop.f32.mrb[0].mxu0
    %2086 = vmatprep.mubr.f32.mxu0 0.0
    %v2087 = vand.u32 %v107, 4294901760
    %2088 = vmatmul.mubr.f32.gmra.mrb[0].mxu0 %v2087
    %v2089 = vpop.f32.mrb[0].mxu0
    %v2090 = vadd.f32 %v1796, %v2089
    %v2091 = vpop.f32.mrb[0].mxu0
    %2092 = vmatprep.mubr.f32.mxu0 0.0
    %v2093 = vand.u32 %v110, 4294901760
    %2094 = vmatmul.mubr.f32.gmra.mrb[0].mxu0 %v2093
    %v2095 = vpop.f32.mrb[0].mxu0
    %v2096 = vadd.f32 %v1802, %v2095
    %v2097 = vpop.f32.mrb[0].mxu0
    %2098 = vmatprep.mubr.f32.mxu0 0.0
    %v2099 = vand.u32 %v113, 4294901760
    %2100 = vmatmul.mubr.f32.gmra.mrb[0].mxu0 %v2099
    %v2101 = vpop.f32.mrb[0].mxu0
    %v2102 = vadd.f32 %v1808, %v2101
    %v2103 = vpop.f32.mrb[0].mxu0
    %2104 = vmatprep.mubr.f32.mxu0 0.0
    %v2105 = vand.u32 %v116, 4294901760
    %2106 = vmatmul.mubr.f32.gmra.mrb[0].mxu0 %v2105
    %v2107 = vpop.f32.mrb[0].mxu0
    %v2108 = vadd.f32 %v1814, %v2107
    %v2109 = vpop.f32.mrb[0].mxu0
    %2110 = vmatprep.mubr.f32.mxu0 0.0
    %v2111 = vand.u32 %v119, 4294901760
    %2112 = vmatmul.mubr.f32.gmra.mrb[0].mxu0 %v2111
    %v2113 = vpop.f32.mrb[0].mxu0
    %v2114 = vadd.f32 %v1820, %v2113
    %v2115 = vpop.f32.mrb[0].mxu0
    %2116 = vmatprep.mubr.f32.mxu0 0.0
    %v2117 = vand.u32 %v122, 4294901760
    %2118 = vmatmul.mubr.f32.gmra.mrb[0].mxu0 %v2117
    %v2119 = vpop.f32.mrb[0].mxu0
    %v2120 = vadd.f32 %v1826, %v2119
    %v2121 = vpop.f32.mrb[0].mxu0
    %2122 = vmatprep.mubr.f32.mxu0 0.0
    %v2123 = vand.u32 %v125, 4294901760
    %2124 = vmatmul.mubr.f32.gmra.mrb[0].mxu0 %v2123
    %v2125 = vpop.f32.mrb[0].mxu0
    %v2126 = vadd.f32 %v1832, %v2125
    %v2127 = vpop.f32.mrb[0].mxu0
    %2128 = vmatprep.mubr.f32.mxu0 0.0
    %v2129 = vand.u32 %v128, 4294901760
    %2130 = vmatmul.mubr.f32.gmra.mrb[0].mxu0 %v2129
    %v2131 = vpop.f32.mrb[0].mxu0
    %v2132 = vadd.f32 %v1838, %v2131
    %v2133 = vpop.f32.mrb[0].mxu0
    %2134 = vmatprep.mubr.f32.mxu0 0.0
    %v2135 = vand.u32 %v131, 4294901760
    %2136 = vmatmul.mubr.f32.gmra.mrb[0].mxu0 %v2135
    %v2137 = vpop.f32.mrb[0].mxu0
    %v2138 = vadd.f32 %v1844, %v2137
    %v2139 = vpop.f32.mrb[0].mxu0
    %2140 = vmatprep.mubr.f32.mxu0 0.0
    %v2141 = vand.u32 %v134, 4294901760
    %2142 = vmatmul.mubr.f32.gmra.mrb[0].mxu0 %v2141
    %v2143 = vpop.f32.mrb[0].mxu0
    %v2144 = vadd.f32 %v1850, %v2143
    %v2145 = vpop.f32.mrb[0].mxu0
    %2146 = vmatprep.mubr.f32.mxu0 0.0
    %v2147 = vand.u32 %v137, 4294901760
    %2148 = vmatmul.mubr.f32.gmra.mrb[0].mxu0 %v2147
    %v2149 = vpop.f32.mrb[0].mxu0
    %v2150 = vadd.f32 %v1856, %v2149
    %v2151 = vpop.f32.mrb[0].mxu0
    %2152 = vmatprep.mubr.f32.mxu0 0.0
    %v2153 = vand.u32 %v140, 4294901760
    %2154 = vmatmul.mubr.f32.gmra.mrb[0].mxu0 %v2153
    %v2155 = vpop.f32.mrb[0].mxu0
    %v2156 = vadd.f32 %v1862, %v2155
    %v2157 = vpop.f32.mrb[0].mxu0
    %2158 = vmatprep.mubr.f32.mxu0 0.0
    %v2159 = vand.u32 %v143, 4294901760
    %2160 = vmatmul.mubr.f32.gmra.mrb[0].mxu0 %v2159
    %v2161 = vpop.f32.mrb[0].mxu0
    %v2162 = vadd.f32 %v1868, %v2161
    %v2163 = vpop.f32.mrb[0].mxu0
    %2164 = vmatprep.mubr.f32.mxu0 0.0
    %v2165 = vand.u32 %v146, 4294901760
    %2166 = vmatmul.mubr.f32.gmra.mrb[0].mxu0 %v2165
    %v2167 = vpop.f32.mrb[0].mxu0
    %v2168 = vadd.f32 %v1874, %v2167
    %v2169 = vpop.f32.mrb[0].mxu0
    %2170 = vmatprep.mubr.f32.mxu0 0.0
    %v2171 = vand.u32 %v149, 4294901760
    %2172 = vmatmul.mubr.f32.gmra.mrb[0].mxu0 %v2171
    %v2173 = vpop.f32.mrb[0].mxu0
    %v2174 = vadd.f32 %v1880, %v2173
    %v2175 = vpop.f32.mrb[0].mxu0
    %2176 = vmatprep.mubr.f32.mxu0 0.0
    %v2177 = vand.u32 %v152, 4294901760
    %2178 = vmatmul.mubr.f32.gmra.mrb[0].mxu0 %v2177
    %v2179 = vpop.f32.mrb[0].mxu0
    %v2180 = vadd.f32 %v1886, %v2179
    %v2181 = vpop.f32.mrb[0].mxu0
    %2182 = vmatprep.mubr.f32.mxu0 0.0
    %v2183 = vand.u32 %v155, 4294901760
    %2184 = vmatmul.mubr.f32.gmra.mrb[0].mxu0 %v2183
    %v2185 = vpop.f32.mrb[0].mxu0
    %v2186 = vadd.f32 %v1892, %v2185
    %v2187 = vpop.f32.mrb[0].mxu0
    %2188 = vmatprep.mubr.f32.mxu0 0.0
    %v2189 = vand.u32 %v158, 4294901760
    %2190 = vmatmul.mubr.f32.gmra.mrb[0].mxu0 %v2189
    %v2191 = vpop.f32.mrb[0].mxu0
    %v2192 = vadd.f32 %v1898, %v2191
    %v2193 = vpop.f32.mrb[0].mxu0
    %2194 = vmatprep.mubr.f32.mxu0 0.0
    %v2195 = vand.u32 %v161, 4294901760
    %2196 = vmatmul.mubr.f32.gmra.mrb[0].mxu0 %v2195
    %v2197 = vpop.f32.mrb[0].mxu0
    %v2198 = vadd.f32 %v1904, %v2197
    %v2199 = vpop.f32.mrb[0].mxu0
    %2200 = vmatprep.mubr.f32.mxu0 0.0
    %v2201 = vand.u32 %v164, 4294901760
    %2202 = vmatmul.mubr.f32.gmra.mrb[0].mxu0 %v2201
    %v2203 = vpop.f32.mrb[0].mxu0
    %v2204 = vadd.f32 %v1910, %v2203
    %v2205 = vpop.f32.mrb[0].mxu0
    %2206 = vdwg.mxu0
    %v2207 = vmul.f32 %v1982, 0.63661975
    %v2208 = vmul.f32 %v1988, 0.63661975
    %v2209 = vmul.f32 %v1994, 0.63661975
    %v2210 = vmul.f32 %v2000, 0.63661975
    %v2211 = vmul.f32 %v2006, 0.63661975
    %v2212 = vmul.f32 %v2012, 0.63661975
    %v2213 = vmul.f32 %v2018, 0.63661975
    %v2214 = vmul.f32 %v2024, 0.63661975
    %v2215 = vmul.f32 %v2030, 0.63661975
    %v2216 = vmul.f32 %v2036, 0.63661975
    %v2217 = vmul.f32 %v2042, 0.63661975
    %v2218 = vmul.f32 %v2048, 0.63661975
    %v2219 = vmul.f32 %v2054, 0.63661975
    %v2220 = vmul.f32 %v2060, 0.63661975
    %v2221 = vmul.f32 %v2066, 0.63661975
    %v2222 = vmul.f32 %v2072, 0.63661975
    %v2223 = vmul.f32 %v2078, 0.63661975
    %v2224 = vmul.f32 %v2084, 0.63661975
    %v2225 = vmul.f32 %v2090, 0.63661975
    %v2226 = vmul.f32 %v2096, 0.63661975
    %v2227 = vmul.f32 %v2102, 0.63661975
    %v2228 = vmul.f32 %v2108, 0.63661975
    %v2229 = vmul.f32 %v2114, 0.63661975
    %v2230 = vmul.f32 %v2120, 0.63661975
    %v2231 = vmul.f32 %v2126, 0.63661975
    %v2232 = vmul.f32 %v2132, 0.63661975
    %v2233 = vmul.f32 %v2138, 0.63661975
    %v2234 = vmul.f32 %v2144, 0.63661975
    %v2235 = vmul.f32 %v2150, 0.63661975
    %v2236 = vmul.f32 %v2156, 0.63661975
    %v2237 = vmul.f32 %v2162, 0.63661975
    %v2238 = vmul.f32 %v2168, 0.63661975
    %v2239 = vmul.f32 %v2174, 0.63661975
    %v2240 = vmul.f32 %v2180, 0.63661975
    %v2241 = vmul.f32 %v2186, 0.63661975
    %v2242 = vmul.f32 %v2192, 0.63661975
    %v2243 = vmul.f32 %v2198, 0.63661975
    %v2244 = vmul.f32 %v2204, 0.63661975
    %v2245 = vadd.f32 %v2207, 0.5
    %v2246 = vadd.f32 %v2208, 0.5
    %v2247 = vadd.f32 %v2209, 0.5
    %v2248 = vadd.f32 %v2210, 0.5
    %v2249 = vadd.f32 %v2211, 0.5
    %v2250 = vadd.f32 %v2212, 0.5
    %v2251 = vadd.f32 %v2213, 0.5
    %v2252 = vadd.f32 %v2214, 0.5
    %v2253 = vadd.f32 %v2215, 0.5
    %v2254 = vadd.f32 %v2216, 0.5
    %v2255 = vadd.f32 %v2217, 0.5
    %v2256 = vadd.f32 %v2218, 0.5
    %v2257 = vadd.f32 %v2219, 0.5
    %v2258 = vadd.f32 %v2220, 0.5
    %v2259 = vadd.f32 %v2221, 0.5
    %v2260 = vadd.f32 %v2222, 0.5
    %v2261 = vadd.f32 %v2223, 0.5
    %v2262 = vadd.f32 %v2224, 0.5
    %v2263 = vadd.f32 %v2225, 0.5
    %v2264 = vadd.f32 %v2226, 0.5
    %v2265 = vadd.f32 %v2227, 0.5
    %v2266 = vadd.f32 %v2228, 0.5
    %v2267 = vadd.f32 %v2229, 0.5
    %v2268 = vadd.f32 %v2230, 0.5
    %v2269 = vadd.f32 %v2231, 0.5
    %v2270 = vadd.f32 %v2232, 0.5
    %v2271 = vadd.f32 %v2233, 0.5
    %v2272 = vadd.f32 %v2234, 0.5
    %v2273 = vadd.f32 %v2235, 0.5
    %v2274 = vadd.f32 %v2236, 0.5
    %v2275 = vadd.f32 %v2237, 0.5
    %v2276 = vadd.f32 %v2238, 0.5
    %v2277 = vadd.f32 %v2239, 0.5
    %v2278 = vadd.f32 %v2240, 0.5
    %v2279 = vadd.f32 %v2241, 0.5
    %v2280 = vadd.f32 %v2242, 0.5
    %v2281 = vadd.f32 %v2243, 0.5
    %v2282 = vadd.f32 %v2244, 0.5
    %v2283 = vfloor.f32 %v2245
    %v2284 = vfloor.f32 %v2246
    %v2285 = vfloor.f32 %v2247
    %v2286 = vfloor.f32 %v2248
    %v2287 = vfloor.f32 %v2249
    %v2288 = vfloor.f32 %v2250
    %v2289 = vfloor.f32 %v2251
    %v2290 = vfloor.f32 %v2252
    %v2291 = vfloor.f32 %v2253
    %v2292 = vfloor.f32 %v2254
    %v2293 = vfloor.f32 %v2255
    %v2294 = vfloor.f32 %v2256
    %v2295 = vfloor.f32 %v2257
    %v2296 = vfloor.f32 %v2258
    %v2297 = vfloor.f32 %v2259
    %v2298 = vfloor.f32 %v2260
    %v2299 = vfloor.f32 %v2261
    %v2300 = vfloor.f32 %v2262
    %v2301 = vfloor.f32 %v2263
    %v2302 = vfloor.f32 %v2264
    %v2303 = vfloor.f32 %v2265
    %v2304 = vfloor.f32 %v2266
    %v2305 = vfloor.f32 %v2267
    %v2306 = vfloor.f32 %v2268
    %v2307 = vfloor.f32 %v2269
    %v2308 = vfloor.f32 %v2270
    %v2309 = vfloor.f32 %v2271
    %v2310 = vfloor.f32 %v2272
    %v2311 = vfloor.f32 %v2273
    %v2312 = vfloor.f32 %v2274
    %v2313 = vfloor.f32 %v2275
    %v2314 = vfloor.f32 %v2276
    %v2315 = vfloor.f32 %v2277
    %v2316 = vfloor.f32 %v2278
    %v2317 = vfloor.f32 %v2279
    %v2318 = vfloor.f32 %v2280
    %v2319 = vfloor.f32 %v2281
    %v2320 = vfloor.f32 %v2282
    %v2321 = vmul.f32 %v2283, 1.5703125
    %v2322 = vmul.f32 %v2284, 1.5703125
    %v2323 = vmul.f32 %v2285, 1.5703125
    %v2324 = vmul.f32 %v2286, 1.5703125
    %v2325 = vmul.f32 %v2287, 1.5703125
    %v2326 = vmul.f32 %v2288, 1.5703125
    %v2327 = vmul.f32 %v2289, 1.5703125
    %v2328 = vmul.f32 %v2290, 1.5703125
    %v2329 = vmul.f32 %v2291, 1.5703125
    %v2330 = vmul.f32 %v2292, 1.5703125
    %v2331 = vmul.f32 %v2293, 1.5703125
    %v2332 = vmul.f32 %v2294, 1.5703125
    %v2333 = vmul.f32 %v2295, 1.5703125
    %v2334 = vmul.f32 %v2296, 1.5703125
    %v2335 = vmul.f32 %v2297, 1.5703125
    %v2336 = vmul.f32 %v2298, 1.5703125
    %v2337 = vmul.f32 %v2299, 1.5703125
    %v2338 = vmul.f32 %v2300, 1.5703125
    %v2339 = vmul.f32 %v2301, 1.5703125
    %v2340 = vmul.f32 %v2302, 1.5703125
    %v2341 = vmul.f32 %v2303, 1.5703125
    %v2342 = vmul.f32 %v2304, 1.5703125
    %v2343 = vmul.f32 %v2305, 1.5703125
    %v2344 = vmul.f32 %v2306, 1.5703125
    %v2345 = vmul.f32 %v2307, 1.5703125
    %v2346 = vmul.f32 %v2308, 1.5703125
    %v2347 = vmul.f32 %v2309, 1.5703125
    %v2348 = vmul.f32 %v2310, 1.5703125
    %v2349 = vmul.f32 %v2311, 1.5703125
    %v2350 = vmul.f32 %v2312, 1.5703125
    %v2351 = vmul.f32 %v2313, 1.5703125
    %v2352 = vmul.f32 %v2314, 1.5703125
    %v2353 = vmul.f32 %v2315, 1.5703125
    %v2354 = vmul.f32 %v2316, 1.5703125
    %v2355 = vmul.f32 %v2317, 1.5703125
    %v2356 = vmul.f32 %v2318, 1.5703125
    %v2357 = vmul.f32 %v2319, 1.5703125
    %v2358 = vmul.f32 %v2320, 1.5703125
    %v2359 = vsub.f32 %v1982, %v2321
    %v2360 = vsub.f32 %v1988, %v2322
    %v2361 = vsub.f32 %v1994, %v2323
    %v2362 = vsub.f32 %v2000, %v2324
    %v2363 = vsub.f32 %v2006, %v2325
    %v2364 = vsub.f32 %v2012, %v2326
    %v2365 = vsub.f32 %v2018, %v2327
    %v2366 = vsub.f32 %v2024, %v2328
    %v2367 = vsub.f32 %v2030, %v2329
    %v2368 = vsub.f32 %v2036, %v2330
    %v2369 = vsub.f32 %v2042, %v2331
    %v2370 = vsub.f32 %v2048, %v2332
    %v2371 = vsub.f32 %v2054, %v2333
    %v2372 = vsub.f32 %v2060, %v2334
    %v2373 = vsub.f32 %v2066, %v2335
    %v2374 = vsub.f32 %v2072, %v2336
    %v2375 = vsub.f32 %v2078, %v2337
    %v2376 = vsub.f32 %v2084, %v2338
    %v2377 = vsub.f32 %v2090, %v2339
    %v2378 = vsub.f32 %v2096, %v2340
    %v2379 = vsub.f32 %v2102, %v2341
    %v2380 = vsub.f32 %v2108, %v2342
    %v2381 = vsub.f32 %v2114, %v2343
    %v2382 = vsub.f32 %v2120, %v2344
    %v2383 = vsub.f32 %v2126, %v2345
    %v2384 = vsub.f32 %v2132, %v2346
    %v2385 = vsub.f32 %v2138, %v2347
    %v2386 = vsub.f32 %v2144, %v2348
    %v2387 = vsub.f32 %v2150, %v2349
    %v2388 = vsub.f32 %v2156, %v2350
    %v2389 = vsub.f32 %v2162, %v2351
    %v2390 = vsub.f32 %v2168, %v2352
    %v2391 = vsub.f32 %v2174, %v2353
    %v2392 = vsub.f32 %v2180, %v2354
    %v2393 = vsub.f32 %v2186, %v2355
    %v2394 = vsub.f32 %v2192, %v2356
    %v2395 = vsub.f32 %v2198, %v2357
    %v2396 = vsub.f32 %v2204, %v2358
    %v2397 = vmul.f32 %v2283, 0.0004837513
    %v2398 = vmul.f32 %v2284, 0.0004837513
    %v2399 = vmul.f32 %v2285, 0.0004837513
    %v2400 = vmul.f32 %v2286, 0.0004837513
    %v2401 = vmul.f32 %v2287, 0.0004837513
    %v2402 = vmul.f32 %v2288, 0.0004837513
    %v2403 = vmul.f32 %v2289, 0.0004837513
    %v2404 = vmul.f32 %v2290, 0.0004837513
    %v2405 = vmul.f32 %v2291, 0.0004837513
    %v2406 = vmul.f32 %v2292, 0.0004837513
    %v2407 = vmul.f32 %v2293, 0.0004837513
    %v2408 = vmul.f32 %v2294, 0.0004837513
    %v2409 = vmul.f32 %v2295, 0.0004837513
    %v2410 = vmul.f32 %v2296, 0.0004837513
    %v2411 = vmul.f32 %v2297, 0.0004837513
    %v2412 = vmul.f32 %v2298, 0.0004837513
    %v2413 = vmul.f32 %v2299, 0.0004837513
    %v2414 = vmul.f32 %v2300, 0.0004837513
    %v2415 = vmul.f32 %v2301, 0.0004837513
    %v2416 = vmul.f32 %v2302, 0.0004837513
    %v2417 = vmul.f32 %v2303, 0.0004837513
    %v2418 = vmul.f32 %v2304, 0.0004837513
    %v2419 = vmul.f32 %v2305, 0.0004837513
    %v2420 = vmul.f32 %v2306, 0.0004837513
    %v2421 = vmul.f32 %v2307, 0.0004837513
    %v2422 = vmul.f32 %v2308, 0.0004837513
    %v2423 = vmul.f32 %v2309, 0.0004837513
    %v2424 = vmul.f32 %v2310, 0.0004837513
    %v2425 = vmul.f32 %v2311, 0.0004837513
    %v2426 = vmul.f32 %v2312, 0.0004837513
    %v2427 = vmul.f32 %v2313, 0.0004837513
    %v2428 = vmul.f32 %v2314, 0.0004837513
    %v2429 = vmul.f32 %v2315, 0.0004837513
    %v2430 = vmul.f32 %v2316, 0.0004837513
    %v2431 = vmul.f32 %v2317, 0.0004837513
    %v2432 = vmul.f32 %v2318, 0.0004837513
    %v2433 = vmul.f32 %v2319, 0.0004837513
    %v2434 = vmul.f32 %v2320, 0.0004837513
    %v2435 = vsub.f32 %v2359, %v2397
    %v2436 = vsub.f32 %v2360, %v2398
    %v2437 = vsub.f32 %v2361, %v2399
    %v2438 = vsub.f32 %v2362, %v2400
    %v2439 = vsub.f32 %v2363, %v2401
    %v2440 = vsub.f32 %v2364, %v2402
    %v2441 = vsub.f32 %v2365, %v2403
    %v2442 = vsub.f32 %v2366, %v2404
    %v2443 = vsub.f32 %v2367, %v2405
    %v2444 = vsub.f32 %v2368, %v2406
    %v2445 = vsub.f32 %v2369, %v2407
    %v2446 = vsub.f32 %v2370, %v2408
    %v2447 = vsub.f32 %v2371, %v2409
    %v2448 = vsub.f32 %v2372, %v2410
    %v2449 = vsub.f32 %v2373, %v2411
    %v2450 = vsub.f32 %v2374, %v2412
    %v2451 = vsub.f32 %v2375, %v2413
    %v2452 = vsub.f32 %v2376, %v2414
    %v2453 = vsub.f32 %v2377, %v2415
    %v2454 = vsub.f32 %v2378, %v2416
    %v2455 = vsub.f32 %v2379, %v2417
    %v2456 = vsub.f32 %v2380, %v2418
    %v2457 = vsub.f32 %v2381, %v2419
    %v2458 = vsub.f32 %v2382, %v2420
    %v2459 = vsub.f32 %v2383, %v2421
    %v2460 = vsub.f32 %v2384, %v2422
    %v2461 = vsub.f32 %v2385, %v2423
    %v2462 = vsub.f32 %v2386, %v2424
    %v2463 = vsub.f32 %v2387, %v2425
    %v2464 = vsub.f32 %v2388, %v2426
    %v2465 = vsub.f32 %v2389, %v2427
    %v2466 = vsub.f32 %v2390, %v2428
    %v2467 = vsub.f32 %v2391, %v2429
    %v2468 = vsub.f32 %v2392, %v2430
    %v2469 = vsub.f32 %v2393, %v2431
    %v2470 = vsub.f32 %v2394, %v2432
    %v2471 = vsub.f32 %v2395, %v2433
    %v2472 = vsub.f32 %v2396, %v2434
    %v2473 = vmul.f32 %v2283, 7.54979e-08
    %v2474 = vmul.f32 %v2284, 7.54979e-08
    %v2475 = vmul.f32 %v2285, 7.54979e-08
    %v2476 = vmul.f32 %v2286, 7.54979e-08
    %v2477 = vmul.f32 %v2287, 7.54979e-08
    %v2478 = vmul.f32 %v2288, 7.54979e-08
    %v2479 = vmul.f32 %v2289, 7.54979e-08
    %v2480 = vmul.f32 %v2290, 7.54979e-08
    %v2481 = vmul.f32 %v2291, 7.54979e-08
    %v2482 = vmul.f32 %v2292, 7.54979e-08
    %v2483 = vmul.f32 %v2293, 7.54979e-08
    %v2484 = vmul.f32 %v2294, 7.54979e-08
    %v2485 = vmul.f32 %v2295, 7.54979e-08
    %v2486 = vmul.f32 %v2296, 7.54979e-08
    %v2487 = vmul.f32 %v2297, 7.54979e-08
    %v2488 = vmul.f32 %v2298, 7.54979e-08
    %v2489 = vmul.f32 %v2299, 7.54979e-08
    %v2490 = vmul.f32 %v2300, 7.54979e-08
    %v2491 = vmul.f32 %v2301, 7.54979e-08
    %v2492 = vmul.f32 %v2302, 7.54979e-08
    %v2493 = vmul.f32 %v2303, 7.54979e-08
    %v2494 = vmul.f32 %v2304, 7.54979e-08
    %v2495 = vmul.f32 %v2305, 7.54979e-08
    %v2496 = vmul.f32 %v2306, 7.54979e-08
    %v2497 = vmul.f32 %v2307, 7.54979e-08
    %v2498 = vmul.f32 %v2308, 7.54979e-08
    %v2499 = vmul.f32 %v2309, 7.54979e-08
    %v2500 = vmul.f32 %v2310, 7.54979e-08
    %v2501 = vmul.f32 %v2311, 7.54979e-08
    %v2502 = vmul.f32 %v2312, 7.54979e-08
    %v2503 = vmul.f32 %v2313, 7.54979e-08
    %v2504 = vmul.f32 %v2314, 7.54979e-08
    %v2505 = vmul.f32 %v2315, 7.54979e-08
    %v2506 = vmul.f32 %v2316, 7.54979e-08
    %v2507 = vmul.f32 %v2317, 7.54979e-08
    %v2508 = vmul.f32 %v2318, 7.54979e-08
    %v2509 = vmul.f32 %v2319, 7.54979e-08
    %v2510 = vmul.f32 %v2320, 7.54979e-08
    %v2511 = vsub.f32 %v2435, %v2473
    %v2512 = vsub.f32 %v2436, %v2474
    %v2513 = vsub.f32 %v2437, %v2475
    %v2514 = vsub.f32 %v2438, %v2476
    %v2515 = vsub.f32 %v2439, %v2477
    %v2516 = vsub.f32 %v2440, %v2478
    %v2517 = vsub.f32 %v2441, %v2479
    %v2518 = vsub.f32 %v2442, %v2480
    %v2519 = vsub.f32 %v2443, %v2481
    %v2520 = vsub.f32 %v2444, %v2482
    %v2521 = vsub.f32 %v2445, %v2483
    %v2522 = vsub.f32 %v2446, %v2484
    %v2523 = vsub.f32 %v2447, %v2485
    %v2524 = vsub.f32 %v2448, %v2486
    %v2525 = vsub.f32 %v2449, %v2487
    %v2526 = vsub.f32 %v2450, %v2488
    %v2527 = vsub.f32 %v2451, %v2489
    %v2528 = vsub.f32 %v2452, %v2490
    %v2529 = vsub.f32 %v2453, %v2491
    %v2530 = vsub.f32 %v2454, %v2492
    %v2531 = vsub.f32 %v2455, %v2493
    %v2532 = vsub.f32 %v2456, %v2494
    %v2533 = vsub.f32 %v2457, %v2495
    %v2534 = vsub.f32 %v2458, %v2496
    %v2535 = vsub.f32 %v2459, %v2497
    %v2536 = vsub.f32 %v2460, %v2498
    %v2537 = vsub.f32 %v2461, %v2499
    %v2538 = vsub.f32 %v2462, %v2500
    %v2539 = vsub.f32 %v2463, %v2501
    %v2540 = vsub.f32 %v2464, %v2502
    %v2541 = vsub.f32 %v2465, %v2503
    %v2542 = vsub.f32 %v2466, %v2504
    %v2543 = vsub.f32 %v2467, %v2505
    %v2544 = vsub.f32 %v2468, %v2506
    %v2545 = vsub.f32 %v2469, %v2507
    %v2546 = vsub.f32 %v2470, %v2508
    %v2547 = vsub.f32 %v2471, %v2509
    %v2548 = vsub.f32 %v2472, %v2510
    %v2549 = vmul.f32 %v2511, %v2511
    %v2550 = vmul.f32 %v2512, %v2512
    %v2551 = vmul.f32 %v2513, %v2513
    %v2552 = vmul.f32 %v2514, %v2514
    %v2553 = vmul.f32 %v2515, %v2515
    %v2554 = vmul.f32 %v2516, %v2516
    %v2555 = vmul.f32 %v2517, %v2517
    %v2556 = vmul.f32 %v2518, %v2518
    %v2557 = vmul.f32 %v2519, %v2519
    %v2558 = vmul.f32 %v2520, %v2520
    %v2559 = vmul.f32 %v2521, %v2521
    %v2560 = vmul.f32 %v2522, %v2522
    %v2561 = vmul.f32 %v2523, %v2523
    %v2562 = vmul.f32 %v2524, %v2524
    %v2563 = vmul.f32 %v2525, %v2525
    %v2564 = vmul.f32 %v2526, %v2526
    %v2565 = vmul.f32 %v2527, %v2527
    %v2566 = vmul.f32 %v2528, %v2528
    %v2567 = vmul.f32 %v2529, %v2529
    %v2568 = vmul.f32 %v2530, %v2530
    %v2569 = vmul.f32 %v2531, %v2531
    %v2570 = vmul.f32 %v2532, %v2532
    %v2571 = vmul.f32 %v2533, %v2533
    %v2572 = vmul.f32 %v2534, %v2534
    %v2573 = vmul.f32 %v2535, %v2535
    %v2574 = vmul.f32 %v2536, %v2536
    %v2575 = vmul.f32 %v2537, %v2537
    %v2576 = vmul.f32 %v2538, %v2538
    %v2577 = vmul.f32 %v2539, %v2539
    %v2578 = vmul.f32 %v2540, %v2540
    %v2579 = vmul.f32 %v2541, %v2541
    %v2580 = vmul.f32 %v2542, %v2542
    %v2581 = vmul.f32 %v2543, %v2543
    %v2582 = vmul.f32 %v2544, %v2544
    %v2583 = vmul.f32 %v2545, %v2545
    %v2584 = vmul.f32 %v2546, %v2546
    %v2585 = vmul.f32 %v2547, %v2547
    %v2586 = vmul.f32 %v2548, %v2548
    %v2587 = vmul.f32 %v2549, -0.00019515296
    %v2588 = vmul.f32 %v2550, -0.00019515296
    %v2589 = vmul.f32 %v2551, -0.00019515296
    %v2590 = vmul.f32 %v2552, -0.00019515296
    %v2591 = vmul.f32 %v2553, -0.00019515296
    %v2592 = vmul.f32 %v2554, -0.00019515296
    %v2593 = vmul.f32 %v2555, -0.00019515296
    %v2594 = vmul.f32 %v2556, -0.00019515296
    %v2595 = vmul.f32 %v2557, -0.00019515296
    %v2596 = vmul.f32 %v2558, -0.00019515296
    %v2597 = vmul.f32 %v2559, -0.00019515296
    %v2598 = vmul.f32 %v2560, -0.00019515296
    %v2599 = vmul.f32 %v2561, -0.00019515296
    %v2600 = vmul.f32 %v2562, -0.00019515296
    %v2601 = vmul.f32 %v2563, -0.00019515296
    %v2602 = vmul.f32 %v2564, -0.00019515296
    %v2603 = vmul.f32 %v2565, -0.00019515296
    %v2604 = vmul.f32 %v2566, -0.00019515296
    %v2605 = vmul.f32 %v2567, -0.00019515296
    %v2606 = vmul.f32 %v2568, -0.00019515296
    %v2607 = vmul.f32 %v2569, -0.00019515296
    %v2608 = vmul.f32 %v2570, -0.00019515296
    %v2609 = vmul.f32 %v2571, -0.00019515296
    %v2610 = vmul.f32 %v2572, -0.00019515296
    %v2611 = vmul.f32 %v2573, -0.00019515296
    %v2612 = vmul.f32 %v2574, -0.00019515296
    %v2613 = vmul.f32 %v2575, -0.00019515296
    %v2614 = vmul.f32 %v2576, -0.00019515296
    %v2615 = vmul.f32 %v2577, -0.00019515296
    %v2616 = vmul.f32 %v2578, -0.00019515296
    %v2617 = vmul.f32 %v2579, -0.00019515296
    %v2618 = vmul.f32 %v2580, -0.00019515296
    %v2619 = vmul.f32 %v2581, -0.00019515296
    %v2620 = vmul.f32 %v2582, -0.00019515296
    %v2621 = vmul.f32 %v2583, -0.00019515296
    %v2622 = vmul.f32 %v2584, -0.00019515296
    %v2623 = vmul.f32 %v2585, -0.00019515296
    %v2624 = vmul.f32 %v2586, -0.00019515296
    %v2625 = vadd.f32 %v2587, 0.008332161
    %v2626 = vadd.f32 %v2588, 0.008332161
    %v2627 = vadd.f32 %v2589, 0.008332161
    %v2628 = vadd.f32 %v2590, 0.008332161
    %v2629 = vadd.f32 %v2591, 0.008332161
    %v2630 = vadd.f32 %v2592, 0.008332161
    %v2631 = vadd.f32 %v2593, 0.008332161
    %v2632 = vadd.f32 %v2594, 0.008332161
    %v2633 = vadd.f32 %v2595, 0.008332161
    %v2634 = vadd.f32 %v2596, 0.008332161
    %v2635 = vadd.f32 %v2597, 0.008332161
    %v2636 = vadd.f32 %v2598, 0.008332161
    %v2637 = vadd.f32 %v2599, 0.008332161
    %v2638 = vadd.f32 %v2600, 0.008332161
    %v2639 = vadd.f32 %v2601, 0.008332161
    %v2640 = vadd.f32 %v2602, 0.008332161
    %v2641 = vadd.f32 %v2603, 0.008332161
    %v2642 = vadd.f32 %v2604, 0.008332161
    %v2643 = vadd.f32 %v2605, 0.008332161
    %v2644 = vadd.f32 %v2606, 0.008332161
    %v2645 = vadd.f32 %v2607, 0.008332161
    %v2646 = vadd.f32 %v2608, 0.008332161
    %v2647 = vadd.f32 %v2609, 0.008332161
    %v2648 = vadd.f32 %v2610, 0.008332161
    %v2649 = vadd.f32 %v2611, 0.008332161
    %v2650 = vadd.f32 %v2612, 0.008332161
    %v2651 = vadd.f32 %v2613, 0.008332161
    %v2652 = vadd.f32 %v2614, 0.008332161
    %v2653 = vadd.f32 %v2615, 0.008332161
    %v2654 = vadd.f32 %v2616, 0.008332161
    %v2655 = vadd.f32 %v2617, 0.008332161
    %v2656 = vadd.f32 %v2618, 0.008332161
    %v2657 = vadd.f32 %v2619, 0.008332161
    %v2658 = vadd.f32 %v2620, 0.008332161
    %v2659 = vadd.f32 %v2621, 0.008332161
    %v2660 = vadd.f32 %v2622, 0.008332161
    %v2661 = vadd.f32 %v2623, 0.008332161
    %v2662 = vadd.f32 %v2624, 0.008332161
    %v2663 = vmul.f32 %v2625, %v2549
    %v2664 = vmul.f32 %v2626, %v2550
    %v2665 = vmul.f32 %v2627, %v2551
    %v2666 = vmul.f32 %v2628, %v2552
    %v2667 = vmul.f32 %v2629, %v2553
    %v2668 = vmul.f32 %v2630, %v2554
    %v2669 = vmul.f32 %v2631, %v2555
    %v2670 = vmul.f32 %v2632, %v2556
    %v2671 = vmul.f32 %v2633, %v2557
    %v2672 = vmul.f32 %v2634, %v2558
    %v2673 = vmul.f32 %v2635, %v2559
    %v2674 = vmul.f32 %v2636, %v2560
    %v2675 = vmul.f32 %v2637, %v2561
    %v2676 = vmul.f32 %v2638, %v2562
    %v2677 = vmul.f32 %v2639, %v2563
    %v2678 = vmul.f32 %v2640, %v2564
    %v2679 = vmul.f32 %v2641, %v2565
    %v2680 = vmul.f32 %v2642, %v2566
    %v2681 = vmul.f32 %v2643, %v2567
    %v2682 = vmul.f32 %v2644, %v2568
    %v2683 = vmul.f32 %v2645, %v2569
    %v2684 = vmul.f32 %v2646, %v2570
    %v2685 = vmul.f32 %v2647, %v2571
    %v2686 = vmul.f32 %v2648, %v2572
    %v2687 = vmul.f32 %v2649, %v2573
    %v2688 = vmul.f32 %v2650, %v2574
    %v2689 = vmul.f32 %v2651, %v2575
    %v2690 = vmul.f32 %v2652, %v2576
    %v2691 = vmul.f32 %v2653, %v2577
    %v2692 = vmul.f32 %v2654, %v2578
    %v2693 = vmul.f32 %v2655, %v2579
    %v2694 = vmul.f32 %v2656, %v2580
    %v2695 = vmul.f32 %v2657, %v2581
    %v2696 = vmul.f32 %v2658, %v2582
    %v2697 = vmul.f32 %v2659, %v2583
    %v2698 = vmul.f32 %v2660, %v2584
    %v2699 = vmul.f32 %v2661, %v2585
    %v2700 = vmul.f32 %v2662, %v2586
    %v2701 = vsub.f32 %v2663, 0.16666655
    %v2702 = vsub.f32 %v2664, 0.16666655
    %v2703 = vsub.f32 %v2665, 0.16666655
    %v2704 = vsub.f32 %v2666, 0.16666655
    %v2705 = vsub.f32 %v2667, 0.16666655
    %v2706 = vsub.f32 %v2668, 0.16666655
    %v2707 = vsub.f32 %v2669, 0.16666655
    %v2708 = vsub.f32 %v2670, 0.16666655
    %v2709 = vsub.f32 %v2671, 0.16666655
    %v2710 = vsub.f32 %v2672, 0.16666655
    %v2711 = vsub.f32 %v2673, 0.16666655
    %v2712 = vsub.f32 %v2674, 0.16666655
    %v2713 = vsub.f32 %v2675, 0.16666655
    %v2714 = vsub.f32 %v2676, 0.16666655
    %v2715 = vsub.f32 %v2677, 0.16666655
    %v2716 = vsub.f32 %v2678, 0.16666655
    %v2717 = vsub.f32 %v2679, 0.16666655
    %v2718 = vsub.f32 %v2680, 0.16666655
    %v2719 = vsub.f32 %v2681, 0.16666655
    %v2720 = vsub.f32 %v2682, 0.16666655
    %v2721 = vsub.f32 %v2683, 0.16666655
    %v2722 = vsub.f32 %v2684, 0.16666655
    %v2723 = vsub.f32 %v2685, 0.16666655
    %v2724 = vsub.f32 %v2686, 0.16666655
    %v2725 = vsub.f32 %v2687, 0.16666655
    %v2726 = vsub.f32 %v2688, 0.16666655
    %v2727 = vsub.f32 %v2689, 0.16666655
    %v2728 = vsub.f32 %v2690, 0.16666655
    %v2729 = vsub.f32 %v2691, 0.16666655
    %v2730 = vsub.f32 %v2692, 0.16666655
    %v2731 = vsub.f32 %v2693, 0.16666655
    %v2732 = vsub.f32 %v2694, 0.16666655
    %v2733 = vsub.f32 %v2695, 0.16666655
    %v2734 = vsub.f32 %v2696, 0.16666655
    %v2735 = vsub.f32 %v2697, 0.16666655
    %v2736 = vsub.f32 %v2698, 0.16666655
    %v2737 = vsub.f32 %v2699, 0.16666655
    %v2738 = vsub.f32 %v2700, 0.16666655
    %v2739 = vmul.f32 %v2511, %v2549
    %v2740 = vmul.f32 %v2512, %v2550
    %v2741 = vmul.f32 %v2513, %v2551
    %v2742 = vmul.f32 %v2514, %v2552
    %v2743 = vmul.f32 %v2515, %v2553
    %v2744 = vmul.f32 %v2516, %v2554
    %v2745 = vmul.f32 %v2517, %v2555
    %v2746 = vmul.f32 %v2518, %v2556
    %v2747 = vmul.f32 %v2519, %v2557
    %v2748 = vmul.f32 %v2520, %v2558
    %v2749 = vmul.f32 %v2521, %v2559
    %v2750 = vmul.f32 %v2522, %v2560
    %v2751 = vmul.f32 %v2523, %v2561
    %v2752 = vmul.f32 %v2524, %v2562
    %v2753 = vmul.f32 %v2525, %v2563
    %v2754 = vmul.f32 %v2526, %v2564
    %v2755 = vmul.f32 %v2527, %v2565
    %v2756 = vmul.f32 %v2528, %v2566
    %v2757 = vmul.f32 %v2529, %v2567
    %v2758 = vmul.f32 %v2530, %v2568
    %v2759 = vmul.f32 %v2531, %v2569
    %v2760 = vmul.f32 %v2532, %v2570
    %v2761 = vmul.f32 %v2533, %v2571
    %v2762 = vmul.f32 %v2534, %v2572
    %v2763 = vmul.f32 %v2535, %v2573
    %v2764 = vmul.f32 %v2536, %v2574
    %v2765 = vmul.f32 %v2537, %v2575
    %v2766 = vmul.f32 %v2538, %v2576
    %v2767 = vmul.f32 %v2539, %v2577
    %v2768 = vmul.f32 %v2540, %v2578
    %v2769 = vmul.f32 %v2541, %v2579
    %v2770 = vmul.f32 %v2542, %v2580
    %v2771 = vmul.f32 %v2543, %v2581
    %v2772 = vmul.f32 %v2544, %v2582
    %v2773 = vmul.f32 %v2545, %v2583
    %v2774 = vmul.f32 %v2546, %v2584
    %v2775 = vmul.f32 %v2547, %v2585
    %v2776 = vmul.f32 %v2548, %v2586
    %v2777 = vmul.f32 %v2739, %v2701
    %v2778 = vmul.f32 %v2740, %v2702
    %v2779 = vmul.f32 %v2741, %v2703
    %v2780 = vmul.f32 %v2742, %v2704
    %v2781 = vmul.f32 %v2743, %v2705
    %v2782 = vmul.f32 %v2744, %v2706
    %v2783 = vmul.f32 %v2745, %v2707
    %v2784 = vmul.f32 %v2746, %v2708
    %v2785 = vmul.f32 %v2747, %v2709
    %v2786 = vmul.f32 %v2748, %v2710
    %v2787 = vmul.f32 %v2749, %v2711
    %v2788 = vmul.f32 %v2750, %v2712
    %v2789 = vmul.f32 %v2751, %v2713
    %v2790 = vmul.f32 %v2752, %v2714
    %v2791 = vmul.f32 %v2753, %v2715
    %v2792 = vmul.f32 %v2754, %v2716
    %v2793 = vmul.f32 %v2755, %v2717
    %v2794 = vmul.f32 %v2756, %v2718
    %v2795 = vmul.f32 %v2757, %v2719
    %v2796 = vmul.f32 %v2758, %v2720
    %v2797 = vmul.f32 %v2759, %v2721
    %v2798 = vmul.f32 %v2760, %v2722
    %v2799 = vmul.f32 %v2761, %v2723
    %v2800 = vmul.f32 %v2762, %v2724
    %v2801 = vmul.f32 %v2763, %v2725
    %v2802 = vmul.f32 %v2764, %v2726
    %v2803 = vmul.f32 %v2765, %v2727
    %v2804 = vmul.f32 %v2766, %v2728
    %v2805 = vmul.f32 %v2767, %v2729
    %v2806 = vmul.f32 %v2768, %v2730
    %v2807 = vmul.f32 %v2769, %v2731
    %v2808 = vmul.f32 %v2770, %v2732
    %v2809 = vmul.f32 %v2771, %v2733
    %v2810 = vmul.f32 %v2772, %v2734
    %v2811 = vmul.f32 %v2773, %v2735
    %v2812 = vmul.f32 %v2774, %v2736
    %v2813 = vmul.f32 %v2775, %v2737
    %v2814 = vmul.f32 %v2776, %v2738
    %v2815 = vadd.f32 %v2511, %v2777
    %v2816 = vadd.f32 %v2512, %v2778
    %v2817 = vadd.f32 %v2513, %v2779
    %v2818 = vadd.f32 %v2514, %v2780
    %v2819 = vadd.f32 %v2515, %v2781
    %v2820 = vadd.f32 %v2516, %v2782
    %v2821 = vadd.f32 %v2517, %v2783
    %v2822 = vadd.f32 %v2518, %v2784
    %v2823 = vadd.f32 %v2519, %v2785
    %v2824 = vadd.f32 %v2520, %v2786
    %v2825 = vadd.f32 %v2521, %v2787
    %v2826 = vadd.f32 %v2522, %v2788
    %v2827 = vadd.f32 %v2523, %v2789
    %v2828 = vadd.f32 %v2524, %v2790
    %v2829 = vadd.f32 %v2525, %v2791
    %v2830 = vadd.f32 %v2526, %v2792
    %v2831 = vadd.f32 %v2527, %v2793
    %v2832 = vadd.f32 %v2528, %v2794
    %v2833 = vadd.f32 %v2529, %v2795
    %v2834 = vadd.f32 %v2530, %v2796
    %v2835 = vadd.f32 %v2531, %v2797
    %v2836 = vadd.f32 %v2532, %v2798
    %v2837 = vadd.f32 %v2533, %v2799
    %v2838 = vadd.f32 %v2534, %v2800
    %v2839 = vadd.f32 %v2535, %v2801
    %v2840 = vadd.f32 %v2536, %v2802
    %v2841 = vadd.f32 %v2537, %v2803
    %v2842 = vadd.f32 %v2538, %v2804
    %v2843 = vadd.f32 %v2539, %v2805
    %v2844 = vadd.f32 %v2540, %v2806
    %v2845 = vadd.f32 %v2541, %v2807
    %v2846 = vadd.f32 %v2542, %v2808
    %v2847 = vadd.f32 %v2543, %v2809
    %v2848 = vadd.f32 %v2544, %v2810
    %v2849 = vadd.f32 %v2545, %v2811
    %v2850 = vadd.f32 %v2546, %v2812
    %v2851 = vadd.f32 %v2547, %v2813
    %v2852 = vadd.f32 %v2548, %v2814
    %v2853 = vmul.f32 %v2549, 2.4433157e-05
    %v2854 = vmul.f32 %v2550, 2.4433157e-05
    %v2855 = vmul.f32 %v2551, 2.4433157e-05
    %v2856 = vmul.f32 %v2552, 2.4433157e-05
    %v2857 = vmul.f32 %v2553, 2.4433157e-05
    %v2858 = vmul.f32 %v2554, 2.4433157e-05
    %v2859 = vmul.f32 %v2555, 2.4433157e-05
    %v2860 = vmul.f32 %v2556, 2.4433157e-05
    %v2861 = vmul.f32 %v2557, 2.4433157e-05
    %v2862 = vmul.f32 %v2558, 2.4433157e-05
    %v2863 = vmul.f32 %v2559, 2.4433157e-05
    %v2864 = vmul.f32 %v2560, 2.4433157e-05
    %v2865 = vmul.f32 %v2561, 2.4433157e-05
    %v2866 = vmul.f32 %v2562, 2.4433157e-05
    %v2867 = vmul.f32 %v2563, 2.4433157e-05
    %v2868 = vmul.f32 %v2564, 2.4433157e-05
    %v2869 = vmul.f32 %v2565, 2.4433157e-05
    %v2870 = vmul.f32 %v2566, 2.4433157e-05
    %v2871 = vmul.f32 %v2567, 2.4433157e-05
    %v2872 = vmul.f32 %v2568, 2.4433157e-05
    %v2873 = vmul.f32 %v2569, 2.4433157e-05
    %v2874 = vmul.f32 %v2570, 2.4433157e-05
    %v2875 = vmul.f32 %v2571, 2.4433157e-05
    %v2876 = vmul.f32 %v2572, 2.4433157e-05
    %v2877 = vmul.f32 %v2573, 2.4433157e-05
    %v2878 = vmul.f32 %v2574, 2.4433157e-05
    %v2879 = vmul.f32 %v2575, 2.4433157e-05
    %v2880 = vmul.f32 %v2576, 2.4433157e-05
    %v2881 = vmul.f32 %v2577, 2.4433157e-05
    %v2882 = vmul.f32 %v2578, 2.4433157e-05
    %v2883 = vmul.f32 %v2579, 2.4433157e-05
    %v2884 = vmul.f32 %v2580, 2.4433157e-05
    %v2885 = vmul.f32 %v2581, 2.4433157e-05
    %v2886 = vmul.f32 %v2582, 2.4433157e-05
    %v2887 = vmul.f32 %v2583, 2.4433157e-05
    %v2888 = vmul.f32 %v2584, 2.4433157e-05
    %v2889 = vmul.f32 %v2585, 2.4433157e-05
    %v2890 = vmul.f32 %v2586, 2.4433157e-05
    %v2891 = vsub.f32 %v2853, 0.0013887316
    %v2892 = vsub.f32 %v2854, 0.0013887316
    %v2893 = vsub.f32 %v2855, 0.0013887316
    %v2894 = vsub.f32 %v2856, 0.0013887316
    %v2895 = vsub.f32 %v2857, 0.0013887316
    %v2896 = vsub.f32 %v2858, 0.0013887316
    %v2897 = vsub.f32 %v2859, 0.0013887316
    %v2898 = vsub.f32 %v2860, 0.0013887316
    %v2899 = vsub.f32 %v2861, 0.0013887316
    %v2900 = vsub.f32 %v2862, 0.0013887316
    %v2901 = vsub.f32 %v2863, 0.0013887316
    %v2902 = vsub.f32 %v2864, 0.0013887316
    %v2903 = vsub.f32 %v2865, 0.0013887316
    %v2904 = vsub.f32 %v2866, 0.0013887316
    %v2905 = vsub.f32 %v2867, 0.0013887316
    %v2906 = vsub.f32 %v2868, 0.0013887316
    %v2907 = vsub.f32 %v2869, 0.0013887316
    %v2908 = vsub.f32 %v2870, 0.0013887316
    %v2909 = vsub.f32 %v2871, 0.0013887316
    %v2910 = vsub.f32 %v2872, 0.0013887316
    %v2911 = vsub.f32 %v2873, 0.0013887316
    %v2912 = vsub.f32 %v2874, 0.0013887316
    %v2913 = vsub.f32 %v2875, 0.0013887316
    %v2914 = vsub.f32 %v2876, 0.0013887316
    %v2915 = vsub.f32 %v2877, 0.0013887316
    %v2916 = vsub.f32 %v2878, 0.0013887316
    %v2917 = vsub.f32 %v2879, 0.0013887316
    %v2918 = vsub.f32 %v2880, 0.0013887316
    %v2919 = vsub.f32 %v2881, 0.0013887316
    %v2920 = vsub.f32 %v2882, 0.0013887316
    %v2921 = vsub.f32 %v2883, 0.0013887316
    %v2922 = vsub.f32 %v2884, 0.0013887316
    %v2923 = vsub.f32 %v2885, 0.0013887316
    %v2924 = vsub.f32 %v2886, 0.0013887316
    %v2925 = vsub.f32 %v2887, 0.0013887316
    %v2926 = vsub.f32 %v2888, 0.0013887316
    %v2927 = vsub.f32 %v2889, 0.0013887316
    %v2928 = vsub.f32 %v2890, 0.0013887316
    %v2929 = vmul.f32 %v2891, %v2549
    %v2930 = vmul.f32 %v2892, %v2550
    %v2931 = vmul.f32 %v2893, %v2551
    %v2932 = vmul.f32 %v2894, %v2552
    %v2933 = vmul.f32 %v2895, %v2553
    %v2934 = vmul.f32 %v2896, %v2554
    %v2935 = vmul.f32 %v2897, %v2555
    %v2936 = vmul.f32 %v2898, %v2556
    %v2937 = vmul.f32 %v2899, %v2557
    %v2938 = vmul.f32 %v2900, %v2558
    %v2939 = vmul.f32 %v2901, %v2559
    %v2940 = vmul.f32 %v2902, %v2560
    %v2941 = vmul.f32 %v2903, %v2561
    %v2942 = vmul.f32 %v2904, %v2562
    %v2943 = vmul.f32 %v2905, %v2563
    %v2944 = vmul.f32 %v2906, %v2564
    %v2945 = vmul.f32 %v2907, %v2565
    %v2946 = vmul.f32 %v2908, %v2566
    %v2947 = vmul.f32 %v2909, %v2567
    %v2948 = vmul.f32 %v2910, %v2568
    %v2949 = vmul.f32 %v2911, %v2569
    %v2950 = vmul.f32 %v2912, %v2570
    %v2951 = vmul.f32 %v2913, %v2571
    %v2952 = vmul.f32 %v2914, %v2572
    %v2953 = vmul.f32 %v2915, %v2573
    %v2954 = vmul.f32 %v2916, %v2574
    %v2955 = vmul.f32 %v2917, %v2575
    %v2956 = vmul.f32 %v2918, %v2576
    %v2957 = vmul.f32 %v2919, %v2577
    %v2958 = vmul.f32 %v2920, %v2578
    %v2959 = vmul.f32 %v2921, %v2579
    %v2960 = vmul.f32 %v2922, %v2580
    %v2961 = vmul.f32 %v2923, %v2581
    %v2962 = vmul.f32 %v2924, %v2582
    %v2963 = vmul.f32 %v2925, %v2583
    %v2964 = vmul.f32 %v2926, %v2584
    %v2965 = vmul.f32 %v2927, %v2585
    %v2966 = vmul.f32 %v2928, %v2586
    %v2967 = vadd.f32 %v2929, 0.041666646
    %v2968 = vadd.f32 %v2930, 0.041666646
    %v2969 = vadd.f32 %v2931, 0.041666646
    %v2970 = vadd.f32 %v2932, 0.041666646
    %v2971 = vadd.f32 %v2933, 0.041666646
    %v2972 = vadd.f32 %v2934, 0.041666646
    %v2973 = vadd.f32 %v2935, 0.041666646
    %v2974 = vadd.f32 %v2936, 0.041666646
    %v2975 = vadd.f32 %v2937, 0.041666646
    %v2976 = vadd.f32 %v2938, 0.041666646
    %v2977 = vadd.f32 %v2939, 0.041666646
    %v2978 = vadd.f32 %v2940, 0.041666646
    %v2979 = vadd.f32 %v2941, 0.041666646
    %v2980 = vadd.f32 %v2942, 0.041666646
    %v2981 = vadd.f32 %v2943, 0.041666646
    %v2982 = vadd.f32 %v2944, 0.041666646
    %v2983 = vadd.f32 %v2945, 0.041666646
    %v2984 = vadd.f32 %v2946, 0.041666646
    %v2985 = vadd.f32 %v2947, 0.041666646
    %v2986 = vadd.f32 %v2948, 0.041666646
    %v2987 = vadd.f32 %v2949, 0.041666646
    %v2988 = vadd.f32 %v2950, 0.041666646
    %v2989 = vadd.f32 %v2951, 0.041666646
    %v2990 = vadd.f32 %v2952, 0.041666646
    %v2991 = vadd.f32 %v2953, 0.041666646
    %v2992 = vadd.f32 %v2954, 0.041666646
    %v2993 = vadd.f32 %v2955, 0.041666646
    %v2994 = vadd.f32 %v2956, 0.041666646
    %v2995 = vadd.f32 %v2957, 0.041666646
    %v2996 = vadd.f32 %v2958, 0.041666646
    %v2997 = vadd.f32 %v2959, 0.041666646
    %v2998 = vadd.f32 %v2960, 0.041666646
    %v2999 = vadd.f32 %v2961, 0.041666646
    %v3000 = vadd.f32 %v2962, 0.041666646
    %v3001 = vadd.f32 %v2963, 0.041666646
    %v3002 = vadd.f32 %v2964, 0.041666646
    %v3003 = vadd.f32 %v2965, 0.041666646
    %v3004 = vadd.f32 %v2966, 0.041666646
    %v3005 = vmul.f32 %v2549, 0.5
    %v3006 = vmul.f32 %v2550, 0.5
    %v3007 = vmul.f32 %v2551, 0.5
    %v3008 = vmul.f32 %v2552, 0.5
    %v3009 = vmul.f32 %v2553, 0.5
    %v3010 = vmul.f32 %v2554, 0.5
    %v3011 = vmul.f32 %v2555, 0.5
    %v3012 = vmul.f32 %v2556, 0.5
    %v3013 = vmul.f32 %v2557, 0.5
    %v3014 = vmul.f32 %v2558, 0.5
    %v3015 = vmul.f32 %v2559, 0.5
    %v3016 = vmul.f32 %v2560, 0.5
    %v3017 = vmul.f32 %v2561, 0.5
    %v3018 = vmul.f32 %v2562, 0.5
    %v3019 = vmul.f32 %v2563, 0.5
    %v3020 = vmul.f32 %v2564, 0.5
    %v3021 = vmul.f32 %v2565, 0.5
    %v3022 = vmul.f32 %v2566, 0.5
    %v3023 = vmul.f32 %v2567, 0.5
    %v3024 = vmul.f32 %v2568, 0.5
    %v3025 = vmul.f32 %v2569, 0.5
    %v3026 = vmul.f32 %v2570, 0.5
    %v3027 = vmul.f32 %v2571, 0.5
    %v3028 = vmul.f32 %v2572, 0.5
    %v3029 = vmul.f32 %v2573, 0.5
    %v3030 = vmul.f32 %v2574, 0.5
    %v3031 = vmul.f32 %v2575, 0.5
    %v3032 = vmul.f32 %v2576, 0.5
    %v3033 = vmul.f32 %v2577, 0.5
    %v3034 = vmul.f32 %v2578, 0.5
    %v3035 = vmul.f32 %v2579, 0.5
    %v3036 = vmul.f32 %v2580, 0.5
    %v3037 = vmul.f32 %v2581, 0.5
    %v3038 = vmul.f32 %v2582, 0.5
    %v3039 = vmul.f32 %v2583, 0.5
    %v3040 = vmul.f32 %v2584, 0.5
    %v3041 = vmul.f32 %v2585, 0.5
    %v3042 = vmul.f32 %v2586, 0.5
    %v3043 = vsub.f32 1.0, %v3005
    %v3044 = vsub.f32 1.0, %v3006
    %v3045 = vsub.f32 1.0, %v3007
    %v3046 = vsub.f32 1.0, %v3008
    %v3047 = vsub.f32 1.0, %v3009
    %v3048 = vsub.f32 1.0, %v3010
    %v3049 = vsub.f32 1.0, %v3011
    %v3050 = vsub.f32 1.0, %v3012
    %v3051 = vsub.f32 1.0, %v3013
    %v3052 = vsub.f32 1.0, %v3014
    %v3053 = vsub.f32 1.0, %v3015
    %v3054 = vsub.f32 1.0, %v3016
    %v3055 = vsub.f32 1.0, %v3017
    %v3056 = vsub.f32 1.0, %v3018
    %v3057 = vsub.f32 1.0, %v3019
    %v3058 = vsub.f32 1.0, %v3020
    %v3059 = vsub.f32 1.0, %v3021
    %v3060 = vsub.f32 1.0, %v3022
    %v3061 = vsub.f32 1.0, %v3023
    %v3062 = vsub.f32 1.0, %v3024
    %v3063 = vsub.f32 1.0, %v3025
    %v3064 = vsub.f32 1.0, %v3026
    %v3065 = vsub.f32 1.0, %v3027
    %v3066 = vsub.f32 1.0, %v3028
    %v3067 = vsub.f32 1.0, %v3029
    %v3068 = vsub.f32 1.0, %v3030
    %v3069 = vsub.f32 1.0, %v3031
    %v3070 = vsub.f32 1.0, %v3032
    %v3071 = vsub.f32 1.0, %v3033
    %v3072 = vsub.f32 1.0, %v3034
    %v3073 = vsub.f32 1.0, %v3035
    %v3074 = vsub.f32 1.0, %v3036
    %v3075 = vsub.f32 1.0, %v3037
    %v3076 = vsub.f32 1.0, %v3038
    %v3077 = vsub.f32 1.0, %v3039
    %v3078 = vsub.f32 1.0, %v3040
    %v3079 = vsub.f32 1.0, %v3041
    %v3080 = vsub.f32 1.0, %v3042
    %v3081 = vmul.f32 %v2549, %v2549
    %v3082 = vmul.f32 %v2550, %v2550
    %v3083 = vmul.f32 %v2551, %v2551
    %v3084 = vmul.f32 %v2552, %v2552
    %v3085 = vmul.f32 %v2553, %v2553
    %v3086 = vmul.f32 %v2554, %v2554
    %v3087 = vmul.f32 %v2555, %v2555
    %v3088 = vmul.f32 %v2556, %v2556
    %v3089 = vmul.f32 %v2557, %v2557
    %v3090 = vmul.f32 %v2558, %v2558
    %v3091 = vmul.f32 %v2559, %v2559
    %v3092 = vmul.f32 %v2560, %v2560
    %v3093 = vmul.f32 %v2561, %v2561
    %v3094 = vmul.f32 %v2562, %v2562
    %v3095 = vmul.f32 %v2563, %v2563
    %v3096 = vmul.f32 %v2564, %v2564
    %v3097 = vmul.f32 %v2565, %v2565
    %v3098 = vmul.f32 %v2566, %v2566
    %v3099 = vmul.f32 %v2567, %v2567
    %v3100 = vmul.f32 %v2568, %v2568
    %v3101 = vmul.f32 %v2569, %v2569
    %v3102 = vmul.f32 %v2570, %v2570
    %v3103 = vmul.f32 %v2571, %v2571
    %v3104 = vmul.f32 %v2572, %v2572
    %v3105 = vmul.f32 %v2573, %v2573
    %v3106 = vmul.f32 %v2574, %v2574
    %v3107 = vmul.f32 %v2575, %v2575
    %v3108 = vmul.f32 %v2576, %v2576
    %v3109 = vmul.f32 %v2577, %v2577
    %v3110 = vmul.f32 %v2578, %v2578
    %v3111 = vmul.f32 %v2579, %v2579
    %v3112 = vmul.f32 %v2580, %v2580
    %v3113 = vmul.f32 %v2581, %v2581
    %v3114 = vmul.f32 %v2582, %v2582
    %v3115 = vmul.f32 %v2583, %v2583
    %v3116 = vmul.f32 %v2584, %v2584
    %v3117 = vmul.f32 %v2585, %v2585
    %v3118 = vmul.f32 %v2586, %v2586
    %v3119 = vmul.f32 %v3081, %v2967
    %v3120 = vmul.f32 %v3082, %v2968
    %v3121 = vmul.f32 %v3083, %v2969
    %v3122 = vmul.f32 %v3084, %v2970
    %v3123 = vmul.f32 %v3085, %v2971
    %v3124 = vmul.f32 %v3086, %v2972
    %v3125 = vmul.f32 %v3087, %v2973
    %v3126 = vmul.f32 %v3088, %v2974
    %v3127 = vmul.f32 %v3089, %v2975
    %v3128 = vmul.f32 %v3090, %v2976
    %v3129 = vmul.f32 %v3091, %v2977
    %v3130 = vmul.f32 %v3092, %v2978
    %v3131 = vmul.f32 %v3093, %v2979
    %v3132 = vmul.f32 %v3094, %v2980
    %v3133 = vmul.f32 %v3095, %v2981
    %v3134 = vmul.f32 %v3096, %v2982
    %v3135 = vmul.f32 %v3097, %v2983
    %v3136 = vmul.f32 %v3098, %v2984
    %v3137 = vmul.f32 %v3099, %v2985
    %v3138 = vmul.f32 %v3100, %v2986
    %v3139 = vmul.f32 %v3101, %v2987
    %v3140 = vmul.f32 %v3102, %v2988
    %v3141 = vmul.f32 %v3103, %v2989
    %v3142 = vmul.f32 %v3104, %v2990
    %v3143 = vmul.f32 %v3105, %v2991
    %v3144 = vmul.f32 %v3106, %v2992
    %v3145 = vmul.f32 %v3107, %v2993
    %v3146 = vmul.f32 %v3108, %v2994
    %v3147 = vmul.f32 %v3109, %v2995
    %v3148 = vmul.f32 %v3110, %v2996
    %v3149 = vmul.f32 %v3111, %v2997
    %v3150 = vmul.f32 %v3112, %v2998
    %v3151 = vmul.f32 %v3113, %v2999
    %v3152 = vmul.f32 %v3114, %v3000
    %v3153 = vmul.f32 %v3115, %v3001
    %v3154 = vmul.f32 %v3116, %v3002
    %v3155 = vmul.f32 %v3117, %v3003
    %v3156 = vmul.f32 %v3118, %v3004
    %v3157 = vadd.f32 %v3043, %v3119
    %v3158 = vadd.f32 %v3044, %v3120
    %v3159 = vadd.f32 %v3045, %v3121
    %v3160 = vadd.f32 %v3046, %v3122
    %v3161 = vadd.f32 %v3047, %v3123
    %v3162 = vadd.f32 %v3048, %v3124
    %v3163 = vadd.f32 %v3049, %v3125
    %v3164 = vadd.f32 %v3050, %v3126
    %v3165 = vadd.f32 %v3051, %v3127
    %v3166 = vadd.f32 %v3052, %v3128
    %v3167 = vadd.f32 %v3053, %v3129
    %v3168 = vadd.f32 %v3054, %v3130
    %v3169 = vadd.f32 %v3055, %v3131
    %v3170 = vadd.f32 %v3056, %v3132
    %v3171 = vadd.f32 %v3057, %v3133
    %v3172 = vadd.f32 %v3058, %v3134
    %v3173 = vadd.f32 %v3059, %v3135
    %v3174 = vadd.f32 %v3060, %v3136
    %v3175 = vadd.f32 %v3061, %v3137
    %v3176 = vadd.f32 %v3062, %v3138
    %v3177 = vadd.f32 %v3063, %v3139
    %v3178 = vadd.f32 %v3064, %v3140
    %v3179 = vadd.f32 %v3065, %v3141
    %v3180 = vadd.f32 %v3066, %v3142
    %v3181 = vadd.f32 %v3067, %v3143
    %v3182 = vadd.f32 %v3068, %v3144
    %v3183 = vadd.f32 %v3069, %v3145
    %v3184 = vadd.f32 %v3070, %v3146
    %v3185 = vadd.f32 %v3071, %v3147
    %v3186 = vadd.f32 %v3072, %v3148
    %v3187 = vadd.f32 %v3073, %v3149
    %v3188 = vadd.f32 %v3074, %v3150
    %v3189 = vadd.f32 %v3075, %v3151
    %v3190 = vadd.f32 %v3076, %v3152
    %v3191 = vadd.f32 %v3077, %v3153
    %v3192 = vadd.f32 %v3078, %v3154
    %v3193 = vadd.f32 %v3079, %v3155
    %v3194 = vadd.f32 %v3080, %v3156
    %v3195 = vcvt.f32.s32.to.zero.pseudo %v2283
    %v3196 = vcvt.f32.s32.to.zero.pseudo %v2284
    %v3197 = vcvt.f32.s32.to.zero.pseudo %v2285
    %v3198 = vcvt.f32.s32.to.zero.pseudo %v2286
    %v3199 = vcvt.f32.s32.to.zero.pseudo %v2287
    %v3200 = vcvt.f32.s32.to.zero.pseudo %v2288
    %v3201 = vcvt.f32.s32.to.zero.pseudo %v2289
    %v3202 = vcvt.f32.s32.to.zero.pseudo %v2290
    %v3203 = vcvt.f32.s32.to.zero.pseudo %v2291
    %v3204 = vcvt.f32.s32.to.zero.pseudo %v2292
    %v3205 = vcvt.f32.s32.to.zero.pseudo %v2293
    %v3206 = vcvt.f32.s32.to.zero.pseudo %v2294
    %v3207 = vcvt.f32.s32.to.zero.pseudo %v2295
    %v3208 = vcvt.f32.s32.to.zero.pseudo %v2296
    %v3209 = vcvt.f32.s32.to.zero.pseudo %v2297
    %v3210 = vcvt.f32.s32.to.zero.pseudo %v2298
    %v3211 = vcvt.f32.s32.to.zero.pseudo %v2299
    %v3212 = vcvt.f32.s32.to.zero.pseudo %v2300
    %v3213 = vcvt.f32.s32.to.zero.pseudo %v2301
    %v3214 = vcvt.f32.s32.to.zero.pseudo %v2302
    %v3215 = vcvt.f32.s32.to.zero.pseudo %v2303
    %v3216 = vcvt.f32.s32.to.zero.pseudo %v2304
    %v3217 = vcvt.f32.s32.to.zero.pseudo %v2305
    %v3218 = vcvt.f32.s32.to.zero.pseudo %v2306
    %v3219 = vcvt.f32.s32.to.zero.pseudo %v2307
    %v3220 = vcvt.f32.s32.to.zero.pseudo %v2308
    %v3221 = vcvt.f32.s32.to.zero.pseudo %v2309
    %v3222 = vcvt.f32.s32.to.zero.pseudo %v2310
    %v3223 = vcvt.f32.s32.to.zero.pseudo %v2311
    %v3224 = vcvt.f32.s32.to.zero.pseudo %v2312
    %v3225 = vcvt.f32.s32.to.zero.pseudo %v2313
    %v3226 = vcvt.f32.s32.to.zero.pseudo %v2314
    %v3227 = vcvt.f32.s32.to.zero.pseudo %v2315
    %v3228 = vcvt.f32.s32.to.zero.pseudo %v2316
    %v3229 = vcvt.f32.s32.to.zero.pseudo %v2317
    %v3230 = vcvt.f32.s32.to.zero.pseudo %v2318
    %v3231 = vcvt.f32.s32.to.zero.pseudo %v2319
    %v3232 = vcvt.f32.s32.to.zero.pseudo %v2320
    %v3233 = vand.u32 %v3195, 1
    %v3234 = vand.u32 %v3196, 1
    %v3235 = vand.u32 %v3197, 1
    %v3236 = vand.u32 %v3198, 1
    %v3237 = vand.u32 %v3199, 1
    %v3238 = vand.u32 %v3200, 1
    %v3239 = vand.u32 %v3201, 1
    %v3240 = vand.u32 %v3202, 1
    %v3241 = vand.u32 %v3203, 1
    %v3242 = vand.u32 %v3204, 1
    %v3243 = vand.u32 %v3205, 1
    %v3244 = vand.u32 %v3206, 1
    %v3245 = vand.u32 %v3207, 1
    %v3246 = vand.u32 %v3208, 1
    %v3247 = vand.u32 %v3209, 1
    %v3248 = vand.u32 %v3210, 1
    %v3249 = vand.u32 %v3211, 1
    %v3250 = vand.u32 %v3212, 1
    %v3251 = vand.u32 %v3213, 1
    %v3252 = vand.u32 %v3214, 1
    %v3253 = vand.u32 %v3215, 1
    %v3254 = vand.u32 %v3216, 1
    %v3255 = vand.u32 %v3217, 1
    %v3256 = vand.u32 %v3218, 1
    %v3257 = vand.u32 %v3219, 1
    %v3258 = vand.u32 %v3220, 1
    %v3259 = vand.u32 %v3221, 1
    %v3260 = vand.u32 %v3222, 1
    %v3261 = vand.u32 %v3223, 1
    %v3262 = vand.u32 %v3224, 1
    %v3263 = vand.u32 %v3225, 1
    %v3264 = vand.u32 %v3226, 1
    %v3265 = vand.u32 %v3227, 1
    %v3266 = vand.u32 %v3228, 1
    %v3267 = vand.u32 %v3229, 1
    %v3268 = vand.u32 %v3230, 1
    %v3269 = vand.u32 %v3231, 1
    %v3270 = vand.u32 %v3232, 1
    %vm3271 = vcmp.ne.s32.totalorder %v3233, 0
    %vm3272 = vcmp.ne.s32.totalorder %v3234, 0
    %vm3273 = vcmp.ne.s32.totalorder %v3235, 0
    %vm3274 = vcmp.ne.s32.totalorder %v3236, 0
    %vm3275 = vcmp.ne.s32.totalorder %v3237, 0
    %vm3276 = vcmp.ne.s32.totalorder %v3238, 0
    %vm3277 = vcmp.ne.s32.totalorder %v3239, 0
    %vm3278 = vcmp.ne.s32.totalorder %v3240, 0
    %vm3279 = vcmp.ne.s32.totalorder %v3241, 0
    %vm3280 = vcmp.ne.s32.totalorder %v3242, 0
    %vm3281 = vcmp.ne.s32.totalorder %v3243, 0
    %vm3282 = vcmp.ne.s32.totalorder %v3244, 0
    %vm3283 = vcmp.ne.s32.totalorder %v3245, 0
    %vm3284 = vcmp.ne.s32.totalorder %v3246, 0
    %vm3285 = vcmp.ne.s32.totalorder %v3247, 0
    %vm3286 = vcmp.ne.s32.totalorder %v3248, 0
    %vm3287 = vcmp.ne.s32.totalorder %v3249, 0
    %vm3288 = vcmp.ne.s32.totalorder %v3250, 0
    %vm3289 = vcmp.ne.s32.totalorder %v3251, 0
    %vm3290 = vcmp.ne.s32.totalorder %v3252, 0
    %vm3291 = vcmp.ne.s32.totalorder %v3253, 0
    %vm3292 = vcmp.ne.s32.totalorder %v3254, 0
    %vm3293 = vcmp.ne.s32.totalorder %v3255, 0
    %vm3294 = vcmp.ne.s32.totalorder %v3256, 0
    %vm3295 = vcmp.ne.s32.totalorder %v3257, 0
    %vm3296 = vcmp.ne.s32.totalorder %v3258, 0
    %vm3297 = vcmp.ne.s32.totalorder %v3259, 0
    %vm3298 = vcmp.ne.s32.totalorder %v3260, 0
    %vm3299 = vcmp.ne.s32.totalorder %v3261, 0
    %vm3300 = vcmp.ne.s32.totalorder %v3262, 0
    %vm3301 = vcmp.ne.s32.totalorder %v3263, 0
    %vm3302 = vcmp.ne.s32.totalorder %v3264, 0
    %vm3303 = vcmp.ne.s32.totalorder %v3265, 0
    %vm3304 = vcmp.ne.s32.totalorder %v3266, 0
    %vm3305 = vcmp.ne.s32.totalorder %v3267, 0
    %vm3306 = vcmp.ne.s32.totalorder %v3268, 0
    %vm3307 = vcmp.ne.s32.totalorder %v3269, 0
    %vm3308 = vcmp.ne.s32.totalorder %v3270, 0
    %v3309 = vand.u32 %v3195, 2
    %v3310 = vand.u32 %v3196, 2
    %v3311 = vand.u32 %v3197, 2
    %v3312 = vand.u32 %v3198, 2
    %v3313 = vand.u32 %v3199, 2
    %v3314 = vand.u32 %v3200, 2
    %v3315 = vand.u32 %v3201, 2
    %v3316 = vand.u32 %v3202, 2
    %v3317 = vand.u32 %v3203, 2
    %v3318 = vand.u32 %v3204, 2
    %v3319 = vand.u32 %v3205, 2
    %v3320 = vand.u32 %v3206, 2
    %v3321 = vand.u32 %v3207, 2
    %v3322 = vand.u32 %v3208, 2
    %v3323 = vand.u32 %v3209, 2
    %v3324 = vand.u32 %v3210, 2
    %v3325 = vand.u32 %v3211, 2
    %v3326 = vand.u32 %v3212, 2
    %v3327 = vand.u32 %v3213, 2
    %v3328 = vand.u32 %v3214, 2
    %v3329 = vand.u32 %v3215, 2
    %v3330 = vand.u32 %v3216, 2
    %v3331 = vand.u32 %v3217, 2
    %v3332 = vand.u32 %v3218, 2
    %v3333 = vand.u32 %v3219, 2
    %v3334 = vand.u32 %v3220, 2
    %v3335 = vand.u32 %v3221, 2
    %v3336 = vand.u32 %v3222, 2
    %v3337 = vand.u32 %v3223, 2
    %v3338 = vand.u32 %v3224, 2
    %v3339 = vand.u32 %v3225, 2
    %v3340 = vand.u32 %v3226, 2
    %v3341 = vand.u32 %v3227, 2
    %v3342 = vand.u32 %v3228, 2
    %v3343 = vand.u32 %v3229, 2
    %v3344 = vand.u32 %v3230, 2
    %v3345 = vand.u32 %v3231, 2
    %v3346 = vand.u32 %v3232, 2
    %vm3347 = vcmp.ne.s32.totalorder %v3309, 0
    %vm3348 = vcmp.ne.s32.totalorder %v3310, 0
    %vm3349 = vcmp.ne.s32.totalorder %v3311, 0
    %vm3350 = vcmp.ne.s32.totalorder %v3312, 0
    %vm3351 = vcmp.ne.s32.totalorder %v3313, 0
    %vm3352 = vcmp.ne.s32.totalorder %v3314, 0
    %vm3353 = vcmp.ne.s32.totalorder %v3315, 0
    %vm3354 = vcmp.ne.s32.totalorder %v3316, 0
    %vm3355 = vcmp.ne.s32.totalorder %v3317, 0
    %vm3356 = vcmp.ne.s32.totalorder %v3318, 0
    %vm3357 = vcmp.ne.s32.totalorder %v3319, 0
    %vm3358 = vcmp.ne.s32.totalorder %v3320, 0
    %vm3359 = vcmp.ne.s32.totalorder %v3321, 0
    %vm3360 = vcmp.ne.s32.totalorder %v3322, 0
    %vm3361 = vcmp.ne.s32.totalorder %v3323, 0
    %vm3362 = vcmp.ne.s32.totalorder %v3324, 0
    %vm3363 = vcmp.ne.s32.totalorder %v3325, 0
    %vm3364 = vcmp.ne.s32.totalorder %v3326, 0
    %vm3365 = vcmp.ne.s32.totalorder %v3327, 0
    %vm3366 = vcmp.ne.s32.totalorder %v3328, 0
    %vm3367 = vcmp.ne.s32.totalorder %v3329, 0
    %vm3368 = vcmp.ne.s32.totalorder %v3330, 0
    %vm3369 = vcmp.ne.s32.totalorder %v3331, 0
    %vm3370 = vcmp.ne.s32.totalorder %v3332, 0
    %vm3371 = vcmp.ne.s32.totalorder %v3333, 0
    %vm3372 = vcmp.ne.s32.totalorder %v3334, 0
    %vm3373 = vcmp.ne.s32.totalorder %v3335, 0
    %vm3374 = vcmp.ne.s32.totalorder %v3336, 0
    %vm3375 = vcmp.ne.s32.totalorder %v3337, 0
    %vm3376 = vcmp.ne.s32.totalorder %v3338, 0
    %vm3377 = vcmp.ne.s32.totalorder %v3339, 0
    %vm3378 = vcmp.ne.s32.totalorder %v3340, 0
    %vm3379 = vcmp.ne.s32.totalorder %v3341, 0
    %vm3380 = vcmp.ne.s32.totalorder %v3342, 0
    %vm3381 = vcmp.ne.s32.totalorder %v3343, 0
    %vm3382 = vcmp.ne.s32.totalorder %v3344, 0
    %vm3383 = vcmp.ne.s32.totalorder %v3345, 0
    %vm3384 = vcmp.ne.s32.totalorder %v3346, 0
    %v3385 = vadd.s32 %v3195, 1
    %v3386 = vadd.s32 %v3196, 1
    %v3387 = vadd.s32 %v3197, 1
    %v3388 = vadd.s32 %v3198, 1
    %v3389 = vadd.s32 %v3199, 1
    %v3390 = vadd.s32 %v3200, 1
    %v3391 = vadd.s32 %v3201, 1
    %v3392 = vadd.s32 %v3202, 1
    %v3393 = vadd.s32 %v3203, 1
    %v3394 = vadd.s32 %v3204, 1
    %v3395 = vadd.s32 %v3205, 1
    %v3396 = vadd.s32 %v3206, 1
    %v3397 = vadd.s32 %v3207, 1
    %v3398 = vadd.s32 %v3208, 1
    %v3399 = vadd.s32 %v3209, 1
    %v3400 = vadd.s32 %v3210, 1
    %v3401 = vadd.s32 %v3211, 1
    %v3402 = vadd.s32 %v3212, 1
    %v3403 = vadd.s32 %v3213, 1
    %v3404 = vadd.s32 %v3214, 1
    %v3405 = vadd.s32 %v3215, 1
    %v3406 = vadd.s32 %v3216, 1
    %v3407 = vadd.s32 %v3217, 1
    %v3408 = vadd.s32 %v3218, 1
    %v3409 = vadd.s32 %v3219, 1
    %v3410 = vadd.s32 %v3220, 1
    %v3411 = vadd.s32 %v3221, 1
    %v3412 = vadd.s32 %v3222, 1
    %v3413 = vadd.s32 %v3223, 1
    %v3414 = vadd.s32 %v3224, 1
    %v3415 = vadd.s32 %v3225, 1
    %v3416 = vadd.s32 %v3226, 1
    %v3417 = vadd.s32 %v3227, 1
    %v3418 = vadd.s32 %v3228, 1
    %v3419 = vadd.s32 %v3229, 1
    %v3420 = vadd.s32 %v3230, 1
    %v3421 = vadd.s32 %v3231, 1
    %v3422 = vadd.s32 %v3232, 1
    %v3423 = vand.u32 %v3385, 2
    %v3424 = vand.u32 %v3386, 2
    %v3425 = vand.u32 %v3387, 2
    %v3426 = vand.u32 %v3388, 2
    %v3427 = vand.u32 %v3389, 2
    %v3428 = vand.u32 %v3390, 2
    %v3429 = vand.u32 %v3391, 2
    %v3430 = vand.u32 %v3392, 2
    %v3431 = vand.u32 %v3393, 2
    %v3432 = vand.u32 %v3394, 2
    %v3433 = vand.u32 %v3395, 2
    %v3434 = vand.u32 %v3396, 2
    %v3435 = vand.u32 %v3397, 2
    %v3436 = vand.u32 %v3398, 2
    %v3437 = vand.u32 %v3399, 2
    %v3438 = vand.u32 %v3400, 2
    %v3439 = vand.u32 %v3401, 2
    %v3440 = vand.u32 %v3402, 2
    %v3441 = vand.u32 %v3403, 2
    %v3442 = vand.u32 %v3404, 2
    %v3443 = vand.u32 %v3405, 2
    %v3444 = vand.u32 %v3406, 2
    %v3445 = vand.u32 %v3407, 2
    %v3446 = vand.u32 %v3408, 2
    %v3447 = vand.u32 %v3409, 2
    %v3448 = vand.u32 %v3410, 2
    %v3449 = vand.u32 %v3411, 2
    %v3450 = vand.u32 %v3412, 2
    %v3451 = vand.u32 %v3413, 2
    %v3452 = vand.u32 %v3414, 2
    %v3453 = vand.u32 %v3415, 2
    %v3454 = vand.u32 %v3416, 2
    %v3455 = vand.u32 %v3417, 2
    %v3456 = vand.u32 %v3418, 2
    %v3457 = vand.u32 %v3419, 2
    %v3458 = vand.u32 %v3420, 2
    %v3459 = vand.u32 %v3421, 2
    %v3460 = vand.u32 %v3422, 2
    %vm3461 = vcmp.ne.s32.totalorder %v3423, 0
    %vm3462 = vcmp.ne.s32.totalorder %v3424, 0
    %vm3463 = vcmp.ne.s32.totalorder %v3425, 0
    %vm3464 = vcmp.ne.s32.totalorder %v3426, 0
    %vm3465 = vcmp.ne.s32.totalorder %v3427, 0
    %vm3466 = vcmp.ne.s32.totalorder %v3428, 0
    %vm3467 = vcmp.ne.s32.totalorder %v3429, 0
    %vm3468 = vcmp.ne.s32.totalorder %v3430, 0
    %vm3469 = vcmp.ne.s32.totalorder %v3431, 0
    %vm3470 = vcmp.ne.s32.totalorder %v3432, 0
    %vm3471 = vcmp.ne.s32.totalorder %v3433, 0
    %vm3472 = vcmp.ne.s32.totalorder %v3434, 0
    %vm3473 = vcmp.ne.s32.totalorder %v3435, 0
    %vm3474 = vcmp.ne.s32.totalorder %v3436, 0
    %vm3475 = vcmp.ne.s32.totalorder %v3437, 0
    %vm3476 = vcmp.ne.s32.totalorder %v3438, 0
    %vm3477 = vcmp.ne.s32.totalorder %v3439, 0
    %vm3478 = vcmp.ne.s32.totalorder %v3440, 0
    %vm3479 = vcmp.ne.s32.totalorder %v3441, 0
    %vm3480 = vcmp.ne.s32.totalorder %v3442, 0
    %vm3481 = vcmp.ne.s32.totalorder %v3443, 0
    %vm3482 = vcmp.ne.s32.totalorder %v3444, 0
    %vm3483 = vcmp.ne.s32.totalorder %v3445, 0
    %vm3484 = vcmp.ne.s32.totalorder %v3446, 0
    %vm3485 = vcmp.ne.s32.totalorder %v3447, 0
    %vm3486 = vcmp.ne.s32.totalorder %v3448, 0
    %vm3487 = vcmp.ne.s32.totalorder %v3449, 0
    %vm3488 = vcmp.ne.s32.totalorder %v3450, 0
    %vm3489 = vcmp.ne.s32.totalorder %v3451, 0
    %vm3490 = vcmp.ne.s32.totalorder %v3452, 0
    %vm3491 = vcmp.ne.s32.totalorder %v3453, 0
    %vm3492 = vcmp.ne.s32.totalorder %v3454, 0
    %vm3493 = vcmp.ne.s32.totalorder %v3455, 0
    %vm3494 = vcmp.ne.s32.totalorder %v3456, 0
    %vm3495 = vcmp.ne.s32.totalorder %v3457, 0
    %vm3496 = vcmp.ne.s32.totalorder %v3458, 0
    %vm3497 = vcmp.ne.s32.totalorder %v3459, 0
    %vm3498 = vcmp.ne.s32.totalorder %v3460, 0
    %v3499 = vsel %vm3271, %v3157, %v2815
    %v3500 = vsel %vm3272, %v3158, %v2816
    %v3501 = vsel %vm3273, %v3159, %v2817
    %v3502 = vsel %vm3274, %v3160, %v2818
    %v3503 = vsel %vm3275, %v3161, %v2819
    %v3504 = vsel %vm3276, %v3162, %v2820
    %v3505 = vsel %vm3277, %v3163, %v2821
    %v3506 = vsel %vm3278, %v3164, %v2822
    %v3507 = vsel %vm3279, %v3165, %v2823
    %v3508 = vsel %vm3280, %v3166, %v2824
    %v3509 = vsel %vm3281, %v3167, %v2825
    %v3510 = vsel %vm3282, %v3168, %v2826
    %v3511 = vsel %vm3283, %v3169, %v2827
    %v3512 = vsel %vm3284, %v3170, %v2828
    %v3513 = vsel %vm3285, %v3171, %v2829
    %v3514 = vsel %vm3286, %v3172, %v2830
    %v3515 = vsel %vm3287, %v3173, %v2831
    %v3516 = vsel %vm3288, %v3174, %v2832
    %v3517 = vsel %vm3289, %v3175, %v2833
    %v3518 = vsel %vm3290, %v3176, %v2834
    %v3519 = vsel %vm3291, %v3177, %v2835
    %v3520 = vsel %vm3292, %v3178, %v2836
    %v3521 = vsel %vm3293, %v3179, %v2837
    %v3522 = vsel %vm3294, %v3180, %v2838
    %v3523 = vsel %vm3295, %v3181, %v2839
    %v3524 = vsel %vm3296, %v3182, %v2840
    %v3525 = vsel %vm3297, %v3183, %v2841
    %v3526 = vsel %vm3298, %v3184, %v2842
    %v3527 = vsel %vm3299, %v3185, %v2843
    %v3528 = vsel %vm3300, %v3186, %v2844
    %v3529 = vsel %vm3301, %v3187, %v2845
    %v3530 = vsel %vm3302, %v3188, %v2846
    %v3531 = vsel %vm3303, %v3189, %v2847
    %v3532 = vsel %vm3304, %v3190, %v2848
    %v3533 = vsel %vm3305, %v3191, %v2849
    %v3534 = vsel %vm3306, %v3192, %v2850
    %v3535 = vsel %vm3307, %v3193, %v2851
    %v3536 = vsel %vm3308, %v3194, %v2852
    %v3537 = vsel %vm3271, %v2815, %v3157
    %v3538 = vsel %vm3272, %v2816, %v3158
    %v3539 = vsel %vm3273, %v2817, %v3159
    %v3540 = vsel %vm3274, %v2818, %v3160
    %v3541 = vsel %vm3275, %v2819, %v3161
    %v3542 = vsel %vm3276, %v2820, %v3162
    %v3543 = vsel %vm3277, %v2821, %v3163
    %v3544 = vsel %vm3278, %v2822, %v3164
    %v3545 = vsel %vm3279, %v2823, %v3165
    %v3546 = vsel %vm3280, %v2824, %v3166
    %v3547 = vsel %vm3281, %v2825, %v3167
    %v3548 = vsel %vm3282, %v2826, %v3168
    %v3549 = vsel %vm3283, %v2827, %v3169
    %v3550 = vsel %vm3284, %v2828, %v3170
    %v3551 = vsel %vm3285, %v2829, %v3171
    %v3552 = vsel %vm3286, %v2830, %v3172
    %v3553 = vsel %vm3287, %v2831, %v3173
    %v3554 = vsel %vm3288, %v2832, %v3174
    %v3555 = vsel %vm3289, %v2833, %v3175
    %v3556 = vsel %vm3290, %v2834, %v3176
    %v3557 = vsel %vm3291, %v2835, %v3177
    %v3558 = vsel %vm3292, %v2836, %v3178
    %v3559 = vsel %vm3293, %v2837, %v3179
    %v3560 = vsel %vm3294, %v2838, %v3180
    %v3561 = vsel %vm3295, %v2839, %v3181
    %v3562 = vsel %vm3296, %v2840, %v3182
    %v3563 = vsel %vm3297, %v2841, %v3183
    %v3564 = vsel %vm3298, %v2842, %v3184
    %v3565 = vsel %vm3299, %v2843, %v3185
    %v3566 = vsel %vm3300, %v2844, %v3186
    %v3567 = vsel %vm3301, %v2845, %v3187
    %v3568 = vsel %vm3302, %v2846, %v3188
    %v3569 = vsel %vm3303, %v2847, %v3189
    %v3570 = vsel %vm3304, %v2848, %v3190
    %v3571 = vsel %vm3305, %v2849, %v3191
    %v3572 = vsel %vm3306, %v2850, %v3192
    %v3573 = vsel %vm3307, %v2851, %v3193
    %v3574 = vsel %vm3308, %v2852, %v3194
    %v3575 = vsel %vm3347, -1.4142135, 1.4142135
    %v3576 = vsel %vm3348, -1.4142135, 1.4142135
    %v3577 = vsel %vm3349, -1.4142135, 1.4142135
    %v3578 = vsel %vm3350, -1.4142135, 1.4142135
    %v3579 = vsel %vm3351, -1.4142135, 1.4142135
    %v3580 = vsel %vm3352, -1.4142135, 1.4142135
    %v3581 = vsel %vm3353, -1.4142135, 1.4142135
    %v3582 = vsel %vm3354, -1.4142135, 1.4142135
    %v3583 = vsel %vm3355, -1.4142135, 1.4142135
    %v3584 = vsel %vm3356, -1.4142135, 1.4142135
    %v3585 = vsel %vm3357, -1.4142135, 1.4142135
    %v3586 = vsel %vm3358, -1.4142135, 1.4142135
    %v3587 = vsel %vm3359, -1.4142135, 1.4142135
    %v3588 = vsel %vm3360, -1.4142135, 1.4142135
    %v3589 = vsel %vm3361, -1.4142135, 1.4142135
    %v3590 = vsel %vm3362, -1.4142135, 1.4142135
    %v3591 = vsel %vm3363, -1.4142135, 1.4142135
    %v3592 = vsel %vm3364, -1.4142135, 1.4142135
    %v3593 = vsel %vm3365, -1.4142135, 1.4142135
    %v3594 = vsel %vm3366, -1.4142135, 1.4142135
    %v3595 = vsel %vm3367, -1.4142135, 1.4142135
    %v3596 = vsel %vm3368, -1.4142135, 1.4142135
    %v3597 = vsel %vm3369, -1.4142135, 1.4142135
    %v3598 = vsel %vm3370, -1.4142135, 1.4142135
    %v3599 = vsel %vm3371, -1.4142135, 1.4142135
    %v3600 = vsel %vm3372, -1.4142135, 1.4142135
    %v3601 = vsel %vm3373, -1.4142135, 1.4142135
    %v3602 = vsel %vm3374, -1.4142135, 1.4142135
    %v3603 = vsel %vm3375, -1.4142135, 1.4142135
    %v3604 = vsel %vm3376, -1.4142135, 1.4142135
    %v3605 = vsel %vm3377, -1.4142135, 1.4142135
    %v3606 = vsel %vm3378, -1.4142135, 1.4142135
    %v3607 = vsel %vm3379, -1.4142135, 1.4142135
    %v3608 = vsel %vm3380, -1.4142135, 1.4142135
    %v3609 = vsel %vm3381, -1.4142135, 1.4142135
    %v3610 = vsel %vm3382, -1.4142135, 1.4142135
    %v3611 = vsel %vm3383, -1.4142135, 1.4142135
    %v3612 = vsel %vm3384, -1.4142135, 1.4142135
    %v3613 = vmul.f32 %v3575, %v3499
    %v3614 = vmul.f32 %v3576, %v3500
    %v3615 = vmul.f32 %v3577, %v3501
    %v3616 = vmul.f32 %v3578, %v3502
    %v3617 = vmul.f32 %v3579, %v3503
    %v3618 = vmul.f32 %v3580, %v3504
    %v3619 = vmul.f32 %v3581, %v3505
    %v3620 = vmul.f32 %v3582, %v3506
    %v3621 = vmul.f32 %v3583, %v3507
    %v3622 = vmul.f32 %v3584, %v3508
    %v3623 = vmul.f32 %v3585, %v3509
    %v3624 = vmul.f32 %v3586, %v3510
    %v3625 = vmul.f32 %v3587, %v3511
    %v3626 = vmul.f32 %v3588, %v3512
    %v3627 = vmul.f32 %v3589, %v3513
    %v3628 = vmul.f32 %v3590, %v3514
    %v3629 = vmul.f32 %v3591, %v3515
    %v3630 = vmul.f32 %v3592, %v3516
    %v3631 = vmul.f32 %v3593, %v3517
    %v3632 = vmul.f32 %v3594, %v3518
    %v3633 = vmul.f32 %v3595, %v3519
    %v3634 = vmul.f32 %v3596, %v3520
    %v3635 = vmul.f32 %v3597, %v3521
    %v3636 = vmul.f32 %v3598, %v3522
    %v3637 = vmul.f32 %v3599, %v3523
    %v3638 = vmul.f32 %v3600, %v3524
    %v3639 = vmul.f32 %v3601, %v3525
    %v3640 = vmul.f32 %v3602, %v3526
    %v3641 = vmul.f32 %v3603, %v3527
    %v3642 = vmul.f32 %v3604, %v3528
    %v3643 = vmul.f32 %v3605, %v3529
    %v3644 = vmul.f32 %v3606, %v3530
    %v3645 = vmul.f32 %v3607, %v3531
    %v3646 = vmul.f32 %v3608, %v3532
    %v3647 = vmul.f32 %v3609, %v3533
    %v3648 = vmul.f32 %v3610, %v3534
    %v3649 = vmul.f32 %v3611, %v3535
    %v3650 = vmul.f32 %v3612, %v3536
    %v3651 = vsel %vm3461, -1.4142135, 1.4142135
    %v3652 = vsel %vm3462, -1.4142135, 1.4142135
    %v3653 = vsel %vm3463, -1.4142135, 1.4142135
    %v3654 = vsel %vm3464, -1.4142135, 1.4142135
    %v3655 = vsel %vm3465, -1.4142135, 1.4142135
    %v3656 = vsel %vm3466, -1.4142135, 1.4142135
    %v3657 = vsel %vm3467, -1.4142135, 1.4142135
    %v3658 = vsel %vm3468, -1.4142135, 1.4142135
    %v3659 = vsel %vm3469, -1.4142135, 1.4142135
    %v3660 = vsel %vm3470, -1.4142135, 1.4142135
    %v3661 = vsel %vm3471, -1.4142135, 1.4142135
    %v3662 = vsel %vm3472, -1.4142135, 1.4142135
    %v3663 = vsel %vm3473, -1.4142135, 1.4142135
    %v3664 = vsel %vm3474, -1.4142135, 1.4142135
    %v3665 = vsel %vm3475, -1.4142135, 1.4142135
    %v3666 = vsel %vm3476, -1.4142135, 1.4142135
    %v3667 = vsel %vm3477, -1.4142135, 1.4142135
    %v3668 = vsel %vm3478, -1.4142135, 1.4142135
    %v3669 = vsel %vm3479, -1.4142135, 1.4142135
    %v3670 = vsel %vm3480, -1.4142135, 1.4142135
    %v3671 = vsel %vm3481, -1.4142135, 1.4142135
    %v3672 = vsel %vm3482, -1.4142135, 1.4142135
    %v3673 = vsel %vm3483, -1.4142135, 1.4142135
    %v3674 = vsel %vm3484, -1.4142135, 1.4142135
    %v3675 = vsel %vm3485, -1.4142135, 1.4142135
    %v3676 = vsel %vm3486, -1.4142135, 1.4142135
    %v3677 = vsel %vm3487, -1.4142135, 1.4142135
    %v3678 = vsel %vm3488, -1.4142135, 1.4142135
    %v3679 = vsel %vm3489, -1.4142135, 1.4142135
    %v3680 = vsel %vm3490, -1.4142135, 1.4142135
    %v3681 = vsel %vm3491, -1.4142135, 1.4142135
    %v3682 = vsel %vm3492, -1.4142135, 1.4142135
    %v3683 = vsel %vm3493, -1.4142135, 1.4142135
    %v3684 = vsel %vm3494, -1.4142135, 1.4142135
    %v3685 = vsel %vm3495, -1.4142135, 1.4142135
    %v3686 = vsel %vm3496, -1.4142135, 1.4142135
    %v3687 = vsel %vm3497, -1.4142135, 1.4142135
    %v3688 = vsel %vm3498, -1.4142135, 1.4142135
    %v3689 = vmul.f32 %v3651, %v3537
    %v3690 = vmul.f32 %v3652, %v3538
    %v3691 = vmul.f32 %v3653, %v3539
    %v3692 = vmul.f32 %v3654, %v3540
    %v3693 = vmul.f32 %v3655, %v3541
    %v3694 = vmul.f32 %v3656, %v3542
    %v3695 = vmul.f32 %v3657, %v3543
    %v3696 = vmul.f32 %v3658, %v3544
    %v3697 = vmul.f32 %v3659, %v3545
    %v3698 = vmul.f32 %v3660, %v3546
    %v3699 = vmul.f32 %v3661, %v3547
    %v3700 = vmul.f32 %v3662, %v3548
    %v3701 = vmul.f32 %v3663, %v3549
    %v3702 = vmul.f32 %v3664, %v3550
    %v3703 = vmul.f32 %v3665, %v3551
    %v3704 = vmul.f32 %v3666, %v3552
    %v3705 = vmul.f32 %v3667, %v3553
    %v3706 = vmul.f32 %v3668, %v3554
    %v3707 = vmul.f32 %v3669, %v3555
    %v3708 = vmul.f32 %v3670, %v3556
    %v3709 = vmul.f32 %v3671, %v3557
    %v3710 = vmul.f32 %v3672, %v3558
    %v3711 = vmul.f32 %v3673, %v3559
    %v3712 = vmul.f32 %v3674, %v3560
    %v3713 = vmul.f32 %v3675, %v3561
    %v3714 = vmul.f32 %v3676, %v3562
    %v3715 = vmul.f32 %v3677, %v3563
    %v3716 = vmul.f32 %v3678, %v3564
    %v3717 = vmul.f32 %v3679, %v3565
    %v3718 = vmul.f32 %v3680, %v3566
    %v3719 = vmul.f32 %v3681, %v3567
    %v3720 = vmul.f32 %v3682, %v3568
    %v3721 = vmul.f32 %v3683, %v3569
    %v3722 = vmul.f32 %v3684, %v3570
    %v3723 = vmul.f32 %v3685, %v3571
    %v3724 = vmul.f32 %v3686, %v3572
    %v3725 = vmul.f32 %v3687, %v3573
    %v3726 = vmul.f32 %v3688, %v3574
    %3727 = vst [vmem:[#allocation2] sm:$0xff] %v3613
    %3728 = vst [vmem:[#allocation2 + $0x10] sm:$0xff] %v3614
    %3729 = vst [vmem:[#allocation2 + $0x20] sm:$0xff] %v3615
    %3730 = vst [vmem:[#allocation2 + $0x30] sm:$0xff] %v3616
    %3731 = vst [vmem:[#allocation2 + $0x40] sm:$0xff] %v3617
    %3732 = vst [vmem:[#allocation2 + $0x50] sm:$0xff] %v3618
    %3733 = vst [vmem:[#allocation2 + $0x60] sm:$0xff] %v3619
    %3734 = vst [vmem:[#allocation2 + $0x70] sm:$0xff] %v3620
    %3735 = vst [vmem:[#allocation2 + $0x80] sm:$0xff] %v3621
    %3736 = vst [vmem:[#allocation2 + $0x90] sm:$0xff] %v3622
    %3737 = vst [vmem:[#allocation2 + $0xa0] sm:$0xff] %v3623
    %3738 = vst [vmem:[#allocation2 + $0xb0] sm:$0xff] %v3624
    %3739 = vst [vmem:[#allocation2 + $0xc0] sm:$0xff] %v3625
    %3740 = vst [vmem:[#allocation2 + $0xd0] sm:$0xff] %v3626
    %3741 = vst [vmem:[#allocation2 + $0xe0] sm:$0xff] %v3627
    %3742 = vst [vmem:[#allocation2 + $0xf0] sm:$0xff] %v3628
    %3743 = vst [vmem:[#allocation2 + $0x100] sm:$0xff] %v3629
    %3744 = vst [vmem:[#allocation2 + $0x110] sm:$0xff] %v3630
    %3745 = vst [vmem:[#allocation2 + $0x120] sm:$0xff] %v3631
    %3746 = vst [vmem:[#allocation2 + $0x130] sm:$0xff] %v3632
    %3747 = vst [vmem:[#allocation2 + $0x140] sm:$0xff] %v3633
    %3748 = vst [vmem:[#allocation2 + $0x150] sm:$0xff] %v3634
    %3749 = vst [vmem:[#allocation2 + $0x160] sm:$0xff] %v3635
    %3750 = vst [vmem:[#allocation2 + $0x170] sm:$0xff] %v3636
    %3751 = vst [vmem:[#allocation2 + $0x180] sm:$0xff] %v3637
    %3752 = vst [vmem:[#allocation2 + $0x190] sm:$0xff] %v3638
    %3753 = vst [vmem:[#allocation2 + $0x1a0] sm:$0xff] %v3639
    %3754 = vst [vmem:[#allocation2 + $0x1b0] sm:$0xff] %v3640
    %3755 = vst [vmem:[#allocation2 + $0x1c0] sm:$0xff] %v3641
    %3756 = vst [vmem:[#allocation2 + $0x1d0] sm:$0xff] %v3642
    %3757 = vst [vmem:[#allocation2 + $0x1e0] sm:$0xff] %v3643
    %3758 = vst [vmem:[#allocation2 + $0x1f0] sm:$0xff] %v3644
    %3759 = vst [vmem:[#allocation2 + $0x200] sm:$0xff] %v3645
    %3760 = vst [vmem:[#allocation2 + $0x210] sm:$0xff] %v3646
    %3761 = vst [vmem:[#allocation2 + $0x220] sm:$0xff] %v3647
    %3762 = vst [vmem:[#allocation2 + $0x230] sm:$0xff] %v3648
    %3763 = vst [vmem:[#allocation2 + $0x240] sm:$0xff] %v3649
    %3764 = vst [vmem:[#allocation2 + $0x250] sm:$0xff] %v3650
    %3765 = vst [vmem:[#allocation2 + $0x8] sm:$0xff] %v3689
    %3766 = vst [vmem:[#allocation2 + $0x18] sm:$0xff] %v3690
    %3767 = vst [vmem:[#allocation2 + $0x28] sm:$0xff] %v3691
    %3768 = vst [vmem:[#allocation2 + $0x38] sm:$0xff] %v3692
    %3769 = vst [vmem:[#allocation2 + $0x48] sm:$0xff] %v3693
    %3770 = vst [vmem:[#allocation2 + $0x58] sm:$0xff] %v3694
    %3771 = vst [vmem:[#allocation2 + $0x68] sm:$0xff] %v3695
    %3772 = vst [vmem:[#allocation2 + $0x78] sm:$0xff] %v3696
    %3773 = vst [vmem:[#allocation2 + $0x88] sm:$0xff] %v3697
    %3774 = vst [vmem:[#allocation2 + $0x98] sm:$0xff] %v3698
    %3775 = vst [vmem:[#allocation2 + $0xa8] sm:$0xff] %v3699
    %3776 = vst [vmem:[#allocation2 + $0xb8] sm:$0xff] %v3700
    %3777 = vst [vmem:[#allocation2 + $0xc8] sm:$0xff] %v3701
    %3778 = vst [vmem:[#allocation2 + $0xd8] sm:$0xff] %v3702
    %3779 = vst [vmem:[#allocation2 + $0xe8] sm:$0xff] %v3703
    %3780 = vst [vmem:[#allocation2 + $0xf8] sm:$0xff] %v3704
    %3781 = vst [vmem:[#allocation2 + $0x108] sm:$0xff] %v3705
    %3782 = vst [vmem:[#allocation2 + $0x118] sm:$0xff] %v3706
    %3783 = vst [vmem:[#allocation2 + $0x128] sm:$0xff] %v3707
    %3784 = vst [vmem:[#allocation2 + $0x138] sm:$0xff] %v3708
    %3785 = vst [vmem:[#allocation2 + $0x148] sm:$0xff] %v3709
    %3786 = vst [vmem:[#allocation2 + $0x158] sm:$0xff] %v3710
    %3787 = vst [vmem:[#allocation2 + $0x168] sm:$0xff] %v3711
    %3788 = vst [vmem:[#allocation2 + $0x178] sm:$0xff] %v3712
    %3789 = vst [vmem:[#allocation2 + $0x188] sm:$0xff] %v3713
    %3790 = vst [vmem:[#allocation2 + $0x198] sm:$0xff] %v3714
    %3791 = vst [vmem:[#allocation2 + $0x1a8] sm:$0xff] %v3715
    %3792 = vst [vmem:[#allocation2 + $0x1b8] sm:$0xff] %v3716
    %3793 = vst [vmem:[#allocation2 + $0x1c8] sm:$0xff] %v3717
    %3794 = vst [vmem:[#allocation2 + $0x1d8] sm:$0xff] %v3718
    %3795 = vst [vmem:[#allocation2 + $0x1e8] sm:$0xff] %v3719
    %3796 = vst [vmem:[#allocation2 + $0x1f8] sm:$0xff] %v3720
    %3797 = vst [vmem:[#allocation2 + $0x208] sm:$0xff] %v3721
    %3798 = vst [vmem:[#allocation2 + $0x218] sm:$0xff] %v3722
    %3799 = vst [vmem:[#allocation2 + $0x228] sm:$0xff] %v3723
    %3800 = vst [vmem:[#allocation2 + $0x238] sm:$0xff] %v3724
    %3801 = vst [vmem:[#allocation2 + $0x248] sm:$0xff] %v3725
    %3802 = vst [vmem:[#allocation2 + $0x258] sm:$0xff] %v3726
    // Predicated region
    $region10: #{tpu_custom_call.1} parent=1 // pred_check
      _
    $region11: #{tpu_custom_call.1} parent=1 // pred_check_branch
      %3804 = sbr.rel (0) target = $region13
    $region12: #{tpu_custom_call.1} parent=1 // pred_region
      %s3806 = ssub.s32 9728, 9728
      %3807 = vsyncadd [#allocation3], %s3806
      %s3808 = sshll.u32 [#allocation2], 4
      %s3809 = int_to_ptr.vmem [resolvable:$true] %s3808
      %3814 = dma.vmem_to_hbm [thread:$0]  %s3809, 9728, %s2, [#allocation3], 256, 256, 16
    $region13: #{tpu_custom_call.1} parent=1 // pred_fallthru
      _
    // Predicated region
    $region14: #{tpu_custom_call.1} parent=1 // pred_check
      _
    $region15: #{tpu_custom_call.1} parent=1 // pred_check_branch
      %3816 = sbr.rel (0) target = $region17
    $region16: #{tpu_custom_call.1} parent=1 // pred_region
      %3817 = dma.done [#allocation3], 9728
    $region17: #{tpu_custom_call.1} parent=1 // pred_fallthru
      _
    %3818 = vsyncpa [#allocation3], 1

</llo_original>
